<compile_context>
chip_gen: v6e
topology: v6e:2x2x1
jax: 0.10.0
libtpu: 0.0.40
codegen_flags: <defaults>
</compile_context>

<pallas_src>
import functools

import jax
import jax.numpy as jnp
from jax.experimental import pallas as pl
from jax.experimental.pallas import tpu as pltpu

LANE = 128
EXPANSION = 4
BN_EPS = 1e-5


def _round_up(x, m):
    return (x + m - 1) // m * m


# ---------------------------------------------------------------------------
# Fused bottleneck kernel: one grid step == one image (NHWC, channels padded).
# ---------------------------------------------------------------------------
def _bottleneck_kernel(x_ref, w_ref, b_ref, o_ref, pad_ref, *, hh, ww,
                       has_downsample):
    cp = x_ref.shape[-1]
    hw = hh * ww

    x = x_ref[0].reshape(hw, cp)                              # (HW, Cp)

    # conv1 (1x1) + folded BN1 + ReLU
    h1 = jnp.dot(x, w_ref[0], preferred_element_type=jnp.float32)
    h1 = jnp.maximum(h1 + b_ref[0:1, :], 0.0)

    # Zero-padded (pad=1) copy of conv1's output, kept entirely in VMEM.
    pad_ref[...] = jnp.zeros(pad_ref.shape, pad_ref.dtype)
    pad_ref[1:hh + 1, 1:ww + 1, :] = h1.reshape(hh, ww, cp)

    # conv2 (3x3, computed at stride 1; stride handled by the wrapper)
    # + folded BN2 + ReLU.  9 shifted VMEM slices -> 9 MXU matmuls.
    acc = None
    for dy in range(3):
        for dx in range(3):
            tap = pad_ref[dy:dy + hh, dx:dx + ww, :].reshape(hw, cp)
            part = jnp.dot(tap, w_ref[1 + dy * 3 + dx],
                           preferred_element_type=jnp.float32)
            acc = part if acc is None else acc + part
    h2 = jnp.maximum(acc + b_ref[1:2, :], 0.0)

    # conv3 (1x1) + folded BN3 (no ReLU yet).
    h3 = jnp.dot(h2, w_ref[10], preferred_element_type=jnp.float32) + b_ref[2:3, :]

    # Shortcut branch: 1x1 conv + BN (downsample) or identity.
    if has_downsample:
        res = jnp.dot(x, w_ref[11], preferred_element_type=jnp.float32) + b_ref[3:4, :]
    else:
        res = x

    out = jnp.maximum(h3 + res, 0.0)
    o_ref[0] = out.reshape(hh, ww, cp)


# ---------------------------------------------------------------------------
# Wrapper: layout plumbing (NCHW <-> NHWC, channel padding) + pallas_call.
# ---------------------------------------------------------------------------
@functools.partial(jax.jit, static_argnames=("cout", "stride", "has_downsample"))
def bottleneck_forward(x_nchw, w_pack, b_pack, *, cout, stride=1,
                       has_downsample=False):
    n, c, hh, ww = x_nchw.shape
    cp = w_pack.shape[-1]

    # NCHW -> NHWC, channels zero-padded to the lane-dense packed width.
    x = jnp.transpose(x_nchw, (0, 2, 3, 1))
    x = jnp.pad(x, ((0, 0), (0, 0), (0, 0), (0, cp - c)))

    kernel = functools.partial(_bottleneck_kernel, hh=hh, ww=ww,
                               has_downsample=has_downsample)
    out = pl.pallas_call(
        kernel,
        out_shape=jax.ShapeDtypeStruct((n, hh, ww, cp), jnp.float32),
        grid_spec=pltpu.PrefetchScalarGridSpec(
            num_scalar_prefetch=0,
            grid=(n,),
            in_specs=[
                pl.BlockSpec((1, hh, ww, cp), lambda i: (i, 0, 0, 0)),
                pl.BlockSpec((12, cp, cp), lambda i: (0, 0, 0)),
                pl.BlockSpec((4, cp), lambda i: (0, 0)),
            ],
            out_specs=pl.BlockSpec((1, hh, ww, cp), lambda i: (i, 0, 0, 0)),
            scratch_shapes=[pltpu.VMEM((hh + 2, ww + 2, cp), jnp.float32)],
        ),
        compiler_params=pltpu.CompilerParams(
            dimension_semantics=("parallel",)),
    )(x, w_pack, b_pack)

    if stride > 1:
        # A stride-s bottleneck equals the stride-1 bottleneck subsampled at
        # (s*i, s*j): conv3 / BN / ReLU / 1x1-downsample commute with it.
        out = out[:, ::stride, ::stride, :]
    out = out[..., :cout]
    return jnp.transpose(out, (0, 3, 1, 2))                    # NHWC -> NCHW


# ---------------------------------------------------------------------------
# Parameter construction: fold eval-mode BN into weights, pack lane-dense.
# ---------------------------------------------------------------------------
def _fold_bn(w, gamma, beta, mean, var):
    s = gamma / jnp.sqrt(var + BN_EPS)
    return w * s, beta - mean * s


def _bn_stats(key, c):
    k1, k2, k3, k4 = jax.random.split(key, 4)
    gamma = 1.0 + 0.1 * jax.random.normal(k1, (c,), jnp.float32)
    beta = 0.1 * jax.random.normal(k2, (c,), jnp.float32)
    mean = 0.1 * jax.random.normal(k3, (c,), jnp.float32)
    var = 1.0 + 0.1 * jax.random.uniform(k4, (c,), jnp.float32)
    return gamma, beta, mean, var


def _kaiming(key, shape, fan_in):
    return (2.0 / fan_in) ** 0.5 * jax.random.normal(key, shape, jnp.float32)


def init_bottleneck_params(key, inplanes, planes, *, has_downsample=False):
    cout = planes * EXPANSION
    if not has_downsample:
        assert inplanes == cout, "identity shortcut needs inplanes == planes*4"
    cp = max(_round_up(d, LANE) for d in (inplanes, planes, cout))

    kw1, kw2, kw3, kwd, kb1, kb2, kb3, kbd = jax.random.split(key, 8)

    w1, b1 = _fold_bn(_kaiming(kw1, (inplanes, planes), inplanes),
                      *_bn_stats(kb1, planes))
    w2, b2 = _fold_bn(_kaiming(kw2, (9, planes, planes), 9 * planes),
                      *_bn_stats(kb2, planes))
    w3, b3 = _fold_bn(_kaiming(kw3, (planes, cout), planes),
                      *_bn_stats(kb3, cout))

    w_pack = jnp.zeros((12, cp, cp), jnp.float32)
    w_pack = w_pack.at[0, :inplanes, :planes].set(w1)
    w_pack = w_pack.at[1:10, :planes, :planes].set(w2)
    w_pack = w_pack.at[10, :planes, :cout].set(w3)

    b_pack = jnp.zeros((4, cp), jnp.float32)
    b_pack = b_pack.at[0, :planes].set(b1)
    b_pack = b_pack.at[1, :planes].set(b2)
    b_pack = b_pack.at[2, :cout].set(b3)

    ref = dict(w1=w1, b1=b1, w2=w2, b2=b2, w3=w3, b3=b3, wd=None, bd=None)

    if has_downsample:
        wd, bd = _fold_bn(_kaiming(kwd, (inplanes, cout), inplanes),
                          *_bn_stats(kbd, cout))
        w_pack = w_pack.at[11, :inplanes, :cout].set(wd)
        b_pack = b_pack.at[3, :cout].set(bd)
        ref["wd"], ref["bd"] = wd, bd

    return dict(w=w_pack, b=b_pack, cout=cout, ref=ref)


# ---------------------------------------------------------------------------
# Pure-JAX reference (same folded BN form) for a correctness cross-check.
# ---------------------------------------------------------------------------
def _ref_bottleneck(x_nchw, ref, *, stride, has_downsample):
    hi = jax.lax.Precision.HIGHEST
    x = jnp.transpose(x_nchw, (0, 2, 3, 1))
    h1 = jnp.maximum(
        jnp.einsum("nhwc,cd->nhwd", x, ref["w1"], precision=hi) + ref["b1"], 0.0)
    n, hh, ww, _ = h1.shape
    ho = (hh + 2 - 3) // stride + 1
    wo = (ww + 2 - 3) // stride + 1
    hp = jnp.pad(h1, ((0, 0), (1, 1), (1, 1), (0, 0)))
    acc = 0.0
    for dy in range(3):
        for dx in range(3):
            win = hp[:, dy:dy + stride * (ho - 1) + 1:stride,
                     dx:dx + stride * (wo - 1) + 1:stride, :]
            acc = acc + jnp.einsum("nhwc,cd->nhwd", win,
                                   ref["w2"][dy * 3 + dx], precision=hi)
    h2 = jnp.maximum(acc + ref["b2"], 0.0)
    h3 = jnp.einsum("nhwc,cd->nhwd", h2, ref["w3"], precision=hi) + ref["b3"]
    if has_downsample:
        xs = x[:, ::stride, ::stride, :]
        res = jnp.einsum("nhwc,cd->nhwd", xs, ref["wd"], precision=hi) + ref["bd"]
    else:
        res = x
    out = jnp.maximum(h3 + res, 0.0)
    return jnp.transpose(out, (0, 3, 1, 2))


if __name__ == "__main__":
    key = jax.random.PRNGKey(0)
    kxa, kxb, kpa, kpb = jax.random.split(key, 4)

    batch, planes, hh, ww = 2, 8, 16, 16

    # Case A: default Bottleneck(inplanes=4*planes, planes): stride=1,
    # downsample=None, identity shortcut.
    inplanes_a = planes * EXPANSION                         # 32
    pa = init_bottleneck_params(kpa, inplanes_a, planes, has_downsample=False)
    xa = jax.random.normal(kxa, (batch, inplanes_a, hh, ww), jnp.float32)
    out_a = bottleneck_forward(xa, pa["w"], pa["b"], cout=pa["cout"],
                               stride=1, has_downsample=False)
    jax.block_until_ready(out_a)
    assert out_a.shape == (batch, planes * EXPANSION, hh, ww), out_a.shape
    assert out_a.dtype == jnp.float32
    ref_a = _ref_bottleneck(xa, pa["ref"], stride=1, has_downsample=False)
    err_a = float(jnp.max(jnp.abs(out_a - ref_a)))
    assert err_a < 5e-2 * (1.0 + float(jnp.max(jnp.abs(ref_a)))), err_a

    # Case B: downsampling Bottleneck (stride=2, 1x1-conv + BN shortcut).
    inplanes_b = 16
    pb = init_bottleneck_params(kpb, inplanes_b, planes, has_downsample=True)
    xb = jax.random.normal(kxb, (batch, inplanes_b, hh, ww), jnp.float32)
    out_b = bottleneck_forward(xb, pb["w"], pb["b"], cout=pb["cout"],
                               stride=2, has_downsample=True)
    jax.block_until_ready(out_b)
    assert out_b.shape == (batch, planes * EXPANSION, hh // 2, ww // 2), out_b.shape
    ref_b = _ref_bottleneck(xb, pb["ref"], stride=2, has_downsample=True)
    err_b = float(jnp.max(jnp.abs(out_b - ref_b)))
    assert err_b < 5e-2 * (1.0 + float(jnp.max(jnp.abs(ref_b)))), err_b

    print("KERNEL_OK")
</pallas_src>

<mosaic_0001>
module attributes {stable_mosaic.version = 11 : i64} {
  func.func @_bottleneck_kernel(%arg0: i32, %arg1: memref<1x16x16x128xf32, #tpu.memory_space<vmem>>, %arg2: memref<12x128x128xf32, #tpu.memory_space<vmem>>, %arg3: memref<4x128xf32, #tpu.memory_space<vmem>>, %arg4: memref<1x16x16x128xf32, #tpu.memory_space<vmem>>, %arg5: memref<18x18x128xf32, #tpu.memory_space<vmem>>) attributes {dimension_semantics = [#tpu.dimension_semantics<parallel>], iteration_bounds = array<i64: 2>, scalar_prefetch = 0 : i64, scratch_operands = 1 : i64, tpu.core_type = #tpu.core_type<tc>, window_params = [{transform_indices = @transform_0, window_bounds = array<i64: 1, 16, 16, 128>}, {pipeline_mode = #tpu.pipeline_mode<synchronous>, transform_indices = @transform_1, window_bounds = array<i64: 12, 128, 128>}, {pipeline_mode = #tpu.pipeline_mode<synchronous>, transform_indices = @transform_2, window_bounds = array<i64: 4, 128>}, {transform_indices = @transform_3, window_bounds = array<i64: 1, 16, 16, 128>}]} {
    %c0 = arith.constant 0 : index
    %c0_0 = arith.constant 0 : index
    %c0_1 = arith.constant 0 : index
    %c0_2 = arith.constant 0 : index
    %0 = vector.load %arg1[%c0, %c0_0, %c0_1, %c0_2] : memref<1x16x16x128xf32, #tpu.memory_space<vmem>>, vector<1x16x16x128xf32>
    %1 = vector.shape_cast %0 : vector<1x16x16x128xf32> to vector<16x16x128xf32>
    %2 = vector.shape_cast %1 : vector<16x16x128xf32> to vector<256x128xf32>
    %c0_3 = arith.constant 0 : index
    %c0_4 = arith.constant 0 : index
    %c0_5 = arith.constant 0 : index
    %3 = vector.load %arg2[%c0_3, %c0_4, %c0_5] : memref<12x128x128xf32, #tpu.memory_space<vmem>>, vector<1x128x128xf32>
    %4 = vector.shape_cast %3 : vector<1x128x128xf32> to vector<128x128xf32>
    %cst = arith.constant dense<0.000000e+00> : vector<256x128xf32>
    %5 = tpu.matmul %2, %4, %cst {dimension_numbers = #tpu.dot_dimension_numbers<[1], [0], [0], [1], [0, 0, 1, 1], [], []>} : vector<256x128xf32>, vector<128x128xf32>, vector<256x128xf32> -> vector<256x128xf32>
    %c0_6 = arith.constant 0 : index
    %c0_7 = arith.constant 0 : index
    %6 = vector.load %arg3[%c0_6, %c0_7] : memref<4x128xf32, #tpu.memory_space<vmem>>, vector<1x128xf32>
    %7 = vector.broadcast %6 : vector<1x128xf32> to vector<256x128xf32>
    %8 = arith.addf %5, %7 : vector<256x128xf32>
    %cst_8 = arith.constant 0.000000e+00 : f32
    %9 = vector.broadcast %cst_8 : f32 to vector<256x128xf32>
    %10 = arith.maximumf %8, %9 : vector<256x128xf32>
    %cst_9 = arith.constant 0.000000e+00 : f32
    %11 = vector.broadcast %cst_9 : f32 to vector<18x18x128xf32>
    %c0_10 = arith.constant 0 : index
    %c0_11 = arith.constant 0 : index
    %c0_12 = arith.constant 0 : index
    %12 = vector.load %arg5[%c0_10, %c0_11, %c0_12] : memref<18x18x128xf32, #tpu.memory_space<vmem>>, vector<18x18x128xf32>
    tpu.vector_store %arg5[%c0_10, %c0_11, %c0_12], %11 {strides = array<i32>} : memref<18x18x128xf32, #tpu.memory_space<vmem>>, vector<18x18x128xf32>,
    %13 = vector.shape_cast %10 : vector<256x128xf32> to vector<16x16x128xf32>
    %c1 = arith.constant 1 : index
    %c1_13 = arith.constant 1 : index
    %c0_14 = arith.constant 0 : index
    %14 = vector.load %arg5[%c1, %c1_13, %c0_14] : memref<18x18x128xf32, #tpu.memory_space<vmem>>, vector<16x16x128xf32>
    tpu.vector_store %arg5[%c1, %c1_13, %c0_14], %13 {strides = array<i32>} : memref<18x18x128xf32, #tpu.memory_space<vmem>>, vector<16x16x128xf32>,
    %c0_15 = arith.constant 0 : index
    %c0_16 = arith.constant 0 : index
    %c0_17 = arith.constant 0 : index
    %15 = vector.load %arg5[%c0_15, %c0_16, %c0_17] : memref<18x18x128xf32, #tpu.memory_space<vmem>>, vector<16x16x128xf32>
    %16 = vector.shape_cast %15 : vector<16x16x128xf32> to vector<256x128xf32>
    %c1_18 = arith.constant 1 : index
    %c0_19 = arith.constant 0 : index
    %c0_20 = arith.constant 0 : index
    %17 = vector.load %arg2[%c1_18, %c0_19, %c0_20] : memref<12x128x128xf32, #tpu.memory_space<vmem>>, vector<1x128x128xf32>
    %18 = vector.shape_cast %17 : vector<1x128x128xf32> to vector<128x128xf32>
    %cst_21 = arith.constant dense<0.000000e+00> : vector<256x128xf32>
    %19 = tpu.matmul %16, %18, %cst_21 {dimension_numbers = #tpu.dot_dimension_numbers<[1], [0], [0], [1], [0, 0, 1, 1], [], []>} : vector<256x128xf32>, vector<128x128xf32>, vector<256x128xf32> -> vector<256x128xf32>
    %c0_22 = arith.constant 0 : index
    %c1_23 = arith.constant 1 : index
    %c0_24 = arith.constant 0 : index
    %20 = vector.load %arg5[%c0_22, %c1_23, %c0_24] : memref<18x18x128xf32, #tpu.memory_space<vmem>>, vector<16x16x128xf32>
    %21 = vector.shape_cast %20 : vector<16x16x128xf32> to vector<256x128xf32>
    %c2 = arith.constant 2 : index
    %c0_25 = arith.constant 0 : index
    %c0_26 = arith.constant 0 : index
    %22 = vector.load %arg2[%c2, %c0_25, %c0_26] : memref<12x128x128xf32, #tpu.memory_space<vmem>>, vector<1x128x128xf32>
    %23 = vector.shape_cast %22 : vector<1x128x128xf32> to vector<128x128xf32>
    %cst_27 = arith.constant dense<0.000000e+00> : vector<256x128xf32>
    %24 = tpu.matmul %21, %23, %cst_27 {dimension_numbers = #tpu.dot_dimension_numbers<[1], [0], [0], [1], [0, 0, 1, 1], [], []>} : vector<256x128xf32>, vector<128x128xf32>, vector<256x128xf32> -> vector<256x128xf32>
    %25 = arith.addf %19, %24 : vector<256x128xf32>
    %c0_28 = arith.constant 0 : index
    %c2_29 = arith.constant 2 : index
    %c0_30 = arith.constant 0 : index
    %26 = vector.load %arg5[%c0_28, %c2_29, %c0_30] : memref<18x18x128xf32, #tpu.memory_space<vmem>>, vector<16x16x128xf32>
    %27 = vector.shape_cast %26 : vector<16x16x128xf32> to vector<256x128xf32>
    %c3 = arith.constant 3 : index
    %c0_31 = arith.constant 0 : index
    %c0_32 = arith.constant 0 : index
    %28 = vector.load %arg2[%c3, %c0_31, %c0_32] : memref<12x128x128xf32, #tpu.memory_space<vmem>>, vector<1x128x128xf32>
    %29 = vector.shape_cast %28 : vector<1x128x128xf32> to vector<128x128xf32>
    %cst_33 = arith.constant dense<0.000000e+00> : vector<256x128xf32>
    %30 = tpu.matmul %27, %29, %cst_33 {dimension_numbers = #tpu.dot_dimension_numbers<[1], [0], [0], [1], [0, 0, 1, 1], [], []>} : vector<256x128xf32>, vector<128x128xf32>, vector<256x128xf32> -> vector<256x128xf32>
    %31 = arith.addf %25, %30 : vector<256x128xf32>
    %c1_34 = arith.constant 1 : index
    %c0_35 = arith.constant 0 : index
    %c0_36 = arith.constant 0 : index
    %32 = vector.load %arg5[%c1_34, %c0_35, %c0_36] : memref<18x18x128xf32, #tpu.memory_space<vmem>>, vector<16x16x128xf32>
    %33 = vector.shape_cast %32 : vector<16x16x128xf32> to vector<256x128xf32>
    %c4 = arith.constant 4 : index
    %c0_37 = arith.constant 0 : index
    %c0_38 = arith.constant 0 : index
    %34 = vector.load %arg2[%c4, %c0_37, %c0_38] : memref<12x128x128xf32, #tpu.memory_space<vmem>>, vector<1x128x128xf32>
    %35 = vector.shape_cast %34 : vector<1x128x128xf32> to vector<128x128xf32>
    %cst_39 = arith.constant dense<0.000000e+00> : vector<256x128xf32>
    %36 = tpu.matmul %33, %35, %cst_39 {dimension_numbers = #tpu.dot_dimension_numbers<[1], [0], [0], [1], [0, 0, 1, 1], [], []>} : vector<256x128xf32>, vector<128x128xf32>, vector<256x128xf32> -> vector<256x128xf32>
    %37 = arith.addf %31, %36 : vector<256x128xf32>
    %c1_40 = arith.constant 1 : index
    %c1_41 = arith.constant 1 : index
    %c0_42 = arith.constant 0 : index
    %38 = vector.load %arg5[%c1_40, %c1_41, %c0_42] : memref<18x18x128xf32, #tpu.memory_space<vmem>>, vector<16x16x128xf32>
    %39 = vector.shape_cast %38 : vector<16x16x128xf32> to vector<256x128xf32>
    %c5 = arith.constant 5 : index
    %c0_43 = arith.constant 0 : index
    %c0_44 = arith.constant 0 : index
    %40 = vector.load %arg2[%c5, %c0_43, %c0_44] : memref<12x128x128xf32, #tpu.memory_space<vmem>>, vector<1x128x128xf32>
    %41 = vector.shape_cast %40 : vector<1x128x128xf32> to vector<128x128xf32>
    %cst_45 = arith.constant dense<0.000000e+00> : vector<256x128xf32>
    %42 = tpu.matmul %39, %41, %cst_45 {dimension_numbers = #tpu.dot_dimension_numbers<[1], [0], [0], [1], [0, 0, 1, 1], [], []>} : vector<256x128xf32>, vector<128x128xf32>, vector<256x128xf32> -> vector<256x128xf32>
    %43 = arith.addf %37, %42 : vector<256x128xf32>
    %c1_46 = arith.constant 1 : index
    %c2_47 = arith.constant 2 : index
    %c0_48 = arith.constant 0 : index
    %44 = vector.load %arg5[%c1_46, %c2_47, %c0_48] : memref<18x18x128xf32, #tpu.memory_space<vmem>>, vector<16x16x128xf32>
    %45 = vector.shape_cast %44 : vector<16x16x128xf32> to vector<256x128xf32>
    %c6 = arith.constant 6 : index
    %c0_49 = arith.constant 0 : index
    %c0_50 = arith.constant 0 : index
    %46 = vector.load %arg2[%c6, %c0_49, %c0_50] : memref<12x128x128xf32, #tpu.memory_space<vmem>>, vector<1x128x128xf32>
    %47 = vector.shape_cast %46 : vector<1x128x128xf32> to vector<128x128xf32>
    %cst_51 = arith.constant dense<0.000000e+00> : vector<256x128xf32>
    %48 = tpu.matmul %45, %47, %cst_51 {dimension_numbers = #tpu.dot_dimension_numbers<[1], [0], [0], [1], [0, 0, 1, 1], [], []>} : vector<256x128xf32>, vector<128x128xf32>, vector<256x128xf32> -> vector<256x128xf32>
    %49 = arith.addf %43, %48 : vector<256x128xf32>
    %c2_52 = arith.constant 2 : index
    %c0_53 = arith.constant 0 : index
    %c0_54 = arith.constant 0 : index
    %50 = vector.load %arg5[%c2_52, %c0_53, %c0_54] : memref<18x18x128xf32, #tpu.memory_space<vmem>>, vector<16x16x128xf32>
    %51 = vector.shape_cast %50 : vector<16x16x128xf32> to vector<256x128xf32>
    %c7 = arith.constant 7 : index
    %c0_55 = arith.constant 0 : index
    %c0_56 = arith.constant 0 : index
    %52 = vector.load %arg2[%c7, %c0_55, %c0_56] : memref<12x128x128xf32, #tpu.memory_space<vmem>>, vector<1x128x128xf32>
    %53 = vector.shape_cast %52 : vector<1x128x128xf32> to vector<128x128xf32>
    %cst_57 = arith.constant dense<0.000000e+00> : vector<256x128xf32>
    %54 = tpu.matmul %51, %53, %cst_57 {dimension_numbers = #tpu.dot_dimension_numbers<[1], [0], [0], [1], [0, 0, 1, 1], [], []>} : vector<256x128xf32>, vector<128x128xf32>, vector<256x128xf32> -> vector<256x128xf32>
    %55 = arith.addf %49, %54 : vector<256x128xf32>
    %c2_58 = arith.constant 2 : index
    %c1_59 = arith.constant 1 : index
    %c0_60 = arith.constant 0 : index
    %56 = vector.load %arg5[%c2_58, %c1_59, %c0_60] : memref<18x18x128xf32, #tpu.memory_space<vmem>>, vector<16x16x128xf32>
    %57 = vector.shape_cast %56 : vector<16x16x128xf32> to vector<256x128xf32>
    %c8 = arith.constant 8 : index
    %c0_61 = arith.constant 0 : index
    %c0_62 = arith.constant 0 : index
    %58 = vector.load %arg2[%c8, %c0_61, %c0_62] : memref<12x128x128xf32, #tpu.memory_space<vmem>>, vector<1x128x128xf32>
    %59 = vector.shape_cast %58 : vector<1x128x128xf32> to vector<128x128xf32>
    %cst_63 = arith.constant dense<0.000000e+00> : vector<256x128xf32>
    %60 = tpu.matmul %57, %59, %cst_63 {dimension_numbers = #tpu.dot_dimension_numbers<[1], [0], [0], [1], [0, 0, 1, 1], [], []>} : vector<256x128xf32>, vector<128x128xf32>, vector<256x128xf32> -> vector<256x128xf32>
    %61 = arith.addf %55, %60 : vector<256x128xf32>
    %c2_64 = arith.constant 2 : index
    %c2_65 = arith.constant 2 : index
    %c0_66 = arith.constant 0 : index
    %62 = vector.load %arg5[%c2_64, %c2_65, %c0_66] : memref<18x18x128xf32, #tpu.memory_space<vmem>>, vector<16x16x128xf32>
    %63 = vector.shape_cast %62 : vector<16x16x128xf32> to vector<256x128xf32>
    %c9 = arith.constant 9 : index
    %c0_67 = arith.constant 0 : index
    %c0_68 = arith.constant 0 : index
    %64 = vector.load %arg2[%c9, %c0_67, %c0_68] : memref<12x128x128xf32, #tpu.memory_space<vmem>>, vector<1x128x128xf32>
    %65 = vector.shape_cast %64 : vector<1x128x128xf32> to vector<128x128xf32>
    %cst_69 = arith.constant dense<0.000000e+00> : vector<256x128xf32>
    %66 = tpu.matmul %63, %65, %cst_69 {dimension_numbers = #tpu.dot_dimension_numbers<[1], [0], [0], [1], [0, 0, 1, 1], [], []>} : vector<256x128xf32>, vector<128x128xf32>, vector<256x128xf32> -> vector<256x128xf32>
    %67 = arith.addf %61, %66 : vector<256x128xf32>
    %c1_70 = arith.constant 1 : index
    %c0_71 = arith.constant 0 : index
    %68 = vector.load %arg3[%c1_70, %c0_71] : memref<4x128xf32, #tpu.memory_space<vmem>>, vector<1x128xf32>
    %69 = vector.broadcast %68 : vector<1x128xf32> to vector<256x128xf32>
    %70 = arith.addf %67, %69 : vector<256x128xf32>
    %cst_72 = arith.constant 0.000000e+00 : f32
    %71 = vector.broadcast %cst_72 : f32 to vector<256x128xf32>
    %72 = arith.maximumf %70, %71 : vector<256x128xf32>
    %c10 = arith.constant 10 : index
    %c0_73 = arith.constant 0 : index
    %c0_74 = arith.constant 0 : index
    %73 = vector.load %arg2[%c10, %c0_73, %c0_74] : memref<12x128x128xf32, #tpu.memory_space<vmem>>, vector<1x128x128xf32>
    %74 = vector.shape_cast %73 : vector<1x128x128xf32> to vector<128x128xf32>
    %cst_75 = arith.constant dense<0.000000e+00> : vector<256x128xf32>
    %75 = tpu.matmul %72, %74, %cst_75 {dimension_numbers = #tpu.dot_dimension_numbers<[1], [0], [0], [1], [0, 0, 1, 1], [], []>} : vector<256x128xf32>, vector<128x128xf32>, vector<256x128xf32> -> vector<256x128xf32>
    %c2_76 = arith.constant 2 : index
    %c0_77 = arith.constant 0 : index
    %76 = vector.load %arg3[%c2_76, %c0_77] : memref<4x128xf32, #tpu.memory_space<vmem>>, vector<1x128xf32>
    %77 = vector.broadcast %76 : vector<1x128xf32> to vector<256x128xf32>
    %78 = arith.addf %75, %77 : vector<256x128xf32>
    %79 = arith.addf %78, %2 : vector<256x128xf32>
    %cst_78 = arith.constant 0.000000e+00 : f32
    %80 = vector.broadcast %cst_78 : f32 to vector<256x128xf32>
    %81 = arith.maximumf %79, %80 : vector<256x128xf32>
    %82 = vector.shape_cast %81 : vector<256x128xf32> to vector<16x16x128xf32>
    %c0_79 = arith.constant 0 : index
    %c0_80 = arith.constant 0 : index
    %c0_81 = arith.constant 0 : index
    %c0_82 = arith.constant 0 : index
    %83 = vector.load %arg4[%c0_79, %c0_80, %c0_81, %c0_82] : memref<1x16x16x128xf32, #tpu.memory_space<vmem>>, vector<1x16x16x128xf32>
    %84 = vector.shape_cast %83 : vector<1x16x16x128xf32> to vector<16x16x128xf32>
    %85 = vector.shape_cast %82 : vector<16x16x128xf32> to vector<1x16x16x128xf32>
    tpu.vector_store %arg4[%c0_79, %c0_80, %c0_81, %c0_82], %85 {strides = array<i32>} : memref<1x16x16x128xf32, #tpu.memory_space<vmem>>, vector<1x16x16x128xf32>,
    return
  }
  func.func @transform_0(%arg0: i32) -> (i32, i32, i32, i32) {
    %c0_i32 = arith.constant 0 : i32
    %c0_i32_0 = arith.constant 0 : i32
    %c0_i32_1 = arith.constant 0 : i32
    %c0_i32_2 = arith.constant 0 : i32
    return %arg0, %c0_i32, %c0_i32_0, %c0_i32_1 : i32, i32, i32, i32
  }
  func.func @transform_1(%arg0: i32) -> (i32, i32, i32) {
    %c0_i32 = arith.constant 0 : i32
    %c0_i32_0 = arith.constant 0 : i32
    %c0_i32_1 = arith.constant 0 : i32
    %c0_i32_2 = arith.constant 0 : i32
    return %c0_i32, %c0_i32_0, %c0_i32_1 : i32, i32, i32
  }
  func.func @transform_2(%arg0: i32) -> (i32, i32) {
    %c0_i32 = arith.constant 0 : i32
    %c0_i32_0 = arith.constant 0 : i32
    %c0_i32_1 = arith.constant 0 : i32
    return %c0_i32, %c0_i32_0 : i32, i32
  }
  func.func @transform_3(%arg0: i32) -> (i32, i32, i32, i32) {
    %c0_i32 = arith.constant 0 : i32
    %c0_i32_0 = arith.constant 0 : i32
    %c0_i32_1 = arith.constant 0 : i32
    %c0_i32_2 = arith.constant 0 : i32
    return %arg0, %c0_i32, %c0_i32_0, %c0_i32_1 : i32, i32, i32, i32
  }
}

</mosaic_0001>

<llo_original>
// kernel: bottleneck_forward.1
$region0: #{bottleneck_forward.1}
  #allocation0 [shape = 'u32[]', space=smem, size = 0x4, offset = 0x4, fixed_abs, tag = 'smem constant byte address 0x4 - core index']
  #allocation1 [shape = 'u32[144,128]{1,0:T(1,128)}', space=vmem, size = 0x12000, scoped, tag = 'internal scratch']
  #allocation2 [shape = 'f32[18,18,128]{2,1,0:T(8,128)}', space=vmem, size = 0x36000, scoped, tag = 'scratch operand']
  %s0 = inlined_call_operand.vmem [shape: f32[2,16,16,128], index: 0, kind: input, shape index: {}]
  %s1 = inlined_call_operand.hbm [shape: f32[12,128,128], index: 1, kind: input, shape index: {}]
  %s2 = inlined_call_operand.vmem [shape: f32[4,128], index: 2, kind: input, shape index: {}]
  %s3 = inlined_call_operand.vmem [shape: f32[2,16,16,128], index: 3, kind: output, shape index: {}]
  %s4 = sld [smem:[#allocation0]]
  $region49: #{bottleneck_forward.1} parent=0
    _
  %s6 = ssub.s32 1, %s4
  %s7 = scalar_select 0, %s6, %s4
  $region1: #{bottleneck_forward.1} parent=0
    #allocation3 [shape = 'u8[786432]{0}', space=vmem, size = 0xc0000, scoped, tag = 'input window, operand 1, single buffered']
    #allocation4 [shape = 's32[2]{0}', space=sflag, size = 0x8, scoped, tag = 'scoped memory for bottleneck_forward.1']
    %8 = vsyncpa [#allocation4], 0
    loop: start=0, step=1, limit=4
    $region2: #{bottleneck_forward.1} parent=1 // loop_pre_header
      _
    $region3: #{bottleneck_forward.1} parent=1 // loop_header
      %s10 = sphi 0, %s14
      %p11 = scmp.ge.s32.totalorder %s10, 4
      %s20 = sphi 0, %s22
      %s23 = sphi 0, %s20
      %s24 = sphi 0, %s23
      %s40 = sphi 0, %s24
      %s44 = sphi 0, %s44
      %s46 = sphi 0, %s44
      %s47 = sphi 0, %s46
      %s61 = sphi 0, %s47
      %s65 = sphi 0, %s65
      %s67 = sphi 0, %s65
      %s68 = sphi 0, %s67
      %s82 = sphi 0, %s68
      %s88 = sphi 0, %s90
      %s91 = sphi 0, %s88
      %s92 = sphi 0, %s91
      %s108 = sphi 0, %s92
    $region4: #{bottleneck_forward.1} parent=1 // loop_header_branch
      %13 = sbr.rel (%p11) target = $region8
    $region5: #{bottleneck_forward.1} parent=1 // loop_body
      %s15 = ssub.s32 %s10, 1
      %s16 = ssub.s32 %s10, 2
      %s17 = sadd.s32 %s10, 1
      %s18 = ssub.s32 %s10, %s17
      %p19 = scmp.eq.s32.totalorder %s18, 0
      %s21 = sadd.s32 %s20, 1
      %s22 = scalar_select %p19, %s20, %s21
      %p25 = pneg %p19
      %p26 = scmp.eq.s32.totalorder %s10, 1
      %p27 = por %p25, %p26
      %p28 = scmp.ne.s32.totalorder %s20, %s23
      %p29 = scmp.eq.s32.totalorder %s10, 0
      %p30 = por %p28, %p29
      %p31 = scmp.ne.s32.totalorder %s20, %s23
      %p32 = scmp.eq.s32.totalorder %s15, 1
      %p33 = por %p31, %p32
      %p34 = scmp.ne.s32.totalorder %s23, %s24
      %p35 = scmp.eq.s32.totalorder %s15, 0
      %p36 = por %p34, %p35
      %p37 = scmp.ne.s32.totalorder %s23, %s24
      %p38 = scmp.eq.s32.totalorder %s16, 1
      %p39 = por %p37, %p38
      %p41 = scmp.ne.s32.totalorder %s24, %s40
      %p42 = scmp.eq.s32.totalorder %s16, 0
      %p43 = por %p41, %p42
      %s45 = sadd.s32 %s44, 1
      %p48 = scmp.eq.s32.totalorder %s10, 1
      %p49 = scmp.ne.s32.totalorder %s44, %s46
      %p50 = scmp.eq.s32.totalorder %s10, 0
      %p51 = por %p49, %p50
      %p52 = scmp.ne.s32.totalorder %s44, %s46
      %p53 = scmp.eq.s32.totalorder %s15, 1
      %p54 = por %p52, %p53
      %p55 = scmp.ne.s32.totalorder %s46, %s47
      %p56 = scmp.eq.s32.totalorder %s15, 0
      %p57 = por %p55, %p56
      %p58 = scmp.ne.s32.totalorder %s46, %s47
      %p59 = scmp.eq.s32.totalorder %s16, 1
      %p60 = por %p58, %p59
      %p62 = scmp.ne.s32.totalorder %s47, %s61
      %p63 = scmp.eq.s32.totalorder %s16, 0
      %p64 = por %p62, %p63
      %s66 = sadd.s32 %s65, 1
      %p69 = scmp.eq.s32.totalorder %s10, 1
      %p70 = scmp.ne.s32.totalorder %s65, %s67
      %p71 = scmp.eq.s32.totalorder %s10, 0
      %p72 = por %p70, %p71
      %p73 = scmp.ne.s32.totalorder %s65, %s67
      %p74 = scmp.eq.s32.totalorder %s15, 1
      %p75 = por %p73, %p74
      %p76 = scmp.ne.s32.totalorder %s67, %s68
      %p77 = scmp.eq.s32.totalorder %s15, 0
      %p78 = por %p76, %p77
      %p79 = scmp.ne.s32.totalorder %s67, %s68
      %p80 = scmp.eq.s32.totalorder %s16, 1
      %p81 = por %p79, %p80
      %p83 = scmp.ne.s32.totalorder %s68, %s82
      %p84 = scmp.eq.s32.totalorder %s16, 0
      %p85 = por %p83, %p84
      %s86 = ssub.s32 %s10, %s17
      %p87 = scmp.eq.s32.totalorder %s86, 0
      %s89 = sadd.s32 %s88, 1
      %s90 = scalar_select %p87, %s88, %s89
      %p93 = pneg %p87
      %p94 = scmp.eq.s32.totalorder %s10, 1
      %p95 = por %p93, %p94
      %p96 = scmp.ne.s32.totalorder %s88, %s91
      %p97 = scmp.eq.s32.totalorder %s10, 0
      %p98 = por %p96, %p97
      %p99 = scmp.ne.s32.totalorder %s88, %s91
      %p100 = scmp.eq.s32.totalorder %s15, 1
      %p101 = por %p99, %p100
      %p102 = scmp.ne.s32.totalorder %s91, %s92
      %p103 = scmp.eq.s32.totalorder %s15, 0
      %p104 = por %p102, %p103
      %p105 = scmp.ne.s32.totalorder %s91, %s92
      %p106 = scmp.eq.s32.totalorder %s16, 1
      %p107 = por %p105, %p106
      %p109 = scmp.ne.s32.totalorder %s92, %s108
      %p110 = scmp.eq.s32.totalorder %s16, 0
      %p111 = por %p109, %p110
      %p112 = scmp.le.s32.totalorder 1, %s10
      %p113 = scmp.lt.s32.totalorder %s10, 3
      %p114 = pnand %p112, %p113
      %p115 = pneg %p114
      // Predicated region
      $region9: #{bottleneck_forward.1} parent=5 // pred_check
        _
      $region10: #{bottleneck_forward.1} parent=5 // pred_check_branch
        %117 = sbr.rel (%p114) target = $region12
      $region11: #{bottleneck_forward.1} parent=5 // pred_region
        %s118 = ssub.s32 %s10, 1
        // Predicated region
        $region13: #{bottleneck_forward.1} parent=11 // pred_check
          %p119 = pneg %p57
        $region14: #{bottleneck_forward.1} parent=11 // pred_check_branch
          %121 = sbr.rel (%p119) target = $region16
        $region15: #{bottleneck_forward.1} parent=11 // pred_region
          %s123 = ssub.s32 24576, 24576
          %124 = vsyncadd [#allocation4], %s123
          %s125 = sshll.u32 [#allocation3], 4
          %s126 = int_to_ptr.vmem [resolvable:$true] %s125
          %131 = dma.hbm_to_vmem [thread:$0]  %s1, 24576, %s126, [#allocation4], 128, 128, 8
        $region16: #{bottleneck_forward.1} parent=11 // pred_fallthru
          _
        // Predicated region
        $region17: #{bottleneck_forward.1} parent=11 // pred_check
          %p132 = pneg %p78
        $region18: #{bottleneck_forward.1} parent=11 // pred_check_branch
          %134 = sbr.rel (%p132) target = $region20
        $region19: #{bottleneck_forward.1} parent=11 // pred_region
          _
        $region20: #{bottleneck_forward.1} parent=11 // pred_fallthru
          _
      $region12: #{bottleneck_forward.1} parent=5 // pred_fallthru
        _
      %p135 = scmp.lt.s32.totalorder %s10, 2
      // Predicated region
      $region21: #{bottleneck_forward.1} parent=5 // pred_check
        %p136 = pneg %p135
      $region22: #{bottleneck_forward.1} parent=5 // pred_check_branch
        %138 = sbr.rel (%p136) target = $region24
      $region23: #{bottleneck_forward.1} parent=5 // pred_region
        // Predicated region
        $region25: #{bottleneck_forward.1} parent=23 // pred_check
          %p139 = pneg %p30
        $region26: #{bottleneck_forward.1} parent=23 // pred_check_branch
          %141 = sbr.rel (%p139) target = $region28
        $region27: #{bottleneck_forward.1} parent=23 // pred_region
          %p142 = scmp.lt.s32.totalorder %s10, 1
          %s143 = scalar_select %p142, %s10, 1
          %s144 = smul.addr %s143, 32
          %s145 = smul.addr %s144, 8
          %s146 = scalar_lea.vmem %s0, %s145
        $region28: #{bottleneck_forward.1} parent=23 // pred_fallthru
          _
      $region24: #{bottleneck_forward.1} parent=5 // pred_fallthru
        _
      %p147 = scmp.le.s32.totalorder 1, %s10
      %p148 = scmp.lt.s32.totalorder %s10, 3
      %p149 = pnand %p147, %p148
      %p150 = pneg %p149
      // Predicated region
      $region29: #{bottleneck_forward.1} parent=5 // pred_check
        _
      $region30: #{bottleneck_forward.1} parent=5 // pred_check_branch
        %152 = sbr.rel (%p149) target = $region32
      $region31: #{bottleneck_forward.1} parent=5 // pred_region
        %s153 = ssub.s32 %s10, 1
        // Predicated region
        $region33: #{bottleneck_forward.1} parent=31 // pred_check
          %p154 = pneg %p57
        $region34: #{bottleneck_forward.1} parent=31 // pred_check_branch
          %156 = sbr.rel (%p154) target = $region36
        $region35: #{bottleneck_forward.1} parent=31 // pred_region
          %157 = dma.done [#allocation4], 24576
        $region36: #{bottleneck_forward.1} parent=31 // pred_fallthru
          _
        %p158 = scmp.lt.s32.totalorder %s15, 1
        %s159 = scalar_select %p158, %s15, 1
        %s160 = smul.addr %s159, 32
        %s161 = smul.addr %s160, 8
        %s162 = scalar_lea.vmem %s0, %s161
        %p163 = pneg %p36
        %p164 = pneg %p33
        %p165 = pneg %p57
        %p166 = pneg %p54
        %p167 = pneg %p78
        %p168 = pneg %p75
        %p169 = pneg %p104
        %p170 = pneg %p101
        %p171 = scmp.lt.s32.totalorder %s15, 1
        %s172 = scalar_select %p171, %s15, 1
        %s173 = smul.addr %s172, 32
        %s174 = smul.addr %s173, 8
        %s175 = scalar_lea.vmem %s3, %s174
        %p176 = scmp.lt.s32.totalorder %s15, 1
        %s177 = scalar_select %p176, %s15, 1
        %s178 = smul.addr %s177, 32
        %s179 = smul.addr %s178, 8
        %s180 = scalar_lea.vmem %s0, %s179
        %p181 = scmp.lt.s32.totalorder %s15, 1
        %s182 = scalar_select %p181, %s15, 1
        %s183 = smul.addr %s182, 32
        %s184 = smul.addr %s183, 8
        %s185 = scalar_lea.vmem %s3, %s184
        %v186 = vld [vmem:[%s180] sm:$0xff]
        %v187 = vld [vmem:[%s180 + $0x8] sm:$0xff]
        %v188 = vld [vmem:[%s180 + $0x10] sm:$0xff]
        %v189 = vld [vmem:[%s180 + $0x18] sm:$0xff]
        %v190 = vld [vmem:[%s180 + $0x20] sm:$0xff]
        %v191 = vld [vmem:[%s180 + $0x28] sm:$0xff]
        %v192 = vld [vmem:[%s180 + $0x30] sm:$0xff]
        %v193 = vld [vmem:[%s180 + $0x38] sm:$0xff]
        %v194 = vld [vmem:[%s180 + $0x40] sm:$0xff]
        %v195 = vld [vmem:[%s180 + $0x48] sm:$0xff]
        %v196 = vld [vmem:[%s180 + $0x50] sm:$0xff]
        %v197 = vld [vmem:[%s180 + $0x58] sm:$0xff]
        %v198 = vld [vmem:[%s180 + $0x60] sm:$0xff]
        %v199 = vld [vmem:[%s180 + $0x68] sm:$0xff]
        %v200 = vld [vmem:[%s180 + $0x70] sm:$0xff]
        %v201 = vld [vmem:[%s180 + $0x78] sm:$0xff]
        %v202 = vld [vmem:[%s180 + $0x80] sm:$0xff]
        %v203 = vld [vmem:[%s180 + $0x88] sm:$0xff]
        %v204 = vld [vmem:[%s180 + $0x90] sm:$0xff]
        %v205 = vld [vmem:[%s180 + $0x98] sm:$0xff]
        %v206 = vld [vmem:[%s180 + $0xa0] sm:$0xff]
        %v207 = vld [vmem:[%s180 + $0xa8] sm:$0xff]
        %v208 = vld [vmem:[%s180 + $0xb0] sm:$0xff]
        %v209 = vld [vmem:[%s180 + $0xb8] sm:$0xff]
        %v210 = vld [vmem:[%s180 + $0xc0] sm:$0xff]
        %v211 = vld [vmem:[%s180 + $0xc8] sm:$0xff]
        %v212 = vld [vmem:[%s180 + $0xd0] sm:$0xff]
        %v213 = vld [vmem:[%s180 + $0xd8] sm:$0xff]
        %v214 = vld [vmem:[%s180 + $0xe0] sm:$0xff]
        %v215 = vld [vmem:[%s180 + $0xe8] sm:$0xff]
        %v216 = vld [vmem:[%s180 + $0xf0] sm:$0xff]
        %v217 = vld [vmem:[%s180 + $0xf8] sm:$0xff]
        %v218 = vld [vmem:[#allocation3] sm:$0xff]
        %v219 = vld [vmem:[#allocation3 + $0x8] sm:$0xff]
        %v220 = vld [vmem:[#allocation3 + $0x10] sm:$0xff]
        %v221 = vld [vmem:[#allocation3 + $0x18] sm:$0xff]
        %v222 = vld [vmem:[#allocation3 + $0x20] sm:$0xff]
        %v223 = vld [vmem:[#allocation3 + $0x28] sm:$0xff]
        %v224 = vld [vmem:[#allocation3 + $0x30] sm:$0xff]
        %v225 = vld [vmem:[#allocation3 + $0x38] sm:$0xff]
        %v226 = vld [vmem:[#allocation3 + $0x40] sm:$0xff]
        %v227 = vld [vmem:[#allocation3 + $0x48] sm:$0xff]
        %v228 = vld [vmem:[#allocation3 + $0x50] sm:$0xff]
        %v229 = vld [vmem:[#allocation3 + $0x58] sm:$0xff]
        %v230 = vld [vmem:[#allocation3 + $0x60] sm:$0xff]
        %v231 = vld [vmem:[#allocation3 + $0x68] sm:$0xff]
        %v232 = vld [vmem:[#allocation3 + $0x70] sm:$0xff]
        %v233 = vld [vmem:[#allocation3 + $0x78] sm:$0xff]
        %v234 = vld [vmem:[%s2] sm:$0x1]
        %v235 = vlaneseq
        %v236 = vshrl.u32 %v235, 7
        %v237 = vsub.s32 0, %v236
        %v238 = vrot.slane %v234, %v237
        %239 = vmatprep.subr.mxu0 0.0
        %240 = vmatpush1.msra.mxu0 %v233
        %241 = vmatprep.subr.mxu0 0.0
        %242 = vmatpush1.msra.mxu0 %v232
        %243 = vmatprep.subr.mxu0 0.0
        %244 = vmatpush1.msra.mxu0 %v231
        %245 = vmatprep.subr.mxu0 0.0
        %246 = vmatpush1.msra.mxu0 %v230
        %247 = vmatprep.subr.mxu0 0.0
        %248 = vmatpush1.msra.mxu0 %v229
        %249 = vmatprep.subr.mxu0 0.0
        %250 = vmatpush1.msra.mxu0 %v228
        %251 = vmatprep.subr.mxu0 0.0
        %252 = vmatpush1.msra.mxu0 %v227
        %253 = vmatprep.subr.mxu0 0.0
        %254 = vmatpush1.msra.mxu0 %v226
        %255 = vmatprep.subr.mxu0 0.0
        %256 = vmatpush1.msra.mxu0 %v225
        %257 = vmatprep.subr.mxu0 0.0
        %258 = vmatpush1.msra.mxu0 %v224
        %259 = vmatprep.subr.mxu0 0.0
        %260 = vmatpush1.msra.mxu0 %v223
        %261 = vmatprep.subr.mxu0 0.0
        %262 = vmatpush1.msra.mxu0 %v222
        %263 = vmatprep.subr.mxu0 0.0
        %264 = vmatpush1.msra.mxu0 %v221
        %265 = vmatprep.subr.mxu0 0.0
        %266 = vmatpush1.msra.mxu0 %v220
        %267 = vmatprep.subr.mxu0 0.0
        %268 = vmatpush1.msra.mxu0 %v219
        %269 = vmatprep.subr.mxu0 0.0
        %270 = vmatpush1.msra.mxu0 %v218
        %271 = vmatprep.subr.mxu0 0.0
        %272 = vmatpush2.msra.mxu0 0.0
        %273 = vmatprep.subr.mxu0 0.0
        %274 = vmatpush2.msra.mxu0 0.0
        %275 = vmatprep.subr.mxu0 0.0
        %276 = vmatpush2.msra.mxu0 0.0
        %277 = vmatprep.subr.mxu0 0.0
        %278 = vmatpush2.msra.mxu0 0.0
        %279 = vmatprep.subr.mxu0 0.0
        %280 = vmatpush2.msra.mxu0 0.0
        %281 = vmatprep.subr.mxu0 0.0
        %282 = vmatpush2.msra.mxu0 0.0
        %283 = vmatprep.subr.mxu0 0.0
        %284 = vmatpush2.msra.mxu0 0.0
        %285 = vmatprep.subr.mxu0 0.0
        %286 = vmatpush2.msra.mxu0 0.0
        %287 = vmatprep.subr.mxu0 0.0
        %288 = vmatpush2.msra.mxu0 0.0
        %289 = vmatprep.subr.mxu0 0.0
        %290 = vmatpush2.msra.mxu0 0.0
        %291 = vmatprep.subr.mxu0 0.0
        %292 = vmatpush2.msra.mxu0 0.0
        %293 = vmatprep.subr.mxu0 0.0
        %294 = vmatpush2.msra.mxu0 0.0
        %295 = vmatprep.subr.mxu0 0.0
        %296 = vmatpush2.msra.mxu0 0.0
        %297 = vmatprep.subr.mxu0 0.0
        %298 = vmatpush2.msra.mxu0 0.0
        %299 = vmatprep.subr.mxu0 0.0
        %300 = vmatpush2.msra.mxu0 0.0
        %301 = vmatprep.subr.mxu0 0.0
        %302 = vmatpush2.msra.mxu0 0.0
        %303 = vmatprep.mubr.f32.mxu0 0.0
        %304 = vmatmul.mubr.f32.gmra.mxu0 %v186
        %v305 = vpop.f32.mrf.mxu0
        %v306 = vadd.f32 %v238, %v305
        %v307 = vpop.f32.mrf.mxu0
        %308 = vmatprep.mubr.f32.mxu0 0.0
        %309 = vmatmul.mubr.f32.gmra.mxu0 %v187
        %v310 = vpop.f32.mrf.mxu0
        %v311 = vadd.f32 %v238, %v310
        %v312 = vpop.f32.mrf.mxu0
        %313 = vmatprep.mubr.f32.mxu0 0.0
        %314 = vmatmul.mubr.f32.gmra.mxu0 %v188
        %v315 = vpop.f32.mrf.mxu0
        %v316 = vadd.f32 %v238, %v315
        %v317 = vpop.f32.mrf.mxu0
        %318 = vmatprep.mubr.f32.mxu0 0.0
        %319 = vmatmul.mubr.f32.gmra.mxu0 %v189
        %v320 = vpop.f32.mrf.mxu0
        %v321 = vadd.f32 %v238, %v320
        %v322 = vpop.f32.mrf.mxu0
        %323 = vmatprep.mubr.f32.mxu0 0.0
        %324 = vmatmul.mubr.f32.gmra.mxu0 %v190
        %v325 = vpop.f32.mrf.mxu0
        %v326 = vadd.f32 %v238, %v325
        %v327 = vpop.f32.mrf.mxu0
        %328 = vmatprep.mubr.f32.mxu0 0.0
        %329 = vmatmul.mubr.f32.gmra.mxu0 %v191
        %v330 = vpop.f32.mrf.mxu0
        %v331 = vadd.f32 %v238, %v330
        %v332 = vpop.f32.mrf.mxu0
        %333 = vmatprep.mubr.f32.mxu0 0.0
        %334 = vmatmul.mubr.f32.gmra.mxu0 %v192
        %v335 = vpop.f32.mrf.mxu0
        %v336 = vadd.f32 %v238, %v335
        %v337 = vpop.f32.mrf.mxu0
        %338 = vmatprep.mubr.f32.mxu0 0.0
        %339 = vmatmul.mubr.f32.gmra.mxu0 %v193
        %v340 = vpop.f32.mrf.mxu0
        %v341 = vadd.f32 %v238, %v340
        %v342 = vpop.f32.mrf.mxu0
        %343 = vmatprep.mubr.f32.mxu0 0.0
        %344 = vmatmul.mubr.f32.gmra.mxu0 %v194
        %v345 = vpop.f32.mrf.mxu0
        %v346 = vadd.f32 %v238, %v345
        %v347 = vpop.f32.mrf.mxu0
        %348 = vmatprep.mubr.f32.mxu0 0.0
        %349 = vmatmul.mubr.f32.gmra.mxu0 %v195
        %v350 = vpop.f32.mrf.mxu0
        %v351 = vadd.f32 %v238, %v350
        %v352 = vpop.f32.mrf.mxu0
        %353 = vmatprep.mubr.f32.mxu0 0.0
        %354 = vmatmul.mubr.f32.gmra.mxu0 %v196
        %v355 = vpop.f32.mrf.mxu0
        %v356 = vadd.f32 %v238, %v355
        %v357 = vpop.f32.mrf.mxu0
        %358 = vmatprep.mubr.f32.mxu0 0.0
        %359 = vmatmul.mubr.f32.gmra.mxu0 %v197
        %v360 = vpop.f32.mrf.mxu0
        %v361 = vadd.f32 %v238, %v360
        %v362 = vpop.f32.mrf.mxu0
        %363 = vmatprep.mubr.f32.mxu0 0.0
        %364 = vmatmul.mubr.f32.gmra.mxu0 %v198
        %v365 = vpop.f32.mrf.mxu0
        %v366 = vadd.f32 %v238, %v365
        %v367 = vpop.f32.mrf.mxu0
        %368 = vmatprep.mubr.f32.mxu0 0.0
        %369 = vmatmul.mubr.f32.gmra.mxu0 %v199
        %v370 = vpop.f32.mrf.mxu0
        %v371 = vadd.f32 %v238, %v370
        %v372 = vpop.f32.mrf.mxu0
        %373 = vmatprep.mubr.f32.mxu0 0.0
        %374 = vmatmul.mubr.f32.gmra.mxu0 %v200
        %v375 = vpop.f32.mrf.mxu0
        %v376 = vadd.f32 %v238, %v375
        %v377 = vpop.f32.mrf.mxu0
        %378 = vmatprep.mubr.f32.mxu0 0.0
        %379 = vmatmul.mubr.f32.gmra.mxu0 %v201
        %v380 = vpop.f32.mrf.mxu0
        %v381 = vadd.f32 %v238, %v380
        %v382 = vpop.f32.mrf.mxu0
        %383 = vmatprep.mubr.f32.mxu0 0.0
        %384 = vmatmul.mubr.f32.gmra.mxu0 %v202
        %v385 = vpop.f32.mrf.mxu0
        %v386 = vadd.f32 %v238, %v385
        %v387 = vpop.f32.mrf.mxu0
        %388 = vmatprep.mubr.f32.mxu0 0.0
        %389 = vmatmul.mubr.f32.gmra.mxu0 %v203
        %v390 = vpop.f32.mrf.mxu0
        %v391 = vadd.f32 %v238, %v390
        %v392 = vpop.f32.mrf.mxu0
        %393 = vmatprep.mubr.f32.mxu0 0.0
        %394 = vmatmul.mubr.f32.gmra.mxu0 %v204
        %v395 = vpop.f32.mrf.mxu0
        %v396 = vadd.f32 %v238, %v395
        %v397 = vpop.f32.mrf.mxu0
        %398 = vmatprep.mubr.f32.mxu0 0.0
        %399 = vmatmul.mubr.f32.gmra.mxu0 %v205
        %v400 = vpop.f32.mrf.mxu0
        %v401 = vadd.f32 %v238, %v400
        %v402 = vpop.f32.mrf.mxu0
        %403 = vmatprep.mubr.f32.mxu0 0.0
        %404 = vmatmul.mubr.f32.gmra.mxu0 %v206
        %v405 = vpop.f32.mrf.mxu0
        %v406 = vadd.f32 %v238, %v405
        %v407 = vpop.f32.mrf.mxu0
        %408 = vmatprep.mubr.f32.mxu0 0.0
        %409 = vmatmul.mubr.f32.gmra.mxu0 %v207
        %v410 = vpop.f32.mrf.mxu0
        %v411 = vadd.f32 %v238, %v410
        %v412 = vpop.f32.mrf.mxu0
        %413 = vmatprep.mubr.f32.mxu0 0.0
        %414 = vmatmul.mubr.f32.gmra.mxu0 %v208
        %v415 = vpop.f32.mrf.mxu0
        %v416 = vadd.f32 %v238, %v415
        %v417 = vpop.f32.mrf.mxu0
        %418 = vmatprep.mubr.f32.mxu0 0.0
        %419 = vmatmul.mubr.f32.gmra.mxu0 %v209
        %v420 = vpop.f32.mrf.mxu0
        %v421 = vadd.f32 %v238, %v420
        %v422 = vpop.f32.mrf.mxu0
        %423 = vmatprep.mubr.f32.mxu0 0.0
        %424 = vmatmul.mubr.f32.gmra.mxu0 %v210
        %v425 = vpop.f32.mrf.mxu0
        %v426 = vadd.f32 %v238, %v425
        %v427 = vpop.f32.mrf.mxu0
        %428 = vmatprep.mubr.f32.mxu0 0.0
        %429 = vmatmul.mubr.f32.gmra.mxu0 %v211
        %v430 = vpop.f32.mrf.mxu0
        %v431 = vadd.f32 %v238, %v430
        %v432 = vpop.f32.mrf.mxu0
        %433 = vmatprep.mubr.f32.mxu0 0.0
        %434 = vmatmul.mubr.f32.gmra.mxu0 %v212
        %v435 = vpop.f32.mrf.mxu0
        %v436 = vadd.f32 %v238, %v435
        %v437 = vpop.f32.mrf.mxu0
        %438 = vmatprep.mubr.f32.mxu0 0.0
        %439 = vmatmul.mubr.f32.gmra.mxu0 %v213
        %v440 = vpop.f32.mrf.mxu0
        %v441 = vadd.f32 %v238, %v440
        %v442 = vpop.f32.mrf.mxu0
        %443 = vmatprep.mubr.f32.mxu0 0.0
        %444 = vmatmul.mubr.f32.gmra.mxu0 %v214
        %v445 = vpop.f32.mrf.mxu0
        %v446 = vadd.f32 %v238, %v445
        %v447 = vpop.f32.mrf.mxu0
        %448 = vmatprep.mubr.f32.mxu0 0.0
        %449 = vmatmul.mubr.f32.gmra.mxu0 %v215
        %v450 = vpop.f32.mrf.mxu0
        %v451 = vadd.f32 %v238, %v450
        %v452 = vpop.f32.mrf.mxu0
        %453 = vmatprep.mubr.f32.mxu0 0.0
        %454 = vmatmul.mubr.f32.gmra.mxu0 %v216
        %v455 = vpop.f32.mrf.mxu0
        %v456 = vadd.f32 %v238, %v455
        %v457 = vpop.f32.mrf.mxu0
        %458 = vmatprep.mubr.f32.mxu0 0.0
        %459 = vmatmul.mubr.f32.gmra.mxu0 %v217
        %v460 = vpop.f32.mrf.mxu0
        %v461 = vadd.f32 %v238, %v460
        %v462 = vpop.f32.mrf.mxu0
        %463 = vdwg.mxu0
        %v464 = vmax.f32 %v306, 0.0
        %v465 = vmax.f32 %v311, 0.0
        %v466 = vmax.f32 %v316, 0.0
        %v467 = vmax.f32 %v321, 0.0
        %v468 = vmax.f32 %v326, 0.0
        %v469 = vmax.f32 %v331, 0.0
        %v470 = vmax.f32 %v336, 0.0
        %v471 = vmax.f32 %v341, 0.0
        %v472 = vmax.f32 %v346, 0.0
        %v473 = vmax.f32 %v351, 0.0
        %v474 = vmax.f32 %v356, 0.0
        %v475 = vmax.f32 %v361, 0.0
        %v476 = vmax.f32 %v366, 0.0
        %v477 = vmax.f32 %v371, 0.0
        %v478 = vmax.f32 %v376, 0.0
        %v479 = vmax.f32 %v381, 0.0
        %v480 = vmax.f32 %v386, 0.0
        %v481 = vmax.f32 %v391, 0.0
        %v482 = vmax.f32 %v396, 0.0
        %v483 = vmax.f32 %v401, 0.0
        %v484 = vmax.f32 %v406, 0.0
        %v485 = vmax.f32 %v411, 0.0
        %v486 = vmax.f32 %v416, 0.0
        %v487 = vmax.f32 %v421, 0.0
        %v488 = vmax.f32 %v426, 0.0
        %v489 = vmax.f32 %v431, 0.0
        %v490 = vmax.f32 %v436, 0.0
        %v491 = vmax.f32 %v441, 0.0
        %v492 = vmax.f32 %v446, 0.0
        %v493 = vmax.f32 %v451, 0.0
        %v494 = vmax.f32 %v456, 0.0
        %v495 = vmax.f32 %v461, 0.0
        %496 = vst [vmem:[#allocation2] sm:$0xff] 0.0
        %497 = vst [vmem:[#allocation2 + $0x8] sm:$0xff] 0.0
        %498 = vst [vmem:[#allocation2 + $0x10] sm:$0x3] 0.0
        %499 = vst [vmem:[#allocation2 + $0x18] sm:$0xff] 0.0
        %500 = vst [vmem:[#allocation2 + $0x20] sm:$0xff] 0.0
        %501 = vst [vmem:[#allocation2 + $0x28] sm:$0x3] 0.0
        %502 = vst [vmem:[#allocation2 + $0x30] sm:$0xff] 0.0
        %503 = vst [vmem:[#allocation2 + $0x38] sm:$0xff] 0.0
        %504 = vst [vmem:[#allocation2 + $0x40] sm:$0x3] 0.0
        %505 = vst [vmem:[#allocation2 + $0x48] sm:$0xff] 0.0
        %506 = vst [vmem:[#allocation2 + $0x50] sm:$0xff] 0.0
        %507 = vst [vmem:[#allocation2 + $0x58] sm:$0x3] 0.0
        %508 = vst [vmem:[#allocation2 + $0x60] sm:$0xff] 0.0
        %509 = vst [vmem:[#allocation2 + $0x68] sm:$0xff] 0.0
        %510 = vst [vmem:[#allocation2 + $0x70] sm:$0x3] 0.0
        %511 = vst [vmem:[#allocation2 + $0x78] sm:$0xff] 0.0
        %512 = vst [vmem:[#allocation2 + $0x80] sm:$0xff] 0.0
        %513 = vst [vmem:[#allocation2 + $0x88] sm:$0x3] 0.0
        %514 = vst [vmem:[#allocation2 + $0x90] sm:$0xff] 0.0
        %515 = vst [vmem:[#allocation2 + $0x98] sm:$0xff] 0.0
        %516 = vst [vmem:[#allocation2 + $0xa0] sm:$0x3] 0.0
        %517 = vst [vmem:[#allocation2 + $0xa8] sm:$0xff] 0.0
        %518 = vst [vmem:[#allocation2 + $0xb0] sm:$0xff] 0.0
        %519 = vst [vmem:[#allocation2 + $0xb8] sm:$0x3] 0.0
        %520 = vst [vmem:[#allocation2 + $0xc0] sm:$0xff] 0.0
        %521 = vst [vmem:[#allocation2 + $0xc8] sm:$0xff] 0.0
        %522 = vst [vmem:[#allocation2 + $0xd0] sm:$0x3] 0.0
        %523 = vst [vmem:[#allocation2 + $0xd8] sm:$0xff] 0.0
        %524 = vst [vmem:[#allocation2 + $0xe0] sm:$0xff] 0.0
        %525 = vst [vmem:[#allocation2 + $0xe8] sm:$0x3] 0.0
        %526 = vst [vmem:[#allocation2 + $0xf0] sm:$0xff] 0.0
        %527 = vst [vmem:[#allocation2 + $0xf8] sm:$0xff] 0.0
        %528 = vst [vmem:[#allocation2 + $0x100] sm:$0x3] 0.0
        %529 = vst [vmem:[#allocation2 + $0x108] sm:$0xff] 0.0
        %530 = vst [vmem:[#allocation2 + $0x110] sm:$0xff] 0.0
        %531 = vst [vmem:[#allocation2 + $0x118] sm:$0x3] 0.0
        %532 = vst [vmem:[#allocation2 + $0x120] sm:$0xff] 0.0
        %533 = vst [vmem:[#allocation2 + $0x128] sm:$0xff] 0.0
        %534 = vst [vmem:[#allocation2 + $0x130] sm:$0x3] 0.0
        %535 = vst [vmem:[#allocation2 + $0x138] sm:$0xff] 0.0
        %536 = vst [vmem:[#allocation2 + $0x140] sm:$0xff] 0.0
        %537 = vst [vmem:[#allocation2 + $0x148] sm:$0x3] 0.0
        %538 = vst [vmem:[#allocation2 + $0x150] sm:$0xff] 0.0
        %539 = vst [vmem:[#allocation2 + $0x158] sm:$0xff] 0.0
        %540 = vst [vmem:[#allocation2 + $0x160] sm:$0x3] 0.0
        %541 = vst [vmem:[#allocation2 + $0x168] sm:$0xff] 0.0
        %542 = vst [vmem:[#allocation2 + $0x170] sm:$0xff] 0.0
        %543 = vst [vmem:[#allocation2 + $0x178] sm:$0x3] 0.0
        %544 = vst [vmem:[#allocation2 + $0x180] sm:$0xff] 0.0
        %545 = vst [vmem:[#allocation2 + $0x188] sm:$0xff] 0.0
        %546 = vst [vmem:[#allocation2 + $0x190] sm:$0x3] 0.0
        %547 = vst [vmem:[#allocation2 + $0x198] sm:$0xff] 0.0
        %548 = vst [vmem:[#allocation2 + $0x1a0] sm:$0xff] 0.0
        %549 = vst [vmem:[#allocation2 + $0x1a8] sm:$0x3] 0.0
        %s550 = scalar_lea.vmem [#allocation2], 24
        %551 = vst [vmem:[%s550 + $0x1] sm:$0xff] %v464
        %552 = vst [vmem:[%s550 + $0x9] sm:$0xff] %v465
        %553 = vst [vmem:[%s550 + $0x19] sm:$0xff] %v466
        %554 = vst [vmem:[%s550 + $0x21] sm:$0xff] %v467
        %555 = vst [vmem:[%s550 + $0x31] sm:$0xff] %v468
        %556 = vst [vmem:[%s550 + $0x39] sm:$0xff] %v469
        %557 = vst [vmem:[%s550 + $0x49] sm:$0xff] %v470
        %558 = vst [vmem:[%s550 + $0x51] sm:$0xff] %v471
        %559 = vst [vmem:[%s550 + $0x61] sm:$0xff] %v472
        %560 = vst [vmem:[%s550 + $0x69] sm:$0xff] %v473
        %561 = vst [vmem:[%s550 + $0x79] sm:$0xff] %v474
        %562 = vst [vmem:[%s550 + $0x81] sm:$0xff] %v475
        %563 = vst [vmem:[%s550 + $0x91] sm:$0xff] %v476
        %564 = vst [vmem:[%s550 + $0x99] sm:$0xff] %v477
        %565 = vst [vmem:[%s550 + $0xa9] sm:$0xff] %v478
        %566 = vst [vmem:[%s550 + $0xb1] sm:$0xff] %v479
        %567 = vst [vmem:[%s550 + $0xc1] sm:$0xff] %v480
        %568 = vst [vmem:[%s550 + $0xc9] sm:$0xff] %v481
        %569 = vst [vmem:[%s550 + $0xd9] sm:$0xff] %v482
        %570 = vst [vmem:[%s550 + $0xe1] sm:$0xff] %v483
        %571 = vst [vmem:[%s550 + $0xf1] sm:$0xff] %v484
        %572 = vst [vmem:[%s550 + $0xf9] sm:$0xff] %v485
        %573 = vst [vmem:[%s550 + $0x109] sm:$0xff] %v486
        %574 = vst [vmem:[%s550 + $0x111] sm:$0xff] %v487
        %575 = vst [vmem:[%s550 + $0x121] sm:$0xff] %v488
        %576 = vst [vmem:[%s550 + $0x129] sm:$0xff] %v489
        %577 = vst [vmem:[%s550 + $0x139] sm:$0xff] %v490
        %578 = vst [vmem:[%s550 + $0x141] sm:$0xff] %v491
        %579 = vst [vmem:[%s550 + $0x151] sm:$0xff] %v492
        %580 = vst [vmem:[%s550 + $0x159] sm:$0xff] %v493
        %581 = vst [vmem:[%s550 + $0x169] sm:$0xff] %v494
        %582 = vst [vmem:[%s550 + $0x171] sm:$0xff] %v495
        %v583 = vld [vmem:[#allocation2] sm:$0xff]
        %v584 = vld [vmem:[#allocation2 + $0x8] sm:$0xff]
        %v585 = vld [vmem:[#allocation2 + $0x18] sm:$0xff]
        %v586 = vld [vmem:[#allocation2 + $0x20] sm:$0xff]
        %v587 = vld [vmem:[#allocation2 + $0x30] sm:$0xff]
        %v588 = vld [vmem:[#allocation2 + $0x38] sm:$0xff]
        %v589 = vld [vmem:[#allocation2 + $0x48] sm:$0xff]
        %v590 = vld [vmem:[#allocation2 + $0x50] sm:$0xff]
        %v591 = vld [vmem:[#allocation2 + $0x60] sm:$0xff]
        %v592 = vld [vmem:[#allocation2 + $0x68] sm:$0xff]
        %v593 = vld [vmem:[#allocation2 + $0x78] sm:$0xff]
        %v594 = vld [vmem:[#allocation2 + $0x80] sm:$0xff]
        %v595 = vld [vmem:[#allocation2 + $0x90] sm:$0xff]
        %v596 = vld [vmem:[#allocation2 + $0x98] sm:$0xff]
        %v597 = vld [vmem:[#allocation2 + $0xa8] sm:$0xff]
        %v598 = vld [vmem:[#allocation2 + $0xb0] sm:$0xff]
        %v599 = vld [vmem:[#allocation2 + $0xc0] sm:$0xff]
        %v600 = vld [vmem:[#allocation2 + $0xc8] sm:$0xff]
        %v601 = vld [vmem:[#allocation2 + $0xd8] sm:$0xff]
        %v602 = vld [vmem:[#allocation2 + $0xe0] sm:$0xff]
        %v603 = vld [vmem:[#allocation2 + $0xf0] sm:$0xff]
        %v604 = vld [vmem:[#allocation2 + $0xf8] sm:$0xff]
        %v605 = vld [vmem:[#allocation2 + $0x108] sm:$0xff]
        %v606 = vld [vmem:[#allocation2 + $0x110] sm:$0xff]
        %v607 = vld [vmem:[#allocation2 + $0x120] sm:$0xff]
        %v608 = vld [vmem:[#allocation2 + $0x128] sm:$0xff]
        %v609 = vld [vmem:[#allocation2 + $0x138] sm:$0xff]
        %v610 = vld [vmem:[#allocation2 + $0x140] sm:$0xff]
        %v611 = vld [vmem:[#allocation2 + $0x150] sm:$0xff]
        %v612 = vld [vmem:[#allocation2 + $0x158] sm:$0xff]
        %v613 = vld [vmem:[#allocation2 + $0x168] sm:$0xff]
        %v614 = vld [vmem:[#allocation2 + $0x170] sm:$0xff]
        %s615 = scalar_lea.vmem [#allocation3], 128
        %v616 = vld [vmem:[%s615] sm:$0xff]
        %v617 = vld [vmem:[%s615 + $0x8] sm:$0xff]
        %v618 = vld [vmem:[%s615 + $0x10] sm:$0xff]
        %v619 = vld [vmem:[%s615 + $0x18] sm:$0xff]
        %v620 = vld [vmem:[%s615 + $0x20] sm:$0xff]
        %v621 = vld [vmem:[%s615 + $0x28] sm:$0xff]
        %v622 = vld [vmem:[%s615 + $0x30] sm:$0xff]
        %v623 = vld [vmem:[%s615 + $0x38] sm:$0xff]
        %v624 = vld [vmem:[%s615 + $0x40] sm:$0xff]
        %v625 = vld [vmem:[%s615 + $0x48] sm:$0xff]
        %v626 = vld [vmem:[%s615 + $0x50] sm:$0xff]
        %v627 = vld [vmem:[%s615 + $0x58] sm:$0xff]
        %v628 = vld [vmem:[%s615 + $0x60] sm:$0xff]
        %v629 = vld [vmem:[%s615 + $0x68] sm:$0xff]
        %v630 = vld [vmem:[%s615 + $0x70] sm:$0xff]
        %v631 = vld [vmem:[%s615 + $0x78] sm:$0xff]
        %v632 = vld [vmem:[#allocation2 + $0x1] sm:$0xff]
        %v633 = vld [vmem:[#allocation2 + $0x9] sm:$0xff]
        %v634 = vld [vmem:[#allocation2 + $0x19] sm:$0xff]
        %v635 = vld [vmem:[#allocation2 + $0x21] sm:$0xff]
        %v636 = vld [vmem:[#allocation2 + $0x31] sm:$0xff]
        %v637 = vld [vmem:[#allocation2 + $0x39] sm:$0xff]
        %v638 = vld [vmem:[#allocation2 + $0x49] sm:$0xff]
        %v639 = vld [vmem:[#allocation2 + $0x51] sm:$0xff]
        %v640 = vld [vmem:[#allocation2 + $0x61] sm:$0xff]
        %v641 = vld [vmem:[#allocation2 + $0x69] sm:$0xff]
        %v642 = vld [vmem:[#allocation2 + $0x79] sm:$0xff]
        %v643 = vld [vmem:[#allocation2 + $0x81] sm:$0xff]
        %v644 = vld [vmem:[#allocation2 + $0x91] sm:$0xff]
        %v645 = vld [vmem:[#allocation2 + $0x99] sm:$0xff]
        %v646 = vld [vmem:[#allocation2 + $0xa9] sm:$0xff]
        %v647 = vld [vmem:[#allocation2 + $0xb1] sm:$0xff]
        %v648 = vld [vmem:[#allocation2 + $0xc1] sm:$0xff]
        %v649 = vld [vmem:[#allocation2 + $0xc9] sm:$0xff]
        %v650 = vld [vmem:[#allocation2 + $0xd9] sm:$0xff]
        %v651 = vld [vmem:[#allocation2 + $0xe1] sm:$0xff]
        %v652 = vld [vmem:[#allocation2 + $0xf1] sm:$0xff]
        %v653 = vld [vmem:[#allocation2 + $0xf9] sm:$0xff]
        %v654 = vld [vmem:[#allocation2 + $0x109] sm:$0xff]
        %v655 = vld [vmem:[#allocation2 + $0x111] sm:$0xff]
        %v656 = vld [vmem:[#allocation2 + $0x121] sm:$0xff]
        %v657 = vld [vmem:[#allocation2 + $0x129] sm:$0xff]
        %v658 = vld [vmem:[#allocation2 + $0x139] sm:$0xff]
        %v659 = vld [vmem:[#allocation2 + $0x141] sm:$0xff]
        %v660 = vld [vmem:[#allocation2 + $0x151] sm:$0xff]
        %v661 = vld [vmem:[#allocation2 + $0x159] sm:$0xff]
        %v662 = vld [vmem:[#allocation2 + $0x169] sm:$0xff]
        %v663 = vld [vmem:[#allocation2 + $0x171] sm:$0xff]
        %s664 = scalar_lea.vmem [#allocation3], 256
        %v665 = vld [vmem:[%s664] sm:$0xff]
        %v666 = vld [vmem:[%s664 + $0x8] sm:$0xff]
        %v667 = vld [vmem:[%s664 + $0x10] sm:$0xff]
        %v668 = vld [vmem:[%s664 + $0x18] sm:$0xff]
        %v669 = vld [vmem:[%s664 + $0x20] sm:$0xff]
        %v670 = vld [vmem:[%s664 + $0x28] sm:$0xff]
        %v671 = vld [vmem:[%s664 + $0x30] sm:$0xff]
        %v672 = vld [vmem:[%s664 + $0x38] sm:$0xff]
        %v673 = vld [vmem:[%s664 + $0x40] sm:$0xff]
        %v674 = vld [vmem:[%s664 + $0x48] sm:$0xff]
        %v675 = vld [vmem:[%s664 + $0x50] sm:$0xff]
        %v676 = vld [vmem:[%s664 + $0x58] sm:$0xff]
        %v677 = vld [vmem:[%s664 + $0x60] sm:$0xff]
        %v678 = vld [vmem:[%s664 + $0x68] sm:$0xff]
        %v679 = vld [vmem:[%s664 + $0x70] sm:$0xff]
        %v680 = vld [vmem:[%s664 + $0x78] sm:$0xff]
        %681 = vmatprep.subr.mxu0 0.0
        %682 = vmatpush1.msra.mxu0 %v680
        %683 = vmatprep.subr.mxu0 0.0
        %684 = vmatpush1.msra.mxu0 %v679
        %685 = vmatprep.subr.mxu0 0.0
        %686 = vmatpush1.msra.mxu0 %v678
        %687 = vmatprep.subr.mxu0 0.0
        %688 = vmatpush1.msra.mxu0 %v677
        %689 = vmatprep.subr.mxu0 0.0
        %690 = vmatpush1.msra.mxu0 %v676
        %691 = vmatprep.subr.mxu0 0.0
        %692 = vmatpush1.msra.mxu0 %v675
        %693 = vmatprep.subr.mxu0 0.0
        %694 = vmatpush1.msra.mxu0 %v674
        %695 = vmatprep.subr.mxu0 0.0
        %696 = vmatpush1.msra.mxu0 %v673
        %697 = vmatprep.subr.mxu0 0.0
        %698 = vmatpush1.msra.mxu0 %v672
        %699 = vmatprep.subr.mxu0 0.0
        %700 = vmatpush1.msra.mxu0 %v671
        %701 = vmatprep.subr.mxu0 0.0
        %702 = vmatpush1.msra.mxu0 %v670
        %703 = vmatprep.subr.mxu0 0.0
        %704 = vmatpush1.msra.mxu0 %v669
        %705 = vmatprep.subr.mxu0 0.0
        %706 = vmatpush1.msra.mxu0 %v668
        %707 = vmatprep.subr.mxu0 0.0
        %708 = vmatpush1.msra.mxu0 %v667
        %709 = vmatprep.subr.mxu0 0.0
        %710 = vmatpush1.msra.mxu0 %v666
        %711 = vmatprep.subr.mxu0 0.0
        %712 = vmatpush1.msra.mxu0 %v665
        %713 = vmatprep.subr.mxu0 0.0
        %714 = vmatpush2.msra.mxu0 0.0
        %715 = vmatprep.subr.mxu0 0.0
        %716 = vmatpush2.msra.mxu0 0.0
        %717 = vmatprep.subr.mxu0 0.0
        %718 = vmatpush2.msra.mxu0 0.0
        %719 = vmatprep.subr.mxu0 0.0
        %720 = vmatpush2.msra.mxu0 0.0
        %721 = vmatprep.subr.mxu0 0.0
        %722 = vmatpush2.msra.mxu0 0.0
        %723 = vmatprep.subr.mxu0 0.0
        %724 = vmatpush2.msra.mxu0 0.0
        %725 = vmatprep.subr.mxu0 0.0
        %726 = vmatpush2.msra.mxu0 0.0
        %727 = vmatprep.subr.mxu0 0.0
        %728 = vmatpush2.msra.mxu0 0.0
        %729 = vmatprep.subr.mxu0 0.0
        %730 = vmatpush2.msra.mxu0 0.0
        %731 = vmatprep.subr.mxu0 0.0
        %732 = vmatpush2.msra.mxu0 0.0
        %733 = vmatprep.subr.mxu0 0.0
        %734 = vmatpush2.msra.mxu0 0.0
        %735 = vmatprep.subr.mxu0 0.0
        %736 = vmatpush2.msra.mxu0 0.0
        %737 = vmatprep.subr.mxu0 0.0
        %738 = vmatpush2.msra.mxu0 0.0
        %739 = vmatprep.subr.mxu0 0.0
        %740 = vmatpush2.msra.mxu0 0.0
        %741 = vmatprep.subr.mxu0 0.0
        %742 = vmatpush2.msra.mxu0 0.0
        %743 = vmatprep.subr.mxu0 0.0
        %744 = vmatpush2.msra.mxu0 0.0
        %745 = vmatprep.mubr.f32.mxu0 0.0
        %746 = vmatmul.mubr.f32.gmra.mxu0 %v632
        %v747 = vpop.f32.mrf.mxu0
        %v748 = vadd.f32 0.0, %v747
        %v749 = vpop.f32.mrf.mxu0
        %750 = vmatprep.mubr.f32.mxu0 0.0
        %751 = vmatmul.mubr.f32.gmra.mxu0 %v633
        %v752 = vpop.f32.mrf.mxu0
        %v753 = vadd.f32 0.0, %v752
        %v754 = vpop.f32.mrf.mxu0
        %755 = vmatprep.mubr.f32.mxu0 0.0
        %756 = vmatmul.mubr.f32.gmra.mxu0 %v634
        %v757 = vpop.f32.mrf.mxu0
        %v758 = vadd.f32 0.0, %v757
        %v759 = vpop.f32.mrf.mxu0
        %760 = vmatprep.mubr.f32.mxu0 0.0
        %761 = vmatmul.mubr.f32.gmra.mxu0 %v635
        %v762 = vpop.f32.mrf.mxu0
        %v763 = vadd.f32 0.0, %v762
        %v764 = vpop.f32.mrf.mxu0
        %765 = vmatprep.mubr.f32.mxu0 0.0
        %766 = vmatmul.mubr.f32.gmra.mxu0 %v636
        %v767 = vpop.f32.mrf.mxu0
        %v768 = vadd.f32 0.0, %v767
        %v769 = vpop.f32.mrf.mxu0
        %770 = vmatprep.mubr.f32.mxu0 0.0
        %771 = vmatmul.mubr.f32.gmra.mxu0 %v637
        %v772 = vpop.f32.mrf.mxu0
        %v773 = vadd.f32 0.0, %v772
        %v774 = vpop.f32.mrf.mxu0
        %775 = vmatprep.mubr.f32.mxu0 0.0
        %776 = vmatmul.mubr.f32.gmra.mxu0 %v638
        %v777 = vpop.f32.mrf.mxu0
        %v778 = vadd.f32 0.0, %v777
        %v779 = vpop.f32.mrf.mxu0
        %780 = vmatprep.mubr.f32.mxu0 0.0
        %781 = vmatmul.mubr.f32.gmra.mxu0 %v639
        %v782 = vpop.f32.mrf.mxu0
        %v783 = vadd.f32 0.0, %v782
        %v784 = vpop.f32.mrf.mxu0
        %785 = vmatprep.mubr.f32.mxu0 0.0
        %786 = vmatmul.mubr.f32.gmra.mxu0 %v640
        %v787 = vpop.f32.mrf.mxu0
        %v788 = vadd.f32 0.0, %v787
        %v789 = vpop.f32.mrf.mxu0
        %790 = vmatprep.mubr.f32.mxu0 0.0
        %791 = vmatmul.mubr.f32.gmra.mxu0 %v641
        %v792 = vpop.f32.mrf.mxu0
        %v793 = vadd.f32 0.0, %v792
        %v794 = vpop.f32.mrf.mxu0
        %795 = vmatprep.mubr.f32.mxu0 0.0
        %796 = vmatmul.mubr.f32.gmra.mxu0 %v642
        %v797 = vpop.f32.mrf.mxu0
        %v798 = vadd.f32 0.0, %v797
        %v799 = vpop.f32.mrf.mxu0
        %800 = vmatprep.mubr.f32.mxu0 0.0
        %801 = vmatmul.mubr.f32.gmra.mxu0 %v643
        %v802 = vpop.f32.mrf.mxu0
        %v803 = vadd.f32 0.0, %v802
        %v804 = vpop.f32.mrf.mxu0
        %805 = vmatprep.mubr.f32.mxu0 0.0
        %806 = vmatmul.mubr.f32.gmra.mxu0 %v644
        %v807 = vpop.f32.mrf.mxu0
        %v808 = vadd.f32 0.0, %v807
        %v809 = vpop.f32.mrf.mxu0
        %810 = vmatprep.mubr.f32.mxu0 0.0
        %811 = vmatmul.mubr.f32.gmra.mxu0 %v645
        %v812 = vpop.f32.mrf.mxu0
        %v813 = vadd.f32 0.0, %v812
        %v814 = vpop.f32.mrf.mxu0
        %815 = vmatprep.mubr.f32.mxu0 0.0
        %816 = vmatmul.mubr.f32.gmra.mxu0 %v646
        %v817 = vpop.f32.mrf.mxu0
        %v818 = vadd.f32 0.0, %v817
        %v819 = vpop.f32.mrf.mxu0
        %820 = vmatprep.mubr.f32.mxu0 0.0
        %821 = vmatmul.mubr.f32.gmra.mxu0 %v647
        %v822 = vpop.f32.mrf.mxu0
        %v823 = vadd.f32 0.0, %v822
        %v824 = vpop.f32.mrf.mxu0
        %825 = vmatprep.mubr.f32.mxu0 0.0
        %826 = vmatmul.mubr.f32.gmra.mxu0 %v648
        %v827 = vpop.f32.mrf.mxu0
        %v828 = vadd.f32 0.0, %v827
        %v829 = vpop.f32.mrf.mxu0
        %830 = vmatprep.mubr.f32.mxu0 0.0
        %831 = vmatmul.mubr.f32.gmra.mxu0 %v649
        %v832 = vpop.f32.mrf.mxu0
        %v833 = vadd.f32 0.0, %v832
        %v834 = vpop.f32.mrf.mxu0
        %835 = vmatprep.mubr.f32.mxu0 0.0
        %836 = vmatmul.mubr.f32.gmra.mxu0 %v650
        %v837 = vpop.f32.mrf.mxu0
        %v838 = vadd.f32 0.0, %v837
        %v839 = vpop.f32.mrf.mxu0
        %840 = vmatprep.mubr.f32.mxu0 0.0
        %841 = vmatmul.mubr.f32.gmra.mxu0 %v651
        %v842 = vpop.f32.mrf.mxu0
        %v843 = vadd.f32 0.0, %v842
        %v844 = vpop.f32.mrf.mxu0
        %845 = vmatprep.mubr.f32.mxu0 0.0
        %846 = vmatmul.mubr.f32.gmra.mxu0 %v652
        %v847 = vpop.f32.mrf.mxu0
        %v848 = vadd.f32 0.0, %v847
        %v849 = vpop.f32.mrf.mxu0
        %850 = vmatprep.mubr.f32.mxu0 0.0
        %851 = vmatmul.mubr.f32.gmra.mxu0 %v653
        %v852 = vpop.f32.mrf.mxu0
        %v853 = vadd.f32 0.0, %v852
        %v854 = vpop.f32.mrf.mxu0
        %855 = vmatprep.mubr.f32.mxu0 0.0
        %856 = vmatmul.mubr.f32.gmra.mxu0 %v654
        %v857 = vpop.f32.mrf.mxu0
        %v858 = vadd.f32 0.0, %v857
        %v859 = vpop.f32.mrf.mxu0
        %860 = vmatprep.mubr.f32.mxu0 0.0
        %861 = vmatmul.mubr.f32.gmra.mxu0 %v655
        %v862 = vpop.f32.mrf.mxu0
        %v863 = vadd.f32 0.0, %v862
        %v864 = vpop.f32.mrf.mxu0
        %865 = vmatprep.mubr.f32.mxu0 0.0
        %866 = vmatmul.mubr.f32.gmra.mxu0 %v656
        %v867 = vpop.f32.mrf.mxu0
        %v868 = vadd.f32 0.0, %v867
        %v869 = vpop.f32.mrf.mxu0
        %870 = vmatprep.mubr.f32.mxu0 0.0
        %871 = vmatmul.mubr.f32.gmra.mxu0 %v657
        %v872 = vpop.f32.mrf.mxu0
        %v873 = vadd.f32 0.0, %v872
        %v874 = vpop.f32.mrf.mxu0
        %875 = vmatprep.mubr.f32.mxu0 0.0
        %876 = vmatmul.mubr.f32.gmra.mxu0 %v658
        %v877 = vpop.f32.mrf.mxu0
        %v878 = vadd.f32 0.0, %v877
        %v879 = vpop.f32.mrf.mxu0
        %880 = vmatprep.mubr.f32.mxu0 0.0
        %881 = vmatmul.mubr.f32.gmra.mxu0 %v659
        %v882 = vpop.f32.mrf.mxu0
        %v883 = vadd.f32 0.0, %v882
        %v884 = vpop.f32.mrf.mxu0
        %885 = vmatprep.mubr.f32.mxu0 0.0
        %886 = vmatmul.mubr.f32.gmra.mxu0 %v660
        %v887 = vpop.f32.mrf.mxu0
        %v888 = vadd.f32 0.0, %v887
        %v889 = vpop.f32.mrf.mxu0
        %890 = vmatprep.mubr.f32.mxu0 0.0
        %891 = vmatmul.mubr.f32.gmra.mxu0 %v661
        %v892 = vpop.f32.mrf.mxu0
        %v893 = vadd.f32 0.0, %v892
        %v894 = vpop.f32.mrf.mxu0
        %895 = vmatprep.mubr.f32.mxu0 0.0
        %896 = vmatmul.mubr.f32.gmra.mxu0 %v662
        %v897 = vpop.f32.mrf.mxu0
        %v898 = vadd.f32 0.0, %v897
        %v899 = vpop.f32.mrf.mxu0
        %900 = vmatprep.mubr.f32.mxu0 0.0
        %901 = vmatmul.mubr.f32.gmra.mxu0 %v663
        %v902 = vpop.f32.mrf.mxu0
        %v903 = vadd.f32 0.0, %v902
        %v904 = vpop.f32.mrf.mxu0
        %905 = vdwg.mxu0
        %906 = vmatprep.subr.mxu0 0.0
        %907 = vmatpush1.msra.mxu0 %v631
        %908 = vmatprep.subr.mxu0 0.0
        %909 = vmatpush1.msra.mxu0 %v630
        %910 = vmatprep.subr.mxu0 0.0
        %911 = vmatpush1.msra.mxu0 %v629
        %912 = vmatprep.subr.mxu0 0.0
        %913 = vmatpush1.msra.mxu0 %v628
        %914 = vmatprep.subr.mxu0 0.0
        %915 = vmatpush1.msra.mxu0 %v627
        %916 = vmatprep.subr.mxu0 0.0
        %917 = vmatpush1.msra.mxu0 %v626
        %918 = vmatprep.subr.mxu0 0.0
        %919 = vmatpush1.msra.mxu0 %v625
        %920 = vmatprep.subr.mxu0 0.0
        %921 = vmatpush1.msra.mxu0 %v624
        %922 = vmatprep.subr.mxu0 0.0
        %923 = vmatpush1.msra.mxu0 %v623
        %924 = vmatprep.subr.mxu0 0.0
        %925 = vmatpush1.msra.mxu0 %v622
        %926 = vmatprep.subr.mxu0 0.0
        %927 = vmatpush1.msra.mxu0 %v621
        %928 = vmatprep.subr.mxu0 0.0
        %929 = vmatpush1.msra.mxu0 %v620
        %930 = vmatprep.subr.mxu0 0.0
        %931 = vmatpush1.msra.mxu0 %v619
        %932 = vmatprep.subr.mxu0 0.0
        %933 = vmatpush1.msra.mxu0 %v618
        %934 = vmatprep.subr.mxu0 0.0
        %935 = vmatpush1.msra.mxu0 %v617
        %936 = vmatprep.subr.mxu0 0.0
        %937 = vmatpush1.msra.mxu0 %v616
        %938 = vmatprep.subr.mxu0 0.0
        %939 = vmatpush2.msra.mxu0 0.0
        %940 = vmatprep.subr.mxu0 0.0
        %941 = vmatpush2.msra.mxu0 0.0
        %942 = vmatprep.subr.mxu0 0.0
        %943 = vmatpush2.msra.mxu0 0.0
        %944 = vmatprep.subr.mxu0 0.0
        %945 = vmatpush2.msra.mxu0 0.0
        %946 = vmatprep.subr.mxu0 0.0
        %947 = vmatpush2.msra.mxu0 0.0
        %948 = vmatprep.subr.mxu0 0.0
        %949 = vmatpush2.msra.mxu0 0.0
        %950 = vmatprep.subr.mxu0 0.0
        %951 = vmatpush2.msra.mxu0 0.0
        %952 = vmatprep.subr.mxu0 0.0
        %953 = vmatpush2.msra.mxu0 0.0
        %954 = vmatprep.subr.mxu0 0.0
        %955 = vmatpush2.msra.mxu0 0.0
        %956 = vmatprep.subr.mxu0 0.0
        %957 = vmatpush2.msra.mxu0 0.0
        %958 = vmatprep.subr.mxu0 0.0
        %959 = vmatpush2.msra.mxu0 0.0
        %960 = vmatprep.subr.mxu0 0.0
        %961 = vmatpush2.msra.mxu0 0.0
        %962 = vmatprep.subr.mxu0 0.0
        %963 = vmatpush2.msra.mxu0 0.0
        %964 = vmatprep.subr.mxu0 0.0
        %965 = vmatpush2.msra.mxu0 0.0
        %966 = vmatprep.subr.mxu0 0.0
        %967 = vmatpush2.msra.mxu0 0.0
        %968 = vmatprep.subr.mxu0 0.0
        %969 = vmatpush2.msra.mxu0 0.0
        %970 = vmatprep.mubr.f32.mxu0 0.0
        %971 = vmatmul.mubr.f32.gmra.mxu0 %v583
        %v972 = vpop.f32.mrf.mxu0
        %v973 = vadd.f32 %v748, %v972
        %v974 = vpop.f32.mrf.mxu0
        %975 = vmatprep.mubr.f32.mxu0 0.0
        %976 = vmatmul.mubr.f32.gmra.mxu0 %v584
        %v977 = vpop.f32.mrf.mxu0
        %v978 = vadd.f32 %v753, %v977
        %v979 = vpop.f32.mrf.mxu0
        %980 = vmatprep.mubr.f32.mxu0 0.0
        %981 = vmatmul.mubr.f32.gmra.mxu0 %v585
        %v982 = vpop.f32.mrf.mxu0
        %v983 = vadd.f32 %v758, %v982
        %v984 = vpop.f32.mrf.mxu0
        %985 = vmatprep.mubr.f32.mxu0 0.0
        %986 = vmatmul.mubr.f32.gmra.mxu0 %v586
        %v987 = vpop.f32.mrf.mxu0
        %v988 = vadd.f32 %v763, %v987
        %v989 = vpop.f32.mrf.mxu0
        %990 = vmatprep.mubr.f32.mxu0 0.0
        %991 = vmatmul.mubr.f32.gmra.mxu0 %v587
        %v992 = vpop.f32.mrf.mxu0
        %v993 = vadd.f32 %v768, %v992
        %v994 = vpop.f32.mrf.mxu0
        %995 = vmatprep.mubr.f32.mxu0 0.0
        %996 = vmatmul.mubr.f32.gmra.mxu0 %v588
        %v997 = vpop.f32.mrf.mxu0
        %v998 = vadd.f32 %v773, %v997
        %v999 = vpop.f32.mrf.mxu0
        %1000 = vmatprep.mubr.f32.mxu0 0.0
        %1001 = vmatmul.mubr.f32.gmra.mxu0 %v589
        %v1002 = vpop.f32.mrf.mxu0
        %v1003 = vadd.f32 %v778, %v1002
        %v1004 = vpop.f32.mrf.mxu0
        %1005 = vmatprep.mubr.f32.mxu0 0.0
        %1006 = vmatmul.mubr.f32.gmra.mxu0 %v590
        %v1007 = vpop.f32.mrf.mxu0
        %v1008 = vadd.f32 %v783, %v1007
        %v1009 = vpop.f32.mrf.mxu0
        %1010 = vmatprep.mubr.f32.mxu0 0.0
        %1011 = vmatmul.mubr.f32.gmra.mxu0 %v591
        %v1012 = vpop.f32.mrf.mxu0
        %v1013 = vadd.f32 %v788, %v1012
        %v1014 = vpop.f32.mrf.mxu0
        %1015 = vmatprep.mubr.f32.mxu0 0.0
        %1016 = vmatmul.mubr.f32.gmra.mxu0 %v592
        %v1017 = vpop.f32.mrf.mxu0
        %v1018 = vadd.f32 %v793, %v1017
        %v1019 = vpop.f32.mrf.mxu0
        %1020 = vmatprep.mubr.f32.mxu0 0.0
        %1021 = vmatmul.mubr.f32.gmra.mxu0 %v593
        %v1022 = vpop.f32.mrf.mxu0
        %v1023 = vadd.f32 %v798, %v1022
        %v1024 = vpop.f32.mrf.mxu0
        %1025 = vmatprep.mubr.f32.mxu0 0.0
        %1026 = vmatmul.mubr.f32.gmra.mxu0 %v594
        %v1027 = vpop.f32.mrf.mxu0
        %v1028 = vadd.f32 %v803, %v1027
        %v1029 = vpop.f32.mrf.mxu0
        %1030 = vmatprep.mubr.f32.mxu0 0.0
        %1031 = vmatmul.mubr.f32.gmra.mxu0 %v595
        %v1032 = vpop.f32.mrf.mxu0
        %v1033 = vadd.f32 %v808, %v1032
        %v1034 = vpop.f32.mrf.mxu0
        %1035 = vmatprep.mubr.f32.mxu0 0.0
        %1036 = vmatmul.mubr.f32.gmra.mxu0 %v596
        %v1037 = vpop.f32.mrf.mxu0
        %v1038 = vadd.f32 %v813, %v1037
        %v1039 = vpop.f32.mrf.mxu0
        %1040 = vmatprep.mubr.f32.mxu0 0.0
        %1041 = vmatmul.mubr.f32.gmra.mxu0 %v597
        %v1042 = vpop.f32.mrf.mxu0
        %v1043 = vadd.f32 %v818, %v1042
        %v1044 = vpop.f32.mrf.mxu0
        %1045 = vmatprep.mubr.f32.mxu0 0.0
        %1046 = vmatmul.mubr.f32.gmra.mxu0 %v598
        %v1047 = vpop.f32.mrf.mxu0
        %v1048 = vadd.f32 %v823, %v1047
        %v1049 = vpop.f32.mrf.mxu0
        %1050 = vmatprep.mubr.f32.mxu0 0.0
        %1051 = vmatmul.mubr.f32.gmra.mxu0 %v599
        %v1052 = vpop.f32.mrf.mxu0
        %v1053 = vadd.f32 %v828, %v1052
        %v1054 = vpop.f32.mrf.mxu0
        %1055 = vmatprep.mubr.f32.mxu0 0.0
        %1056 = vmatmul.mubr.f32.gmra.mxu0 %v600
        %v1057 = vpop.f32.mrf.mxu0
        %v1058 = vadd.f32 %v833, %v1057
        %v1059 = vpop.f32.mrf.mxu0
        %1060 = vmatprep.mubr.f32.mxu0 0.0
        %1061 = vmatmul.mubr.f32.gmra.mxu0 %v601
        %v1062 = vpop.f32.mrf.mxu0
        %v1063 = vadd.f32 %v838, %v1062
        %v1064 = vpop.f32.mrf.mxu0
        %1065 = vmatprep.mubr.f32.mxu0 0.0
        %1066 = vmatmul.mubr.f32.gmra.mxu0 %v602
        %v1067 = vpop.f32.mrf.mxu0
        %v1068 = vadd.f32 %v843, %v1067
        %v1069 = vpop.f32.mrf.mxu0
        %1070 = vmatprep.mubr.f32.mxu0 0.0
        %1071 = vmatmul.mubr.f32.gmra.mxu0 %v603
        %v1072 = vpop.f32.mrf.mxu0
        %v1073 = vadd.f32 %v848, %v1072
        %v1074 = vpop.f32.mrf.mxu0
        %1075 = vmatprep.mubr.f32.mxu0 0.0
        %1076 = vmatmul.mubr.f32.gmra.mxu0 %v604
        %v1077 = vpop.f32.mrf.mxu0
        %v1078 = vadd.f32 %v853, %v1077
        %v1079 = vpop.f32.mrf.mxu0
        %1080 = vmatprep.mubr.f32.mxu0 0.0
        %1081 = vmatmul.mubr.f32.gmra.mxu0 %v605
        %v1082 = vpop.f32.mrf.mxu0
        %v1083 = vadd.f32 %v858, %v1082
        %v1084 = vpop.f32.mrf.mxu0
        %1085 = vmatprep.mubr.f32.mxu0 0.0
        %1086 = vmatmul.mubr.f32.gmra.mxu0 %v606
        %v1087 = vpop.f32.mrf.mxu0
        %v1088 = vadd.f32 %v863, %v1087
        %v1089 = vpop.f32.mrf.mxu0
        %1090 = vmatprep.mubr.f32.mxu0 0.0
        %1091 = vmatmul.mubr.f32.gmra.mxu0 %v607
        %v1092 = vpop.f32.mrf.mxu0
        %v1093 = vadd.f32 %v868, %v1092
        %v1094 = vpop.f32.mrf.mxu0
        %1095 = vmatprep.mubr.f32.mxu0 0.0
        %1096 = vmatmul.mubr.f32.gmra.mxu0 %v608
        %v1097 = vpop.f32.mrf.mxu0
        %v1098 = vadd.f32 %v873, %v1097
        %v1099 = vpop.f32.mrf.mxu0
        %1100 = vmatprep.mubr.f32.mxu0 0.0
        %1101 = vmatmul.mubr.f32.gmra.mxu0 %v609
        %v1102 = vpop.f32.mrf.mxu0
        %v1103 = vadd.f32 %v878, %v1102
        %v1104 = vpop.f32.mrf.mxu0
        %1105 = vmatprep.mubr.f32.mxu0 0.0
        %1106 = vmatmul.mubr.f32.gmra.mxu0 %v610
        %v1107 = vpop.f32.mrf.mxu0
        %v1108 = vadd.f32 %v883, %v1107
        %v1109 = vpop.f32.mrf.mxu0
        %1110 = vmatprep.mubr.f32.mxu0 0.0
        %1111 = vmatmul.mubr.f32.gmra.mxu0 %v611
        %v1112 = vpop.f32.mrf.mxu0
        %v1113 = vadd.f32 %v888, %v1112
        %v1114 = vpop.f32.mrf.mxu0
        %1115 = vmatprep.mubr.f32.mxu0 0.0
        %1116 = vmatmul.mubr.f32.gmra.mxu0 %v612
        %v1117 = vpop.f32.mrf.mxu0
        %v1118 = vadd.f32 %v893, %v1117
        %v1119 = vpop.f32.mrf.mxu0
        %1120 = vmatprep.mubr.f32.mxu0 0.0
        %1121 = vmatmul.mubr.f32.gmra.mxu0 %v613
        %v1122 = vpop.f32.mrf.mxu0
        %v1123 = vadd.f32 %v898, %v1122
        %v1124 = vpop.f32.mrf.mxu0
        %1125 = vmatprep.mubr.f32.mxu0 0.0
        %1126 = vmatmul.mubr.f32.gmra.mxu0 %v614
        %v1127 = vpop.f32.mrf.mxu0
        %v1128 = vadd.f32 %v903, %v1127
        %v1129 = vpop.f32.mrf.mxu0
        %1130 = vdwg.mxu0
        %v1131 = vld [vmem:[#allocation2 + $0x2] sm:$0xff]
        %v1132 = vld [vmem:[#allocation2 + $0xa] sm:$0xff]
        %v1133 = vld [vmem:[#allocation2 + $0x1a] sm:$0xff]
        %v1134 = vld [vmem:[#allocation2 + $0x22] sm:$0xff]
        %v1135 = vld [vmem:[#allocation2 + $0x32] sm:$0xff]
        %v1136 = vld [vmem:[#allocation2 + $0x3a] sm:$0xff]
        %v1137 = vld [vmem:[#allocation2 + $0x4a] sm:$0xff]
        %v1138 = vld [vmem:[#allocation2 + $0x52] sm:$0xff]
        %v1139 = vld [vmem:[#allocation2 + $0x62] sm:$0xff]
        %v1140 = vld [vmem:[#allocation2 + $0x6a] sm:$0xff]
        %v1141 = vld [vmem:[#allocation2 + $0x7a] sm:$0xff]
        %v1142 = vld [vmem:[#allocation2 + $0x82] sm:$0xff]
        %v1143 = vld [vmem:[#allocation2 + $0x92] sm:$0xff]
        %v1144 = vld [vmem:[#allocation2 + $0x9a] sm:$0xff]
        %v1145 = vld [vmem:[#allocation2 + $0xaa] sm:$0xff]
        %v1146 = vld [vmem:[#allocation2 + $0xb2] sm:$0xff]
        %v1147 = vld [vmem:[#allocation2 + $0xc2] sm:$0xff]
        %v1148 = vld [vmem:[#allocation2 + $0xca] sm:$0xff]
        %v1149 = vld [vmem:[#allocation2 + $0xda] sm:$0xff]
        %v1150 = vld [vmem:[#allocation2 + $0xe2] sm:$0xff]
        %v1151 = vld [vmem:[#allocation2 + $0xf2] sm:$0xff]
        %v1152 = vld [vmem:[#allocation2 + $0xfa] sm:$0xff]
        %v1153 = vld [vmem:[#allocation2 + $0x10a] sm:$0xff]
        %v1154 = vld [vmem:[#allocation2 + $0x112] sm:$0xff]
        %v1155 = vld [vmem:[#allocation2 + $0x122] sm:$0xff]
        %v1156 = vld [vmem:[#allocation2 + $0x12a] sm:$0xff]
        %v1157 = vld [vmem:[#allocation2 + $0x13a] sm:$0xff]
        %v1158 = vld [vmem:[#allocation2 + $0x142] sm:$0xff]
        %v1159 = vld [vmem:[#allocation2 + $0x152] sm:$0xff]
        %v1160 = vld [vmem:[#allocation2 + $0x15a] sm:$0xff]
        %v1161 = vld [vmem:[#allocation2 + $0x16a] sm:$0xff]
        %v1162 = vld [vmem:[#allocation2 + $0x172] sm:$0xff]
        %s1163 = scalar_lea.vmem [#allocation3], 384
        %v1164 = vld [vmem:[%s1163] sm:$0xff]
        %v1165 = vld [vmem:[%s1163 + $0x8] sm:$0xff]
        %v1166 = vld [vmem:[%s1163 + $0x10] sm:$0xff]
        %v1167 = vld [vmem:[%s1163 + $0x18] sm:$0xff]
        %v1168 = vld [vmem:[%s1163 + $0x20] sm:$0xff]
        %v1169 = vld [vmem:[%s1163 + $0x28] sm:$0xff]
        %v1170 = vld [vmem:[%s1163 + $0x30] sm:$0xff]
        %v1171 = vld [vmem:[%s1163 + $0x38] sm:$0xff]
        %v1172 = vld [vmem:[%s1163 + $0x40] sm:$0xff]
        %v1173 = vld [vmem:[%s1163 + $0x48] sm:$0xff]
        %v1174 = vld [vmem:[%s1163 + $0x50] sm:$0xff]
        %v1175 = vld [vmem:[%s1163 + $0x58] sm:$0xff]
        %v1176 = vld [vmem:[%s1163 + $0x60] sm:$0xff]
        %v1177 = vld [vmem:[%s1163 + $0x68] sm:$0xff]
        %v1178 = vld [vmem:[%s1163 + $0x70] sm:$0xff]
        %v1179 = vld [vmem:[%s1163 + $0x78] sm:$0xff]
        %1180 = vmatprep.subr.mxu0 0.0
        %1181 = vmatpush1.msra.mxu0 %v1179
        %1182 = vmatprep.subr.mxu0 0.0
        %1183 = vmatpush1.msra.mxu0 %v1178
        %1184 = vmatprep.subr.mxu0 0.0
        %1185 = vmatpush1.msra.mxu0 %v1177
        %1186 = vmatprep.subr.mxu0 0.0
        %1187 = vmatpush1.msra.mxu0 %v1176
        %1188 = vmatprep.subr.mxu0 0.0
        %1189 = vmatpush1.msra.mxu0 %v1175
        %1190 = vmatprep.subr.mxu0 0.0
        %1191 = vmatpush1.msra.mxu0 %v1174
        %1192 = vmatprep.subr.mxu0 0.0
        %1193 = vmatpush1.msra.mxu0 %v1173
        %1194 = vmatprep.subr.mxu0 0.0
        %1195 = vmatpush1.msra.mxu0 %v1172
        %1196 = vmatprep.subr.mxu0 0.0
        %1197 = vmatpush1.msra.mxu0 %v1171
        %1198 = vmatprep.subr.mxu0 0.0
        %1199 = vmatpush1.msra.mxu0 %v1170
        %1200 = vmatprep.subr.mxu0 0.0
        %1201 = vmatpush1.msra.mxu0 %v1169
        %1202 = vmatprep.subr.mxu0 0.0
        %1203 = vmatpush1.msra.mxu0 %v1168
        %1204 = vmatprep.subr.mxu0 0.0
        %1205 = vmatpush1.msra.mxu0 %v1167
        %1206 = vmatprep.subr.mxu0 0.0
        %1207 = vmatpush1.msra.mxu0 %v1166
        %1208 = vmatprep.subr.mxu0 0.0
        %1209 = vmatpush1.msra.mxu0 %v1165
        %1210 = vmatprep.subr.mxu0 0.0
        %1211 = vmatpush1.msra.mxu0 %v1164
        %1212 = vmatprep.subr.mxu0 0.0
        %1213 = vmatpush2.msra.mxu0 0.0
        %1214 = vmatprep.subr.mxu0 0.0
        %1215 = vmatpush2.msra.mxu0 0.0
        %1216 = vmatprep.subr.mxu0 0.0
        %1217 = vmatpush2.msra.mxu0 0.0
        %1218 = vmatprep.subr.mxu0 0.0
        %1219 = vmatpush2.msra.mxu0 0.0
        %1220 = vmatprep.subr.mxu0 0.0
        %1221 = vmatpush2.msra.mxu0 0.0
        %1222 = vmatprep.subr.mxu0 0.0
        %1223 = vmatpush2.msra.mxu0 0.0
        %1224 = vmatprep.subr.mxu0 0.0
        %1225 = vmatpush2.msra.mxu0 0.0
        %1226 = vmatprep.subr.mxu0 0.0
        %1227 = vmatpush2.msra.mxu0 0.0
        %1228 = vmatprep.subr.mxu0 0.0
        %1229 = vmatpush2.msra.mxu0 0.0
        %1230 = vmatprep.subr.mxu0 0.0
        %1231 = vmatpush2.msra.mxu0 0.0
        %1232 = vmatprep.subr.mxu0 0.0
        %1233 = vmatpush2.msra.mxu0 0.0
        %1234 = vmatprep.subr.mxu0 0.0
        %1235 = vmatpush2.msra.mxu0 0.0
        %1236 = vmatprep.subr.mxu0 0.0
        %1237 = vmatpush2.msra.mxu0 0.0
        %1238 = vmatprep.subr.mxu0 0.0
        %1239 = vmatpush2.msra.mxu0 0.0
        %1240 = vmatprep.subr.mxu0 0.0
        %1241 = vmatpush2.msra.mxu0 0.0
        %1242 = vmatprep.subr.mxu0 0.0
        %1243 = vmatpush2.msra.mxu0 0.0
        %1244 = vmatprep.mubr.f32.mxu0 0.0
        %1245 = vmatmul.mubr.f32.gmra.mxu0 %v1131
        %v1246 = vpop.f32.mrf.mxu0
        %v1247 = vadd.f32 0.0, %v1246
        %v1248 = vpop.f32.mrf.mxu0
        %1249 = vmatprep.mubr.f32.mxu0 0.0
        %1250 = vmatmul.mubr.f32.gmra.mxu0 %v1132
        %v1251 = vpop.f32.mrf.mxu0
        %v1252 = vadd.f32 0.0, %v1251
        %v1253 = vpop.f32.mrf.mxu0
        %1254 = vmatprep.mubr.f32.mxu0 0.0
        %1255 = vmatmul.mubr.f32.gmra.mxu0 %v1133
        %v1256 = vpop.f32.mrf.mxu0
        %v1257 = vadd.f32 0.0, %v1256
        %v1258 = vpop.f32.mrf.mxu0
        %1259 = vmatprep.mubr.f32.mxu0 0.0
        %1260 = vmatmul.mubr.f32.gmra.mxu0 %v1134
        %v1261 = vpop.f32.mrf.mxu0
        %v1262 = vadd.f32 0.0, %v1261
        %v1263 = vpop.f32.mrf.mxu0
        %1264 = vmatprep.mubr.f32.mxu0 0.0
        %1265 = vmatmul.mubr.f32.gmra.mxu0 %v1135
        %v1266 = vpop.f32.mrf.mxu0
        %v1267 = vadd.f32 0.0, %v1266
        %v1268 = vpop.f32.mrf.mxu0
        %1269 = vmatprep.mubr.f32.mxu0 0.0
        %1270 = vmatmul.mubr.f32.gmra.mxu0 %v1136
        %v1271 = vpop.f32.mrf.mxu0
        %v1272 = vadd.f32 0.0, %v1271
        %v1273 = vpop.f32.mrf.mxu0
        %1274 = vmatprep.mubr.f32.mxu0 0.0
        %1275 = vmatmul.mubr.f32.gmra.mxu0 %v1137
        %v1276 = vpop.f32.mrf.mxu0
        %v1277 = vadd.f32 0.0, %v1276
        %v1278 = vpop.f32.mrf.mxu0
        %1279 = vmatprep.mubr.f32.mxu0 0.0
        %1280 = vmatmul.mubr.f32.gmra.mxu0 %v1138
        %v1281 = vpop.f32.mrf.mxu0
        %v1282 = vadd.f32 0.0, %v1281
        %v1283 = vpop.f32.mrf.mxu0
        %1284 = vmatprep.mubr.f32.mxu0 0.0
        %1285 = vmatmul.mubr.f32.gmra.mxu0 %v1139
        %v1286 = vpop.f32.mrf.mxu0
        %v1287 = vadd.f32 0.0, %v1286
        %v1288 = vpop.f32.mrf.mxu0
        %1289 = vmatprep.mubr.f32.mxu0 0.0
        %1290 = vmatmul.mubr.f32.gmra.mxu0 %v1140
        %v1291 = vpop.f32.mrf.mxu0
        %v1292 = vadd.f32 0.0, %v1291
        %v1293 = vpop.f32.mrf.mxu0
        %1294 = vmatprep.mubr.f32.mxu0 0.0
        %1295 = vmatmul.mubr.f32.gmra.mxu0 %v1141
        %v1296 = vpop.f32.mrf.mxu0
        %v1297 = vadd.f32 0.0, %v1296
        %v1298 = vpop.f32.mrf.mxu0
        %1299 = vmatprep.mubr.f32.mxu0 0.0
        %1300 = vmatmul.mubr.f32.gmra.mxu0 %v1142
        %v1301 = vpop.f32.mrf.mxu0
        %v1302 = vadd.f32 0.0, %v1301
        %v1303 = vpop.f32.mrf.mxu0
        %1304 = vmatprep.mubr.f32.mxu0 0.0
        %1305 = vmatmul.mubr.f32.gmra.mxu0 %v1143
        %v1306 = vpop.f32.mrf.mxu0
        %v1307 = vadd.f32 0.0, %v1306
        %v1308 = vpop.f32.mrf.mxu0
        %1309 = vmatprep.mubr.f32.mxu0 0.0
        %1310 = vmatmul.mubr.f32.gmra.mxu0 %v1144
        %v1311 = vpop.f32.mrf.mxu0
        %v1312 = vadd.f32 0.0, %v1311
        %v1313 = vpop.f32.mrf.mxu0
        %1314 = vmatprep.mubr.f32.mxu0 0.0
        %1315 = vmatmul.mubr.f32.gmra.mxu0 %v1145
        %v1316 = vpop.f32.mrf.mxu0
        %v1317 = vadd.f32 0.0, %v1316
        %v1318 = vpop.f32.mrf.mxu0
        %1319 = vmatprep.mubr.f32.mxu0 0.0
        %1320 = vmatmul.mubr.f32.gmra.mxu0 %v1146
        %v1321 = vpop.f32.mrf.mxu0
        %v1322 = vadd.f32 0.0, %v1321
        %v1323 = vpop.f32.mrf.mxu0
        %1324 = vmatprep.mubr.f32.mxu0 0.0
        %1325 = vmatmul.mubr.f32.gmra.mxu0 %v1147
        %v1326 = vpop.f32.mrf.mxu0
        %v1327 = vadd.f32 0.0, %v1326
        %v1328 = vpop.f32.mrf.mxu0
        %1329 = vmatprep.mubr.f32.mxu0 0.0
        %1330 = vmatmul.mubr.f32.gmra.mxu0 %v1148
        %v1331 = vpop.f32.mrf.mxu0
        %v1332 = vadd.f32 0.0, %v1331
        %v1333 = vpop.f32.mrf.mxu0
        %1334 = vmatprep.mubr.f32.mxu0 0.0
        %1335 = vmatmul.mubr.f32.gmra.mxu0 %v1149
        %v1336 = vpop.f32.mrf.mxu0
        %v1337 = vadd.f32 0.0, %v1336
        %v1338 = vpop.f32.mrf.mxu0
        %1339 = vmatprep.mubr.f32.mxu0 0.0
        %1340 = vmatmul.mubr.f32.gmra.mxu0 %v1150
        %v1341 = vpop.f32.mrf.mxu0
        %v1342 = vadd.f32 0.0, %v1341
        %v1343 = vpop.f32.mrf.mxu0
        %1344 = vmatprep.mubr.f32.mxu0 0.0
        %1345 = vmatmul.mubr.f32.gmra.mxu0 %v1151
        %v1346 = vpop.f32.mrf.mxu0
        %v1347 = vadd.f32 0.0, %v1346
        %v1348 = vpop.f32.mrf.mxu0
        %1349 = vmatprep.mubr.f32.mxu0 0.0
        %1350 = vmatmul.mubr.f32.gmra.mxu0 %v1152
        %v1351 = vpop.f32.mrf.mxu0
        %v1352 = vadd.f32 0.0, %v1351
        %v1353 = vpop.f32.mrf.mxu0
        %1354 = vmatprep.mubr.f32.mxu0 0.0
        %1355 = vmatmul.mubr.f32.gmra.mxu0 %v1153
        %v1356 = vpop.f32.mrf.mxu0
        %v1357 = vadd.f32 0.0, %v1356
        %v1358 = vpop.f32.mrf.mxu0
        %1359 = vmatprep.mubr.f32.mxu0 0.0
        %1360 = vmatmul.mubr.f32.gmra.mxu0 %v1154
        %v1361 = vpop.f32.mrf.mxu0
        %v1362 = vadd.f32 0.0, %v1361
        %v1363 = vpop.f32.mrf.mxu0
        %1364 = vmatprep.mubr.f32.mxu0 0.0
        %1365 = vmatmul.mubr.f32.gmra.mxu0 %v1155
        %v1366 = vpop.f32.mrf.mxu0
        %v1367 = vadd.f32 0.0, %v1366
        %v1368 = vpop.f32.mrf.mxu0
        %1369 = vmatprep.mubr.f32.mxu0 0.0
        %1370 = vmatmul.mubr.f32.gmra.mxu0 %v1156
        %v1371 = vpop.f32.mrf.mxu0
        %v1372 = vadd.f32 0.0, %v1371
        %v1373 = vpop.f32.mrf.mxu0
        %1374 = vmatprep.mubr.f32.mxu0 0.0
        %1375 = vmatmul.mubr.f32.gmra.mxu0 %v1157
        %v1376 = vpop.f32.mrf.mxu0
        %v1377 = vadd.f32 0.0, %v1376
        %v1378 = vpop.f32.mrf.mxu0
        %1379 = vmatprep.mubr.f32.mxu0 0.0
        %1380 = vmatmul.mubr.f32.gmra.mxu0 %v1158
        %v1381 = vpop.f32.mrf.mxu0
        %v1382 = vadd.f32 0.0, %v1381
        %v1383 = vpop.f32.mrf.mxu0
        %1384 = vmatprep.mubr.f32.mxu0 0.0
        %1385 = vmatmul.mubr.f32.gmra.mxu0 %v1159
        %v1386 = vpop.f32.mrf.mxu0
        %v1387 = vadd.f32 0.0, %v1386
        %v1388 = vpop.f32.mrf.mxu0
        %1389 = vmatprep.mubr.f32.mxu0 0.0
        %1390 = vmatmul.mubr.f32.gmra.mxu0 %v1160
        %v1391 = vpop.f32.mrf.mxu0
        %v1392 = vadd.f32 0.0, %v1391
        %v1393 = vpop.f32.mrf.mxu0
        %1394 = vmatprep.mubr.f32.mxu0 0.0
        %1395 = vmatmul.mubr.f32.gmra.mxu0 %v1161
        %v1396 = vpop.f32.mrf.mxu0
        %v1397 = vadd.f32 0.0, %v1396
        %v1398 = vpop.f32.mrf.mxu0
        %1399 = vmatprep.mubr.f32.mxu0 0.0
        %1400 = vmatmul.mubr.f32.gmra.mxu0 %v1162
        %v1401 = vpop.f32.mrf.mxu0
        %v1402 = vadd.f32 0.0, %v1401
        %v1403 = vpop.f32.mrf.mxu0
        %1404 = vdwg.mxu0
        %v1405 = vadd.f32 %v973, %v1247
        %v1406 = vadd.f32 %v978, %v1252
        %v1407 = vadd.f32 %v983, %v1257
        %v1408 = vadd.f32 %v988, %v1262
        %v1409 = vadd.f32 %v993, %v1267
        %v1410 = vadd.f32 %v998, %v1272
        %v1411 = vadd.f32 %v1003, %v1277
        %v1412 = vadd.f32 %v1008, %v1282
        %v1413 = vadd.f32 %v1013, %v1287
        %v1414 = vadd.f32 %v1018, %v1292
        %v1415 = vadd.f32 %v1023, %v1297
        %v1416 = vadd.f32 %v1028, %v1302
        %v1417 = vadd.f32 %v1033, %v1307
        %v1418 = vadd.f32 %v1038, %v1312
        %v1419 = vadd.f32 %v1043, %v1317
        %v1420 = vadd.f32 %v1048, %v1322
        %v1421 = vadd.f32 %v1053, %v1327
        %v1422 = vadd.f32 %v1058, %v1332
        %v1423 = vadd.f32 %v1063, %v1337
        %v1424 = vadd.f32 %v1068, %v1342
        %v1425 = vadd.f32 %v1073, %v1347
        %v1426 = vadd.f32 %v1078, %v1352
        %v1427 = vadd.f32 %v1083, %v1357
        %v1428 = vadd.f32 %v1088, %v1362
        %v1429 = vadd.f32 %v1093, %v1367
        %v1430 = vadd.f32 %v1098, %v1372
        %v1431 = vadd.f32 %v1103, %v1377
        %v1432 = vadd.f32 %v1108, %v1382
        %v1433 = vadd.f32 %v1113, %v1387
        %v1434 = vadd.f32 %v1118, %v1392
        %v1435 = vadd.f32 %v1123, %v1397
        %v1436 = vadd.f32 %v1128, %v1402
        %v1437 = vld [vmem:[%s550] sm:$0xff]
        %v1438 = vld [vmem:[%s550 + $0x8] sm:$0xff]
        %v1439 = vld [vmem:[%s550 + $0x18] sm:$0xff]
        %v1440 = vld [vmem:[%s550 + $0x20] sm:$0xff]
        %v1441 = vld [vmem:[%s550 + $0x30] sm:$0xff]
        %v1442 = vld [vmem:[%s550 + $0x38] sm:$0xff]
        %v1443 = vld [vmem:[%s550 + $0x48] sm:$0xff]
        %v1444 = vld [vmem:[%s550 + $0x50] sm:$0xff]
        %v1445 = vld [vmem:[%s550 + $0x60] sm:$0xff]
        %v1446 = vld [vmem:[%s550 + $0x68] sm:$0xff]
        %v1447 = vld [vmem:[%s550 + $0x78] sm:$0xff]
        %v1448 = vld [vmem:[%s550 + $0x80] sm:$0xff]
        %v1449 = vld [vmem:[%s550 + $0x90] sm:$0xff]
        %v1450 = vld [vmem:[%s550 + $0x98] sm:$0xff]
        %v1451 = vld [vmem:[%s550 + $0xa8] sm:$0xff]
        %v1452 = vld [vmem:[%s550 + $0xb0] sm:$0xff]
        %v1453 = vld [vmem:[%s550 + $0xc0] sm:$0xff]
        %v1454 = vld [vmem:[%s550 + $0xc8] sm:$0xff]
        %v1455 = vld [vmem:[%s550 + $0xd8] sm:$0xff]
        %v1456 = vld [vmem:[%s550 + $0xe0] sm:$0xff]
        %v1457 = vld [vmem:[%s550 + $0xf0] sm:$0xff]
        %v1458 = vld [vmem:[%s550 + $0xf8] sm:$0xff]
        %v1459 = vld [vmem:[%s550 + $0x108] sm:$0xff]
        %v1460 = vld [vmem:[%s550 + $0x110] sm:$0xff]
        %v1461 = vld [vmem:[%s550 + $0x120] sm:$0xff]
        %v1462 = vld [vmem:[%s550 + $0x128] sm:$0xff]
        %v1463 = vld [vmem:[%s550 + $0x138] sm:$0xff]
        %v1464 = vld [vmem:[%s550 + $0x140] sm:$0xff]
        %v1465 = vld [vmem:[%s550 + $0x150] sm:$0xff]
        %v1466 = vld [vmem:[%s550 + $0x158] sm:$0xff]
        %v1467 = vld [vmem:[%s550 + $0x168] sm:$0xff]
        %v1468 = vld [vmem:[%s550 + $0x170] sm:$0xff]
        %s1469 = scalar_lea.vmem [#allocation3], 512
        %v1470 = vld [vmem:[%s1469] sm:$0xff]
        %v1471 = vld [vmem:[%s1469 + $0x8] sm:$0xff]
        %v1472 = vld [vmem:[%s1469 + $0x10] sm:$0xff]
        %v1473 = vld [vmem:[%s1469 + $0x18] sm:$0xff]
        %v1474 = vld [vmem:[%s1469 + $0x20] sm:$0xff]
        %v1475 = vld [vmem:[%s1469 + $0x28] sm:$0xff]
        %v1476 = vld [vmem:[%s1469 + $0x30] sm:$0xff]
        %v1477 = vld [vmem:[%s1469 + $0x38] sm:$0xff]
        %v1478 = vld [vmem:[%s1469 + $0x40] sm:$0xff]
        %v1479 = vld [vmem:[%s1469 + $0x48] sm:$0xff]
        %v1480 = vld [vmem:[%s1469 + $0x50] sm:$0xff]
        %v1481 = vld [vmem:[%s1469 + $0x58] sm:$0xff]
        %v1482 = vld [vmem:[%s1469 + $0x60] sm:$0xff]
        %v1483 = vld [vmem:[%s1469 + $0x68] sm:$0xff]
        %v1484 = vld [vmem:[%s1469 + $0x70] sm:$0xff]
        %v1485 = vld [vmem:[%s1469 + $0x78] sm:$0xff]
        %1486 = vmatprep.subr.mxu0 0.0
        %1487 = vmatpush1.msra.mxu0 %v1485
        %1488 = vmatprep.subr.mxu0 0.0
        %1489 = vmatpush1.msra.mxu0 %v1484
        %1490 = vmatprep.subr.mxu0 0.0
        %1491 = vmatpush1.msra.mxu0 %v1483
        %1492 = vmatprep.subr.mxu0 0.0
        %1493 = vmatpush1.msra.mxu0 %v1482
        %1494 = vmatprep.subr.mxu0 0.0
        %1495 = vmatpush1.msra.mxu0 %v1481
        %1496 = vmatprep.subr.mxu0 0.0
        %1497 = vmatpush1.msra.mxu0 %v1480
        %1498 = vmatprep.subr.mxu0 0.0
        %1499 = vmatpush1.msra.mxu0 %v1479
        %1500 = vmatprep.subr.mxu0 0.0
        %1501 = vmatpush1.msra.mxu0 %v1478
        %1502 = vmatprep.subr.mxu0 0.0
        %1503 = vmatpush1.msra.mxu0 %v1477
        %1504 = vmatprep.subr.mxu0 0.0
        %1505 = vmatpush1.msra.mxu0 %v1476
        %1506 = vmatprep.subr.mxu0 0.0
        %1507 = vmatpush1.msra.mxu0 %v1475
        %1508 = vmatprep.subr.mxu0 0.0
        %1509 = vmatpush1.msra.mxu0 %v1474
        %1510 = vmatprep.subr.mxu0 0.0
        %1511 = vmatpush1.msra.mxu0 %v1473
        %1512 = vmatprep.subr.mxu0 0.0
        %1513 = vmatpush1.msra.mxu0 %v1472
        %1514 = vmatprep.subr.mxu0 0.0
        %1515 = vmatpush1.msra.mxu0 %v1471
        %1516 = vmatprep.subr.mxu0 0.0
        %1517 = vmatpush1.msra.mxu0 %v1470
        %1518 = vmatprep.subr.mxu0 0.0
        %1519 = vmatpush2.msra.mxu0 0.0
        %1520 = vmatprep.subr.mxu0 0.0
        %1521 = vmatpush2.msra.mxu0 0.0
        %1522 = vmatprep.subr.mxu0 0.0
        %1523 = vmatpush2.msra.mxu0 0.0
        %1524 = vmatprep.subr.mxu0 0.0
        %1525 = vmatpush2.msra.mxu0 0.0
        %1526 = vmatprep.subr.mxu0 0.0
        %1527 = vmatpush2.msra.mxu0 0.0
        %1528 = vmatprep.subr.mxu0 0.0
        %1529 = vmatpush2.msra.mxu0 0.0
        %1530 = vmatprep.subr.mxu0 0.0
        %1531 = vmatpush2.msra.mxu0 0.0
        %1532 = vmatprep.subr.mxu0 0.0
        %1533 = vmatpush2.msra.mxu0 0.0
        %1534 = vmatprep.subr.mxu0 0.0
        %1535 = vmatpush2.msra.mxu0 0.0
        %1536 = vmatprep.subr.mxu0 0.0
        %1537 = vmatpush2.msra.mxu0 0.0
        %1538 = vmatprep.subr.mxu0 0.0
        %1539 = vmatpush2.msra.mxu0 0.0
        %1540 = vmatprep.subr.mxu0 0.0
        %1541 = vmatpush2.msra.mxu0 0.0
        %1542 = vmatprep.subr.mxu0 0.0
        %1543 = vmatpush2.msra.mxu0 0.0
        %1544 = vmatprep.subr.mxu0 0.0
        %1545 = vmatpush2.msra.mxu0 0.0
        %1546 = vmatprep.subr.mxu0 0.0
        %1547 = vmatpush2.msra.mxu0 0.0
        %1548 = vmatprep.subr.mxu0 0.0
        %1549 = vmatpush2.msra.mxu0 0.0
        %1550 = vmatprep.mubr.f32.mxu0 0.0
        %1551 = vmatmul.mubr.f32.gmra.mxu0 %v1437
        %v1552 = vpop.f32.mrf.mxu0
        %v1553 = vadd.f32 0.0, %v1552
        %v1554 = vpop.f32.mrf.mxu0
        %1555 = vmatprep.mubr.f32.mxu0 0.0
        %1556 = vmatmul.mubr.f32.gmra.mxu0 %v1438
        %v1557 = vpop.f32.mrf.mxu0
        %v1558 = vadd.f32 0.0, %v1557
        %v1559 = vpop.f32.mrf.mxu0
        %1560 = vmatprep.mubr.f32.mxu0 0.0
        %1561 = vmatmul.mubr.f32.gmra.mxu0 %v1439
        %v1562 = vpop.f32.mrf.mxu0
        %v1563 = vadd.f32 0.0, %v1562
        %v1564 = vpop.f32.mrf.mxu0
        %1565 = vmatprep.mubr.f32.mxu0 0.0
        %1566 = vmatmul.mubr.f32.gmra.mxu0 %v1440
        %v1567 = vpop.f32.mrf.mxu0
        %v1568 = vadd.f32 0.0, %v1567
        %v1569 = vpop.f32.mrf.mxu0
        %1570 = vmatprep.mubr.f32.mxu0 0.0
        %1571 = vmatmul.mubr.f32.gmra.mxu0 %v1441
        %v1572 = vpop.f32.mrf.mxu0
        %v1573 = vadd.f32 0.0, %v1572
        %v1574 = vpop.f32.mrf.mxu0
        %1575 = vmatprep.mubr.f32.mxu0 0.0
        %1576 = vmatmul.mubr.f32.gmra.mxu0 %v1442
        %v1577 = vpop.f32.mrf.mxu0
        %v1578 = vadd.f32 0.0, %v1577
        %v1579 = vpop.f32.mrf.mxu0
        %1580 = vmatprep.mubr.f32.mxu0 0.0
        %1581 = vmatmul.mubr.f32.gmra.mxu0 %v1443
        %v1582 = vpop.f32.mrf.mxu0
        %v1583 = vadd.f32 0.0, %v1582
        %v1584 = vpop.f32.mrf.mxu0
        %1585 = vmatprep.mubr.f32.mxu0 0.0
        %1586 = vmatmul.mubr.f32.gmra.mxu0 %v1444
        %v1587 = vpop.f32.mrf.mxu0
        %v1588 = vadd.f32 0.0, %v1587
        %v1589 = vpop.f32.mrf.mxu0
        %1590 = vmatprep.mubr.f32.mxu0 0.0
        %1591 = vmatmul.mubr.f32.gmra.mxu0 %v1445
        %v1592 = vpop.f32.mrf.mxu0
        %v1593 = vadd.f32 0.0, %v1592
        %v1594 = vpop.f32.mrf.mxu0
        %1595 = vmatprep.mubr.f32.mxu0 0.0
        %1596 = vmatmul.mubr.f32.gmra.mxu0 %v1446
        %v1597 = vpop.f32.mrf.mxu0
        %v1598 = vadd.f32 0.0, %v1597
        %v1599 = vpop.f32.mrf.mxu0
        %1600 = vmatprep.mubr.f32.mxu0 0.0
        %1601 = vmatmul.mubr.f32.gmra.mxu0 %v1447
        %v1602 = vpop.f32.mrf.mxu0
        %v1603 = vadd.f32 0.0, %v1602
        %v1604 = vpop.f32.mrf.mxu0
        %1605 = vmatprep.mubr.f32.mxu0 0.0
        %1606 = vmatmul.mubr.f32.gmra.mxu0 %v1448
        %v1607 = vpop.f32.mrf.mxu0
        %v1608 = vadd.f32 0.0, %v1607
        %v1609 = vpop.f32.mrf.mxu0
        %1610 = vmatprep.mubr.f32.mxu0 0.0
        %1611 = vmatmul.mubr.f32.gmra.mxu0 %v1449
        %v1612 = vpop.f32.mrf.mxu0
        %v1613 = vadd.f32 0.0, %v1612
        %v1614 = vpop.f32.mrf.mxu0
        %1615 = vmatprep.mubr.f32.mxu0 0.0
        %1616 = vmatmul.mubr.f32.gmra.mxu0 %v1450
        %v1617 = vpop.f32.mrf.mxu0
        %v1618 = vadd.f32 0.0, %v1617
        %v1619 = vpop.f32.mrf.mxu0
        %1620 = vmatprep.mubr.f32.mxu0 0.0
        %1621 = vmatmul.mubr.f32.gmra.mxu0 %v1451
        %v1622 = vpop.f32.mrf.mxu0
        %v1623 = vadd.f32 0.0, %v1622
        %v1624 = vpop.f32.mrf.mxu0
        %1625 = vmatprep.mubr.f32.mxu0 0.0
        %1626 = vmatmul.mubr.f32.gmra.mxu0 %v1452
        %v1627 = vpop.f32.mrf.mxu0
        %v1628 = vadd.f32 0.0, %v1627
        %v1629 = vpop.f32.mrf.mxu0
        %1630 = vmatprep.mubr.f32.mxu0 0.0
        %1631 = vmatmul.mubr.f32.gmra.mxu0 %v1453
        %v1632 = vpop.f32.mrf.mxu0
        %v1633 = vadd.f32 0.0, %v1632
        %v1634 = vpop.f32.mrf.mxu0
        %1635 = vmatprep.mubr.f32.mxu0 0.0
        %1636 = vmatmul.mubr.f32.gmra.mxu0 %v1454
        %v1637 = vpop.f32.mrf.mxu0
        %v1638 = vadd.f32 0.0, %v1637
        %v1639 = vpop.f32.mrf.mxu0
        %1640 = vmatprep.mubr.f32.mxu0 0.0
        %1641 = vmatmul.mubr.f32.gmra.mxu0 %v1455
        %v1642 = vpop.f32.mrf.mxu0
        %v1643 = vadd.f32 0.0, %v1642
        %v1644 = vpop.f32.mrf.mxu0
        %1645 = vmatprep.mubr.f32.mxu0 0.0
        %1646 = vmatmul.mubr.f32.gmra.mxu0 %v1456
        %v1647 = vpop.f32.mrf.mxu0
        %v1648 = vadd.f32 0.0, %v1647
        %v1649 = vpop.f32.mrf.mxu0
        %1650 = vmatprep.mubr.f32.mxu0 0.0
        %1651 = vmatmul.mubr.f32.gmra.mxu0 %v1457
        %v1652 = vpop.f32.mrf.mxu0
        %v1653 = vadd.f32 0.0, %v1652
        %v1654 = vpop.f32.mrf.mxu0
        %1655 = vmatprep.mubr.f32.mxu0 0.0
        %1656 = vmatmul.mubr.f32.gmra.mxu0 %v1458
        %v1657 = vpop.f32.mrf.mxu0
        %v1658 = vadd.f32 0.0, %v1657
        %v1659 = vpop.f32.mrf.mxu0
        %1660 = vmatprep.mubr.f32.mxu0 0.0
        %1661 = vmatmul.mubr.f32.gmra.mxu0 %v1459
        %v1662 = vpop.f32.mrf.mxu0
        %v1663 = vadd.f32 0.0, %v1662
        %v1664 = vpop.f32.mrf.mxu0
        %1665 = vmatprep.mubr.f32.mxu0 0.0
        %1666 = vmatmul.mubr.f32.gmra.mxu0 %v1460
        %v1667 = vpop.f32.mrf.mxu0
        %v1668 = vadd.f32 0.0, %v1667
        %v1669 = vpop.f32.mrf.mxu0
        %1670 = vmatprep.mubr.f32.mxu0 0.0
        %1671 = vmatmul.mubr.f32.gmra.mxu0 %v1461
        %v1672 = vpop.f32.mrf.mxu0
        %v1673 = vadd.f32 0.0, %v1672
        %v1674 = vpop.f32.mrf.mxu0
        %1675 = vmatprep.mubr.f32.mxu0 0.0
        %1676 = vmatmul.mubr.f32.gmra.mxu0 %v1462
        %v1677 = vpop.f32.mrf.mxu0
        %v1678 = vadd.f32 0.0, %v1677
        %v1679 = vpop.f32.mrf.mxu0
        %1680 = vmatprep.mubr.f32.mxu0 0.0
        %1681 = vmatmul.mubr.f32.gmra.mxu0 %v1463
        %v1682 = vpop.f32.mrf.mxu0
        %v1683 = vadd.f32 0.0, %v1682
        %v1684 = vpop.f32.mrf.mxu0
        %1685 = vmatprep.mubr.f32.mxu0 0.0
        %1686 = vmatmul.mubr.f32.gmra.mxu0 %v1464
        %v1687 = vpop.f32.mrf.mxu0
        %v1688 = vadd.f32 0.0, %v1687
        %v1689 = vpop.f32.mrf.mxu0
        %1690 = vmatprep.mubr.f32.mxu0 0.0
        %1691 = vmatmul.mubr.f32.gmra.mxu0 %v1465
        %v1692 = vpop.f32.mrf.mxu0
        %v1693 = vadd.f32 0.0, %v1692
        %v1694 = vpop.f32.mrf.mxu0
        %1695 = vmatprep.mubr.f32.mxu0 0.0
        %1696 = vmatmul.mubr.f32.gmra.mxu0 %v1466
        %v1697 = vpop.f32.mrf.mxu0
        %v1698 = vadd.f32 0.0, %v1697
        %v1699 = vpop.f32.mrf.mxu0
        %1700 = vmatprep.mubr.f32.mxu0 0.0
        %1701 = vmatmul.mubr.f32.gmra.mxu0 %v1467
        %v1702 = vpop.f32.mrf.mxu0
        %v1703 = vadd.f32 0.0, %v1702
        %v1704 = vpop.f32.mrf.mxu0
        %1705 = vmatprep.mubr.f32.mxu0 0.0
        %1706 = vmatmul.mubr.f32.gmra.mxu0 %v1468
        %v1707 = vpop.f32.mrf.mxu0
        %v1708 = vadd.f32 0.0, %v1707
        %v1709 = vpop.f32.mrf.mxu0
        %1710 = vdwg.mxu0
        %v1711 = vadd.f32 %v1405, %v1553
        %v1712 = vadd.f32 %v1406, %v1558
        %v1713 = vadd.f32 %v1407, %v1563
        %v1714 = vadd.f32 %v1408, %v1568
        %v1715 = vadd.f32 %v1409, %v1573
        %v1716 = vadd.f32 %v1410, %v1578
        %v1717 = vadd.f32 %v1411, %v1583
        %v1718 = vadd.f32 %v1412, %v1588
        %v1719 = vadd.f32 %v1413, %v1593
        %v1720 = vadd.f32 %v1414, %v1598
        %v1721 = vadd.f32 %v1415, %v1603
        %v1722 = vadd.f32 %v1416, %v1608
        %v1723 = vadd.f32 %v1417, %v1613
        %v1724 = vadd.f32 %v1418, %v1618
        %v1725 = vadd.f32 %v1419, %v1623
        %v1726 = vadd.f32 %v1420, %v1628
        %v1727 = vadd.f32 %v1421, %v1633
        %v1728 = vadd.f32 %v1422, %v1638
        %v1729 = vadd.f32 %v1423, %v1643
        %v1730 = vadd.f32 %v1424, %v1648
        %v1731 = vadd.f32 %v1425, %v1653
        %v1732 = vadd.f32 %v1426, %v1658
        %v1733 = vadd.f32 %v1427, %v1663
        %v1734 = vadd.f32 %v1428, %v1668
        %v1735 = vadd.f32 %v1429, %v1673
        %v1736 = vadd.f32 %v1430, %v1678
        %v1737 = vadd.f32 %v1431, %v1683
        %v1738 = vadd.f32 %v1432, %v1688
        %v1739 = vadd.f32 %v1433, %v1693
        %v1740 = vadd.f32 %v1434, %v1698
        %v1741 = vadd.f32 %v1435, %v1703
        %v1742 = vadd.f32 %v1436, %v1708
        %v1743 = vld [vmem:[%s550 + $0x1] sm:$0xff]
        %v1744 = vld [vmem:[%s550 + $0x9] sm:$0xff]
        %v1745 = vld [vmem:[%s550 + $0x19] sm:$0xff]
        %v1746 = vld [vmem:[%s550 + $0x21] sm:$0xff]
        %v1747 = vld [vmem:[%s550 + $0x31] sm:$0xff]
        %v1748 = vld [vmem:[%s550 + $0x39] sm:$0xff]
        %v1749 = vld [vmem:[%s550 + $0x49] sm:$0xff]
        %v1750 = vld [vmem:[%s550 + $0x51] sm:$0xff]
        %v1751 = vld [vmem:[%s550 + $0x61] sm:$0xff]
        %v1752 = vld [vmem:[%s550 + $0x69] sm:$0xff]
        %v1753 = vld [vmem:[%s550 + $0x79] sm:$0xff]
        %v1754 = vld [vmem:[%s550 + $0x81] sm:$0xff]
        %v1755 = vld [vmem:[%s550 + $0x91] sm:$0xff]
        %v1756 = vld [vmem:[%s550 + $0x99] sm:$0xff]
        %v1757 = vld [vmem:[%s550 + $0xa9] sm:$0xff]
        %v1758 = vld [vmem:[%s550 + $0xb1] sm:$0xff]
        %v1759 = vld [vmem:[%s550 + $0xc1] sm:$0xff]
        %v1760 = vld [vmem:[%s550 + $0xc9] sm:$0xff]
        %v1761 = vld [vmem:[%s550 + $0xd9] sm:$0xff]
        %v1762 = vld [vmem:[%s550 + $0xe1] sm:$0xff]
        %v1763 = vld [vmem:[%s550 + $0xf1] sm:$0xff]
        %v1764 = vld [vmem:[%s550 + $0xf9] sm:$0xff]
        %v1765 = vld [vmem:[%s550 + $0x109] sm:$0xff]
        %v1766 = vld [vmem:[%s550 + $0x111] sm:$0xff]
        %v1767 = vld [vmem:[%s550 + $0x121] sm:$0xff]
        %v1768 = vld [vmem:[%s550 + $0x129] sm:$0xff]
        %v1769 = vld [vmem:[%s550 + $0x139] sm:$0xff]
        %v1770 = vld [vmem:[%s550 + $0x141] sm:$0xff]
        %v1771 = vld [vmem:[%s550 + $0x151] sm:$0xff]
        %v1772 = vld [vmem:[%s550 + $0x159] sm:$0xff]
        %v1773 = vld [vmem:[%s550 + $0x169] sm:$0xff]
        %v1774 = vld [vmem:[%s550 + $0x171] sm:$0xff]
        %s1775 = scalar_lea.vmem [#allocation3], 640
        %v1776 = vld [vmem:[%s1775] sm:$0xff]
        %v1777 = vld [vmem:[%s1775 + $0x8] sm:$0xff]
        %v1778 = vld [vmem:[%s1775 + $0x10] sm:$0xff]
        %v1779 = vld [vmem:[%s1775 + $0x18] sm:$0xff]
        %v1780 = vld [vmem:[%s1775 + $0x20] sm:$0xff]
        %v1781 = vld [vmem:[%s1775 + $0x28] sm:$0xff]
        %v1782 = vld [vmem:[%s1775 + $0x30] sm:$0xff]
        %v1783 = vld [vmem:[%s1775 + $0x38] sm:$0xff]
        %v1784 = vld [vmem:[%s1775 + $0x40] sm:$0xff]
        %v1785 = vld [vmem:[%s1775 + $0x48] sm:$0xff]
        %v1786 = vld [vmem:[%s1775 + $0x50] sm:$0xff]
        %v1787 = vld [vmem:[%s1775 + $0x58] sm:$0xff]
        %v1788 = vld [vmem:[%s1775 + $0x60] sm:$0xff]
        %v1789 = vld [vmem:[%s1775 + $0x68] sm:$0xff]
        %v1790 = vld [vmem:[%s1775 + $0x70] sm:$0xff]
        %v1791 = vld [vmem:[%s1775 + $0x78] sm:$0xff]
        %1792 = vmatprep.subr.mxu0 0.0
        %1793 = vmatpush1.msra.mxu0 %v1791
        %1794 = vmatprep.subr.mxu0 0.0
        %1795 = vmatpush1.msra.mxu0 %v1790
        %1796 = vmatprep.subr.mxu0 0.0
        %1797 = vmatpush1.msra.mxu0 %v1789
        %1798 = vmatprep.subr.mxu0 0.0
        %1799 = vmatpush1.msra.mxu0 %v1788
        %1800 = vmatprep.subr.mxu0 0.0
        %1801 = vmatpush1.msra.mxu0 %v1787
        %1802 = vmatprep.subr.mxu0 0.0
        %1803 = vmatpush1.msra.mxu0 %v1786
        %1804 = vmatprep.subr.mxu0 0.0
        %1805 = vmatpush1.msra.mxu0 %v1785
        %1806 = vmatprep.subr.mxu0 0.0
        %1807 = vmatpush1.msra.mxu0 %v1784
        %1808 = vmatprep.subr.mxu0 0.0
        %1809 = vmatpush1.msra.mxu0 %v1783
        %1810 = vmatprep.subr.mxu0 0.0
        %1811 = vmatpush1.msra.mxu0 %v1782
        %1812 = vmatprep.subr.mxu0 0.0
        %1813 = vmatpush1.msra.mxu0 %v1781
        %1814 = vmatprep.subr.mxu0 0.0
        %1815 = vmatpush1.msra.mxu0 %v1780
        %1816 = vmatprep.subr.mxu0 0.0
        %1817 = vmatpush1.msra.mxu0 %v1779
        %1818 = vmatprep.subr.mxu0 0.0
        %1819 = vmatpush1.msra.mxu0 %v1778
        %1820 = vmatprep.subr.mxu0 0.0
        %1821 = vmatpush1.msra.mxu0 %v1777
        %1822 = vmatprep.subr.mxu0 0.0
        %1823 = vmatpush1.msra.mxu0 %v1776
        %1824 = vmatprep.subr.mxu0 0.0
        %1825 = vmatpush2.msra.mxu0 0.0
        %1826 = vmatprep.subr.mxu0 0.0
        %1827 = vmatpush2.msra.mxu0 0.0
        %1828 = vmatprep.subr.mxu0 0.0
        %1829 = vmatpush2.msra.mxu0 0.0
        %1830 = vmatprep.subr.mxu0 0.0
        %1831 = vmatpush2.msra.mxu0 0.0
        %1832 = vmatprep.subr.mxu0 0.0
        %1833 = vmatpush2.msra.mxu0 0.0
        %1834 = vmatprep.subr.mxu0 0.0
        %1835 = vmatpush2.msra.mxu0 0.0
        %1836 = vmatprep.subr.mxu0 0.0
        %1837 = vmatpush2.msra.mxu0 0.0
        %1838 = vmatprep.subr.mxu0 0.0
        %1839 = vmatpush2.msra.mxu0 0.0
        %1840 = vmatprep.subr.mxu0 0.0
        %1841 = vmatpush2.msra.mxu0 0.0
        %1842 = vmatprep.subr.mxu0 0.0
        %1843 = vmatpush2.msra.mxu0 0.0
        %1844 = vmatprep.subr.mxu0 0.0
        %1845 = vmatpush2.msra.mxu0 0.0
        %1846 = vmatprep.subr.mxu0 0.0
        %1847 = vmatpush2.msra.mxu0 0.0
        %1848 = vmatprep.subr.mxu0 0.0
        %1849 = vmatpush2.msra.mxu0 0.0
        %1850 = vmatprep.subr.mxu0 0.0
        %1851 = vmatpush2.msra.mxu0 0.0
        %1852 = vmatprep.subr.mxu0 0.0
        %1853 = vmatpush2.msra.mxu0 0.0
        %1854 = vmatprep.subr.mxu0 0.0
        %1855 = vmatpush2.msra.mxu0 0.0
        %1856 = vmatprep.mubr.f32.mxu0 0.0
        %1857 = vmatmul.mubr.f32.gmra.mxu0 %v1743
        %v1858 = vpop.f32.mrf.mxu0
        %v1859 = vadd.f32 0.0, %v1858
        %v1860 = vpop.f32.mrf.mxu0
        %1861 = vmatprep.mubr.f32.mxu0 0.0
        %1862 = vmatmul.mubr.f32.gmra.mxu0 %v1744
        %v1863 = vpop.f32.mrf.mxu0
        %v1864 = vadd.f32 0.0, %v1863
        %v1865 = vpop.f32.mrf.mxu0
        %1866 = vmatprep.mubr.f32.mxu0 0.0
        %1867 = vmatmul.mubr.f32.gmra.mxu0 %v1745
        %v1868 = vpop.f32.mrf.mxu0
        %v1869 = vadd.f32 0.0, %v1868
        %v1870 = vpop.f32.mrf.mxu0
        %1871 = vmatprep.mubr.f32.mxu0 0.0
        %1872 = vmatmul.mubr.f32.gmra.mxu0 %v1746
        %v1873 = vpop.f32.mrf.mxu0
        %v1874 = vadd.f32 0.0, %v1873
        %v1875 = vpop.f32.mrf.mxu0
        %1876 = vmatprep.mubr.f32.mxu0 0.0
        %1877 = vmatmul.mubr.f32.gmra.mxu0 %v1747
        %v1878 = vpop.f32.mrf.mxu0
        %v1879 = vadd.f32 0.0, %v1878
        %v1880 = vpop.f32.mrf.mxu0
        %1881 = vmatprep.mubr.f32.mxu0 0.0
        %1882 = vmatmul.mubr.f32.gmra.mxu0 %v1748
        %v1883 = vpop.f32.mrf.mxu0
        %v1884 = vadd.f32 0.0, %v1883
        %v1885 = vpop.f32.mrf.mxu0
        %1886 = vmatprep.mubr.f32.mxu0 0.0
        %1887 = vmatmul.mubr.f32.gmra.mxu0 %v1749
        %v1888 = vpop.f32.mrf.mxu0
        %v1889 = vadd.f32 0.0, %v1888
        %v1890 = vpop.f32.mrf.mxu0
        %1891 = vmatprep.mubr.f32.mxu0 0.0
        %1892 = vmatmul.mubr.f32.gmra.mxu0 %v1750
        %v1893 = vpop.f32.mrf.mxu0
        %v1894 = vadd.f32 0.0, %v1893
        %v1895 = vpop.f32.mrf.mxu0
        %1896 = vmatprep.mubr.f32.mxu0 0.0
        %1897 = vmatmul.mubr.f32.gmra.mxu0 %v1751
        %v1898 = vpop.f32.mrf.mxu0
        %v1899 = vadd.f32 0.0, %v1898
        %v1900 = vpop.f32.mrf.mxu0
        %1901 = vmatprep.mubr.f32.mxu0 0.0
        %1902 = vmatmul.mubr.f32.gmra.mxu0 %v1752
        %v1903 = vpop.f32.mrf.mxu0
        %v1904 = vadd.f32 0.0, %v1903
        %v1905 = vpop.f32.mrf.mxu0
        %1906 = vmatprep.mubr.f32.mxu0 0.0
        %1907 = vmatmul.mubr.f32.gmra.mxu0 %v1753
        %v1908 = vpop.f32.mrf.mxu0
        %v1909 = vadd.f32 0.0, %v1908
        %v1910 = vpop.f32.mrf.mxu0
        %1911 = vmatprep.mubr.f32.mxu0 0.0
        %1912 = vmatmul.mubr.f32.gmra.mxu0 %v1754
        %v1913 = vpop.f32.mrf.mxu0
        %v1914 = vadd.f32 0.0, %v1913
        %v1915 = vpop.f32.mrf.mxu0
        %1916 = vmatprep.mubr.f32.mxu0 0.0
        %1917 = vmatmul.mubr.f32.gmra.mxu0 %v1755
        %v1918 = vpop.f32.mrf.mxu0
        %v1919 = vadd.f32 0.0, %v1918
        %v1920 = vpop.f32.mrf.mxu0
        %1921 = vmatprep.mubr.f32.mxu0 0.0
        %1922 = vmatmul.mubr.f32.gmra.mxu0 %v1756
        %v1923 = vpop.f32.mrf.mxu0
        %v1924 = vadd.f32 0.0, %v1923
        %v1925 = vpop.f32.mrf.mxu0
        %1926 = vmatprep.mubr.f32.mxu0 0.0
        %1927 = vmatmul.mubr.f32.gmra.mxu0 %v1757
        %v1928 = vpop.f32.mrf.mxu0
        %v1929 = vadd.f32 0.0, %v1928
        %v1930 = vpop.f32.mrf.mxu0
        %1931 = vmatprep.mubr.f32.mxu0 0.0
        %1932 = vmatmul.mubr.f32.gmra.mxu0 %v1758
        %v1933 = vpop.f32.mrf.mxu0
        %v1934 = vadd.f32 0.0, %v1933
        %v1935 = vpop.f32.mrf.mxu0
        %1936 = vmatprep.mubr.f32.mxu0 0.0
        %1937 = vmatmul.mubr.f32.gmra.mxu0 %v1759
        %v1938 = vpop.f32.mrf.mxu0
        %v1939 = vadd.f32 0.0, %v1938
        %v1940 = vpop.f32.mrf.mxu0
        %1941 = vmatprep.mubr.f32.mxu0 0.0
        %1942 = vmatmul.mubr.f32.gmra.mxu0 %v1760
        %v1943 = vpop.f32.mrf.mxu0
        %v1944 = vadd.f32 0.0, %v1943
        %v1945 = vpop.f32.mrf.mxu0
        %1946 = vmatprep.mubr.f32.mxu0 0.0
        %1947 = vmatmul.mubr.f32.gmra.mxu0 %v1761
        %v1948 = vpop.f32.mrf.mxu0
        %v1949 = vadd.f32 0.0, %v1948
        %v1950 = vpop.f32.mrf.mxu0
        %1951 = vmatprep.mubr.f32.mxu0 0.0
        %1952 = vmatmul.mubr.f32.gmra.mxu0 %v1762
        %v1953 = vpop.f32.mrf.mxu0
        %v1954 = vadd.f32 0.0, %v1953
        %v1955 = vpop.f32.mrf.mxu0
        %1956 = vmatprep.mubr.f32.mxu0 0.0
        %1957 = vmatmul.mubr.f32.gmra.mxu0 %v1763
        %v1958 = vpop.f32.mrf.mxu0
        %v1959 = vadd.f32 0.0, %v1958
        %v1960 = vpop.f32.mrf.mxu0
        %1961 = vmatprep.mubr.f32.mxu0 0.0
        %1962 = vmatmul.mubr.f32.gmra.mxu0 %v1764
        %v1963 = vpop.f32.mrf.mxu0
        %v1964 = vadd.f32 0.0, %v1963
        %v1965 = vpop.f32.mrf.mxu0
        %1966 = vmatprep.mubr.f32.mxu0 0.0
        %1967 = vmatmul.mubr.f32.gmra.mxu0 %v1765
        %v1968 = vpop.f32.mrf.mxu0
        %v1969 = vadd.f32 0.0, %v1968
        %v1970 = vpop.f32.mrf.mxu0
        %1971 = vmatprep.mubr.f32.mxu0 0.0
        %1972 = vmatmul.mubr.f32.gmra.mxu0 %v1766
        %v1973 = vpop.f32.mrf.mxu0
        %v1974 = vadd.f32 0.0, %v1973
        %v1975 = vpop.f32.mrf.mxu0
        %1976 = vmatprep.mubr.f32.mxu0 0.0
        %1977 = vmatmul.mubr.f32.gmra.mxu0 %v1767
        %v1978 = vpop.f32.mrf.mxu0
        %v1979 = vadd.f32 0.0, %v1978
        %v1980 = vpop.f32.mrf.mxu0
        %1981 = vmatprep.mubr.f32.mxu0 0.0
        %1982 = vmatmul.mubr.f32.gmra.mxu0 %v1768
        %v1983 = vpop.f32.mrf.mxu0
        %v1984 = vadd.f32 0.0, %v1983
        %v1985 = vpop.f32.mrf.mxu0
        %1986 = vmatprep.mubr.f32.mxu0 0.0
        %1987 = vmatmul.mubr.f32.gmra.mxu0 %v1769
        %v1988 = vpop.f32.mrf.mxu0
        %v1989 = vadd.f32 0.0, %v1988
        %v1990 = vpop.f32.mrf.mxu0
        %1991 = vmatprep.mubr.f32.mxu0 0.0
        %1992 = vmatmul.mubr.f32.gmra.mxu0 %v1770
        %v1993 = vpop.f32.mrf.mxu0
        %v1994 = vadd.f32 0.0, %v1993
        %v1995 = vpop.f32.mrf.mxu0
        %1996 = vmatprep.mubr.f32.mxu0 0.0
        %1997 = vmatmul.mubr.f32.gmra.mxu0 %v1771
        %v1998 = vpop.f32.mrf.mxu0
        %v1999 = vadd.f32 0.0, %v1998
        %v2000 = vpop.f32.mrf.mxu0
        %2001 = vmatprep.mubr.f32.mxu0 0.0
        %2002 = vmatmul.mubr.f32.gmra.mxu0 %v1772
        %v2003 = vpop.f32.mrf.mxu0
        %v2004 = vadd.f32 0.0, %v2003
        %v2005 = vpop.f32.mrf.mxu0
        %2006 = vmatprep.mubr.f32.mxu0 0.0
        %2007 = vmatmul.mubr.f32.gmra.mxu0 %v1773
        %v2008 = vpop.f32.mrf.mxu0
        %v2009 = vadd.f32 0.0, %v2008
        %v2010 = vpop.f32.mrf.mxu0
        %2011 = vmatprep.mubr.f32.mxu0 0.0
        %2012 = vmatmul.mubr.f32.gmra.mxu0 %v1774
        %v2013 = vpop.f32.mrf.mxu0
        %v2014 = vadd.f32 0.0, %v2013
        %v2015 = vpop.f32.mrf.mxu0
        %2016 = vdwg.mxu0
        %v2017 = vadd.f32 %v1711, %v1859
        %v2018 = vadd.f32 %v1712, %v1864
        %v2019 = vadd.f32 %v1713, %v1869
        %v2020 = vadd.f32 %v1714, %v1874
        %v2021 = vadd.f32 %v1715, %v1879
        %v2022 = vadd.f32 %v1716, %v1884
        %v2023 = vadd.f32 %v1717, %v1889
        %v2024 = vadd.f32 %v1718, %v1894
        %v2025 = vadd.f32 %v1719, %v1899
        %v2026 = vadd.f32 %v1720, %v1904
        %v2027 = vadd.f32 %v1721, %v1909
        %v2028 = vadd.f32 %v1722, %v1914
        %v2029 = vadd.f32 %v1723, %v1919
        %v2030 = vadd.f32 %v1724, %v1924
        %v2031 = vadd.f32 %v1725, %v1929
        %v2032 = vadd.f32 %v1726, %v1934
        %v2033 = vadd.f32 %v1727, %v1939
        %v2034 = vadd.f32 %v1728, %v1944
        %v2035 = vadd.f32 %v1729, %v1949
        %v2036 = vadd.f32 %v1730, %v1954
        %v2037 = vadd.f32 %v1731, %v1959
        %v2038 = vadd.f32 %v1732, %v1964
        %v2039 = vadd.f32 %v1733, %v1969
        %v2040 = vadd.f32 %v1734, %v1974
        %v2041 = vadd.f32 %v1735, %v1979
        %v2042 = vadd.f32 %v1736, %v1984
        %v2043 = vadd.f32 %v1737, %v1989
        %v2044 = vadd.f32 %v1738, %v1994
        %v2045 = vadd.f32 %v1739, %v1999
        %v2046 = vadd.f32 %v1740, %v2004
        %v2047 = vadd.f32 %v1741, %v2009
        %v2048 = vadd.f32 %v1742, %v2014
        %v2049 = vld [vmem:[%s550 + $0x2] sm:$0xff]
        %v2050 = vld [vmem:[%s550 + $0xa] sm:$0xff]
        %v2051 = vld [vmem:[%s550 + $0x1a] sm:$0xff]
        %v2052 = vld [vmem:[%s550 + $0x22] sm:$0xff]
        %v2053 = vld [vmem:[%s550 + $0x32] sm:$0xff]
        %v2054 = vld [vmem:[%s550 + $0x3a] sm:$0xff]
        %v2055 = vld [vmem:[%s550 + $0x4a] sm:$0xff]
        %v2056 = vld [vmem:[%s550 + $0x52] sm:$0xff]
        %v2057 = vld [vmem:[%s550 + $0x62] sm:$0xff]
        %v2058 = vld [vmem:[%s550 + $0x6a] sm:$0xff]
        %v2059 = vld [vmem:[%s550 + $0x7a] sm:$0xff]
        %v2060 = vld [vmem:[%s550 + $0x82] sm:$0xff]
        %v2061 = vld [vmem:[%s550 + $0x92] sm:$0xff]
        %v2062 = vld [vmem:[%s550 + $0x9a] sm:$0xff]
        %v2063 = vld [vmem:[%s550 + $0xaa] sm:$0xff]
        %v2064 = vld [vmem:[%s550 + $0xb2] sm:$0xff]
        %v2065 = vld [vmem:[%s550 + $0xc2] sm:$0xff]
        %v2066 = vld [vmem:[%s550 + $0xca] sm:$0xff]
        %v2067 = vld [vmem:[%s550 + $0xda] sm:$0xff]
        %v2068 = vld [vmem:[%s550 + $0xe2] sm:$0xff]
        %v2069 = vld [vmem:[%s550 + $0xf2] sm:$0xff]
        %v2070 = vld [vmem:[%s550 + $0xfa] sm:$0xff]
        %v2071 = vld [vmem:[%s550 + $0x10a] sm:$0xff]
        %v2072 = vld [vmem:[%s550 + $0x112] sm:$0xff]
        %v2073 = vld [vmem:[%s550 + $0x122] sm:$0xff]
        %v2074 = vld [vmem:[%s550 + $0x12a] sm:$0xff]
        %v2075 = vld [vmem:[%s550 + $0x13a] sm:$0xff]
        %v2076 = vld [vmem:[%s550 + $0x142] sm:$0xff]
        %v2077 = vld [vmem:[%s550 + $0x152] sm:$0xff]
        %v2078 = vld [vmem:[%s550 + $0x15a] sm:$0xff]
        %v2079 = vld [vmem:[%s550 + $0x16a] sm:$0xff]
        %v2080 = vld [vmem:[%s550 + $0x172] sm:$0xff]
        %s2081 = scalar_lea.vmem [#allocation3], 768
        %v2082 = vld [vmem:[%s2081] sm:$0xff]
        %v2083 = vld [vmem:[%s2081 + $0x8] sm:$0xff]
        %v2084 = vld [vmem:[%s2081 + $0x10] sm:$0xff]
        %v2085 = vld [vmem:[%s2081 + $0x18] sm:$0xff]
        %v2086 = vld [vmem:[%s2081 + $0x20] sm:$0xff]
        %v2087 = vld [vmem:[%s2081 + $0x28] sm:$0xff]
        %v2088 = vld [vmem:[%s2081 + $0x30] sm:$0xff]
        %v2089 = vld [vmem:[%s2081 + $0x38] sm:$0xff]
        %v2090 = vld [vmem:[%s2081 + $0x40] sm:$0xff]
        %v2091 = vld [vmem:[%s2081 + $0x48] sm:$0xff]
        %v2092 = vld [vmem:[%s2081 + $0x50] sm:$0xff]
        %v2093 = vld [vmem:[%s2081 + $0x58] sm:$0xff]
        %v2094 = vld [vmem:[%s2081 + $0x60] sm:$0xff]
        %v2095 = vld [vmem:[%s2081 + $0x68] sm:$0xff]
        %v2096 = vld [vmem:[%s2081 + $0x70] sm:$0xff]
        %v2097 = vld [vmem:[%s2081 + $0x78] sm:$0xff]
        %2098 = vmatprep.subr.mxu0 0.0
        %2099 = vmatpush1.msra.mxu0 %v2097
        %2100 = vmatprep.subr.mxu0 0.0
        %2101 = vmatpush1.msra.mxu0 %v2096
        %2102 = vmatprep.subr.mxu0 0.0
        %2103 = vmatpush1.msra.mxu0 %v2095
        %2104 = vmatprep.subr.mxu0 0.0
        %2105 = vmatpush1.msra.mxu0 %v2094
        %2106 = vmatprep.subr.mxu0 0.0
        %2107 = vmatpush1.msra.mxu0 %v2093
        %2108 = vmatprep.subr.mxu0 0.0
        %2109 = vmatpush1.msra.mxu0 %v2092
        %2110 = vmatprep.subr.mxu0 0.0
        %2111 = vmatpush1.msra.mxu0 %v2091
        %2112 = vmatprep.subr.mxu0 0.0
        %2113 = vmatpush1.msra.mxu0 %v2090
        %2114 = vmatprep.subr.mxu0 0.0
        %2115 = vmatpush1.msra.mxu0 %v2089
        %2116 = vmatprep.subr.mxu0 0.0
        %2117 = vmatpush1.msra.mxu0 %v2088
        %2118 = vmatprep.subr.mxu0 0.0
        %2119 = vmatpush1.msra.mxu0 %v2087
        %2120 = vmatprep.subr.mxu0 0.0
        %2121 = vmatpush1.msra.mxu0 %v2086
        %2122 = vmatprep.subr.mxu0 0.0
        %2123 = vmatpush1.msra.mxu0 %v2085
        %2124 = vmatprep.subr.mxu0 0.0
        %2125 = vmatpush1.msra.mxu0 %v2084
        %2126 = vmatprep.subr.mxu0 0.0
        %2127 = vmatpush1.msra.mxu0 %v2083
        %2128 = vmatprep.subr.mxu0 0.0
        %2129 = vmatpush1.msra.mxu0 %v2082
        %2130 = vmatprep.subr.mxu0 0.0
        %2131 = vmatpush2.msra.mxu0 0.0
        %2132 = vmatprep.subr.mxu0 0.0
        %2133 = vmatpush2.msra.mxu0 0.0
        %2134 = vmatprep.subr.mxu0 0.0
        %2135 = vmatpush2.msra.mxu0 0.0
        %2136 = vmatprep.subr.mxu0 0.0
        %2137 = vmatpush2.msra.mxu0 0.0
        %2138 = vmatprep.subr.mxu0 0.0
        %2139 = vmatpush2.msra.mxu0 0.0
        %2140 = vmatprep.subr.mxu0 0.0
        %2141 = vmatpush2.msra.mxu0 0.0
        %2142 = vmatprep.subr.mxu0 0.0
        %2143 = vmatpush2.msra.mxu0 0.0
        %2144 = vmatprep.subr.mxu0 0.0
        %2145 = vmatpush2.msra.mxu0 0.0
        %2146 = vmatprep.subr.mxu0 0.0
        %2147 = vmatpush2.msra.mxu0 0.0
        %2148 = vmatprep.subr.mxu0 0.0
        %2149 = vmatpush2.msra.mxu0 0.0
        %2150 = vmatprep.subr.mxu0 0.0
        %2151 = vmatpush2.msra.mxu0 0.0
        %2152 = vmatprep.subr.mxu0 0.0
        %2153 = vmatpush2.msra.mxu0 0.0
        %2154 = vmatprep.subr.mxu0 0.0
        %2155 = vmatpush2.msra.mxu0 0.0
        %2156 = vmatprep.subr.mxu0 0.0
        %2157 = vmatpush2.msra.mxu0 0.0
        %2158 = vmatprep.subr.mxu0 0.0
        %2159 = vmatpush2.msra.mxu0 0.0
        %2160 = vmatprep.subr.mxu0 0.0
        %2161 = vmatpush2.msra.mxu0 0.0
        %2162 = vmatprep.mubr.f32.mxu0 0.0
        %2163 = vmatmul.mubr.f32.gmra.mxu0 %v2049
        %v2164 = vpop.f32.mrf.mxu0
        %v2165 = vadd.f32 0.0, %v2164
        %v2166 = vpop.f32.mrf.mxu0
        %2167 = vmatprep.mubr.f32.mxu0 0.0
        %2168 = vmatmul.mubr.f32.gmra.mxu0 %v2050
        %v2169 = vpop.f32.mrf.mxu0
        %v2170 = vadd.f32 0.0, %v2169
        %v2171 = vpop.f32.mrf.mxu0
        %2172 = vmatprep.mubr.f32.mxu0 0.0
        %2173 = vmatmul.mubr.f32.gmra.mxu0 %v2051
        %v2174 = vpop.f32.mrf.mxu0
        %v2175 = vadd.f32 0.0, %v2174
        %v2176 = vpop.f32.mrf.mxu0
        %2177 = vmatprep.mubr.f32.mxu0 0.0
        %2178 = vmatmul.mubr.f32.gmra.mxu0 %v2052
        %v2179 = vpop.f32.mrf.mxu0
        %v2180 = vadd.f32 0.0, %v2179
        %v2181 = vpop.f32.mrf.mxu0
        %2182 = vmatprep.mubr.f32.mxu0 0.0
        %2183 = vmatmul.mubr.f32.gmra.mxu0 %v2053
        %v2184 = vpop.f32.mrf.mxu0
        %v2185 = vadd.f32 0.0, %v2184
        %v2186 = vpop.f32.mrf.mxu0
        %2187 = vmatprep.mubr.f32.mxu0 0.0
        %2188 = vmatmul.mubr.f32.gmra.mxu0 %v2054
        %v2189 = vpop.f32.mrf.mxu0
        %v2190 = vadd.f32 0.0, %v2189
        %v2191 = vpop.f32.mrf.mxu0
        %2192 = vmatprep.mubr.f32.mxu0 0.0
        %2193 = vmatmul.mubr.f32.gmra.mxu0 %v2055
        %v2194 = vpop.f32.mrf.mxu0
        %v2195 = vadd.f32 0.0, %v2194
        %v2196 = vpop.f32.mrf.mxu0
        %2197 = vmatprep.mubr.f32.mxu0 0.0
        %2198 = vmatmul.mubr.f32.gmra.mxu0 %v2056
        %v2199 = vpop.f32.mrf.mxu0
        %v2200 = vadd.f32 0.0, %v2199
        %v2201 = vpop.f32.mrf.mxu0
        %2202 = vmatprep.mubr.f32.mxu0 0.0
        %2203 = vmatmul.mubr.f32.gmra.mxu0 %v2057
        %v2204 = vpop.f32.mrf.mxu0
        %v2205 = vadd.f32 0.0, %v2204
        %v2206 = vpop.f32.mrf.mxu0
        %2207 = vmatprep.mubr.f32.mxu0 0.0
        %2208 = vmatmul.mubr.f32.gmra.mxu0 %v2058
        %v2209 = vpop.f32.mrf.mxu0
        %v2210 = vadd.f32 0.0, %v2209
        %v2211 = vpop.f32.mrf.mxu0
        %2212 = vmatprep.mubr.f32.mxu0 0.0
        %2213 = vmatmul.mubr.f32.gmra.mxu0 %v2059
        %v2214 = vpop.f32.mrf.mxu0
        %v2215 = vadd.f32 0.0, %v2214
        %v2216 = vpop.f32.mrf.mxu0
        %2217 = vmatprep.mubr.f32.mxu0 0.0
        %2218 = vmatmul.mubr.f32.gmra.mxu0 %v2060
        %v2219 = vpop.f32.mrf.mxu0
        %v2220 = vadd.f32 0.0, %v2219
        %v2221 = vpop.f32.mrf.mxu0
        %2222 = vmatprep.mubr.f32.mxu0 0.0
        %2223 = vmatmul.mubr.f32.gmra.mxu0 %v2061
        %v2224 = vpop.f32.mrf.mxu0
        %v2225 = vadd.f32 0.0, %v2224
        %v2226 = vpop.f32.mrf.mxu0
        %2227 = vmatprep.mubr.f32.mxu0 0.0
        %2228 = vmatmul.mubr.f32.gmra.mxu0 %v2062
        %v2229 = vpop.f32.mrf.mxu0
        %v2230 = vadd.f32 0.0, %v2229
        %v2231 = vpop.f32.mrf.mxu0
        %2232 = vmatprep.mubr.f32.mxu0 0.0
        %2233 = vmatmul.mubr.f32.gmra.mxu0 %v2063
        %v2234 = vpop.f32.mrf.mxu0
        %v2235 = vadd.f32 0.0, %v2234
        %v2236 = vpop.f32.mrf.mxu0
        %2237 = vmatprep.mubr.f32.mxu0 0.0
        %2238 = vmatmul.mubr.f32.gmra.mxu0 %v2064
        %v2239 = vpop.f32.mrf.mxu0
        %v2240 = vadd.f32 0.0, %v2239
        %v2241 = vpop.f32.mrf.mxu0
        %2242 = vmatprep.mubr.f32.mxu0 0.0
        %2243 = vmatmul.mubr.f32.gmra.mxu0 %v2065
        %v2244 = vpop.f32.mrf.mxu0
        %v2245 = vadd.f32 0.0, %v2244
        %v2246 = vpop.f32.mrf.mxu0
        %2247 = vmatprep.mubr.f32.mxu0 0.0
        %2248 = vmatmul.mubr.f32.gmra.mxu0 %v2066
        %v2249 = vpop.f32.mrf.mxu0
        %v2250 = vadd.f32 0.0, %v2249
        %v2251 = vpop.f32.mrf.mxu0
        %2252 = vmatprep.mubr.f32.mxu0 0.0
        %2253 = vmatmul.mubr.f32.gmra.mxu0 %v2067
        %v2254 = vpop.f32.mrf.mxu0
        %v2255 = vadd.f32 0.0, %v2254
        %v2256 = vpop.f32.mrf.mxu0
        %2257 = vmatprep.mubr.f32.mxu0 0.0
        %2258 = vmatmul.mubr.f32.gmra.mxu0 %v2068
        %v2259 = vpop.f32.mrf.mxu0
        %v2260 = vadd.f32 0.0, %v2259
        %v2261 = vpop.f32.mrf.mxu0
        %2262 = vmatprep.mubr.f32.mxu0 0.0
        %2263 = vmatmul.mubr.f32.gmra.mxu0 %v2069
        %v2264 = vpop.f32.mrf.mxu0
        %v2265 = vadd.f32 0.0, %v2264
        %v2266 = vpop.f32.mrf.mxu0
        %2267 = vmatprep.mubr.f32.mxu0 0.0
        %2268 = vmatmul.mubr.f32.gmra.mxu0 %v2070
        %v2269 = vpop.f32.mrf.mxu0
        %v2270 = vadd.f32 0.0, %v2269
        %v2271 = vpop.f32.mrf.mxu0
        %2272 = vmatprep.mubr.f32.mxu0 0.0
        %2273 = vmatmul.mubr.f32.gmra.mxu0 %v2071
        %v2274 = vpop.f32.mrf.mxu0
        %v2275 = vadd.f32 0.0, %v2274
        %v2276 = vpop.f32.mrf.mxu0
        %2277 = vmatprep.mubr.f32.mxu0 0.0
        %2278 = vmatmul.mubr.f32.gmra.mxu0 %v2072
        %v2279 = vpop.f32.mrf.mxu0
        %v2280 = vadd.f32 0.0, %v2279
        %v2281 = vpop.f32.mrf.mxu0
        %2282 = vmatprep.mubr.f32.mxu0 0.0
        %2283 = vmatmul.mubr.f32.gmra.mxu0 %v2073
        %v2284 = vpop.f32.mrf.mxu0
        %v2285 = vadd.f32 0.0, %v2284
        %v2286 = vpop.f32.mrf.mxu0
        %2287 = vmatprep.mubr.f32.mxu0 0.0
        %2288 = vmatmul.mubr.f32.gmra.mxu0 %v2074
        %v2289 = vpop.f32.mrf.mxu0
        %v2290 = vadd.f32 0.0, %v2289
        %v2291 = vpop.f32.mrf.mxu0
        %2292 = vmatprep.mubr.f32.mxu0 0.0
        %2293 = vmatmul.mubr.f32.gmra.mxu0 %v2075
        %v2294 = vpop.f32.mrf.mxu0
        %v2295 = vadd.f32 0.0, %v2294
        %v2296 = vpop.f32.mrf.mxu0
        %2297 = vmatprep.mubr.f32.mxu0 0.0
        %2298 = vmatmul.mubr.f32.gmra.mxu0 %v2076
        %v2299 = vpop.f32.mrf.mxu0
        %v2300 = vadd.f32 0.0, %v2299
        %v2301 = vpop.f32.mrf.mxu0
        %2302 = vmatprep.mubr.f32.mxu0 0.0
        %2303 = vmatmul.mubr.f32.gmra.mxu0 %v2077
        %v2304 = vpop.f32.mrf.mxu0
        %v2305 = vadd.f32 0.0, %v2304
        %v2306 = vpop.f32.mrf.mxu0
        %2307 = vmatprep.mubr.f32.mxu0 0.0
        %2308 = vmatmul.mubr.f32.gmra.mxu0 %v2078
        %v2309 = vpop.f32.mrf.mxu0
        %v2310 = vadd.f32 0.0, %v2309
        %v2311 = vpop.f32.mrf.mxu0
        %2312 = vmatprep.mubr.f32.mxu0 0.0
        %2313 = vmatmul.mubr.f32.gmra.mxu0 %v2079
        %v2314 = vpop.f32.mrf.mxu0
        %v2315 = vadd.f32 0.0, %v2314
        %v2316 = vpop.f32.mrf.mxu0
        %2317 = vmatprep.mubr.f32.mxu0 0.0
        %2318 = vmatmul.mubr.f32.gmra.mxu0 %v2080
        %v2319 = vpop.f32.mrf.mxu0
        %v2320 = vadd.f32 0.0, %v2319
        %v2321 = vpop.f32.mrf.mxu0
        %2322 = vdwg.mxu0
        %v2323 = vadd.f32 %v2017, %v2165
        %v2324 = vadd.f32 %v2018, %v2170
        %v2325 = vadd.f32 %v2019, %v2175
        %v2326 = vadd.f32 %v2020, %v2180
        %v2327 = vadd.f32 %v2021, %v2185
        %v2328 = vadd.f32 %v2022, %v2190
        %v2329 = vadd.f32 %v2023, %v2195
        %v2330 = vadd.f32 %v2024, %v2200
        %v2331 = vadd.f32 %v2025, %v2205
        %v2332 = vadd.f32 %v2026, %v2210
        %v2333 = vadd.f32 %v2027, %v2215
        %v2334 = vadd.f32 %v2028, %v2220
        %v2335 = vadd.f32 %v2029, %v2225
        %v2336 = vadd.f32 %v2030, %v2230
        %v2337 = vadd.f32 %v2031, %v2235
        %v2338 = vadd.f32 %v2032, %v2240
        %v2339 = vadd.f32 %v2033, %v2245
        %v2340 = vadd.f32 %v2034, %v2250
        %v2341 = vadd.f32 %v2035, %v2255
        %v2342 = vadd.f32 %v2036, %v2260
        %v2343 = vadd.f32 %v2037, %v2265
        %v2344 = vadd.f32 %v2038, %v2270
        %v2345 = vadd.f32 %v2039, %v2275
        %v2346 = vadd.f32 %v2040, %v2280
        %v2347 = vadd.f32 %v2041, %v2285
        %v2348 = vadd.f32 %v2042, %v2290
        %v2349 = vadd.f32 %v2043, %v2295
        %v2350 = vadd.f32 %v2044, %v2300
        %v2351 = vadd.f32 %v2045, %v2305
        %v2352 = vadd.f32 %v2046, %v2310
        %v2353 = vadd.f32 %v2047, %v2315
        %v2354 = vadd.f32 %v2048, %v2320
        %s2355 = scalar_lea.vmem [#allocation2], 48
        %v2356 = vld [vmem:[%s2355] sm:$0xff]
        %v2357 = vld [vmem:[%s2355 + $0x8] sm:$0xff]
        %v2358 = vld [vmem:[%s2355 + $0x18] sm:$0xff]
        %v2359 = vld [vmem:[%s2355 + $0x20] sm:$0xff]
        %v2360 = vld [vmem:[%s2355 + $0x30] sm:$0xff]
        %v2361 = vld [vmem:[%s2355 + $0x38] sm:$0xff]
        %v2362 = vld [vmem:[%s2355 + $0x48] sm:$0xff]
        %v2363 = vld [vmem:[%s2355 + $0x50] sm:$0xff]
        %v2364 = vld [vmem:[%s2355 + $0x60] sm:$0xff]
        %v2365 = vld [vmem:[%s2355 + $0x68] sm:$0xff]
        %v2366 = vld [vmem:[%s2355 + $0x78] sm:$0xff]
        %v2367 = vld [vmem:[%s2355 + $0x80] sm:$0xff]
        %v2368 = vld [vmem:[%s2355 + $0x90] sm:$0xff]
        %v2369 = vld [vmem:[%s2355 + $0x98] sm:$0xff]
        %v2370 = vld [vmem:[%s2355 + $0xa8] sm:$0xff]
        %v2371 = vld [vmem:[%s2355 + $0xb0] sm:$0xff]
        %v2372 = vld [vmem:[%s2355 + $0xc0] sm:$0xff]
        %v2373 = vld [vmem:[%s2355 + $0xc8] sm:$0xff]
        %v2374 = vld [vmem:[%s2355 + $0xd8] sm:$0xff]
        %v2375 = vld [vmem:[%s2355 + $0xe0] sm:$0xff]
        %v2376 = vld [vmem:[%s2355 + $0xf0] sm:$0xff]
        %v2377 = vld [vmem:[%s2355 + $0xf8] sm:$0xff]
        %v2378 = vld [vmem:[%s2355 + $0x108] sm:$0xff]
        %v2379 = vld [vmem:[%s2355 + $0x110] sm:$0xff]
        %v2380 = vld [vmem:[%s2355 + $0x120] sm:$0xff]
        %v2381 = vld [vmem:[%s2355 + $0x128] sm:$0xff]
        %v2382 = vld [vmem:[%s2355 + $0x138] sm:$0xff]
        %v2383 = vld [vmem:[%s2355 + $0x140] sm:$0xff]
        %v2384 = vld [vmem:[%s2355 + $0x150] sm:$0xff]
        %v2385 = vld [vmem:[%s2355 + $0x158] sm:$0xff]
        %v2386 = vld [vmem:[%s2355 + $0x168] sm:$0xff]
        %v2387 = vld [vmem:[%s2355 + $0x170] sm:$0xff]
        %s2388 = scalar_lea.vmem [#allocation3], 896
        %v2389 = vld [vmem:[%s2388] sm:$0xff]
        %v2390 = vld [vmem:[%s2388 + $0x8] sm:$0xff]
        %v2391 = vld [vmem:[%s2388 + $0x10] sm:$0xff]
        %v2392 = vld [vmem:[%s2388 + $0x18] sm:$0xff]
        %v2393 = vld [vmem:[%s2388 + $0x20] sm:$0xff]
        %v2394 = vld [vmem:[%s2388 + $0x28] sm:$0xff]
        %v2395 = vld [vmem:[%s2388 + $0x30] sm:$0xff]
        %v2396 = vld [vmem:[%s2388 + $0x38] sm:$0xff]
        %v2397 = vld [vmem:[%s2388 + $0x40] sm:$0xff]
        %v2398 = vld [vmem:[%s2388 + $0x48] sm:$0xff]
        %v2399 = vld [vmem:[%s2388 + $0x50] sm:$0xff]
        %v2400 = vld [vmem:[%s2388 + $0x58] sm:$0xff]
        %v2401 = vld [vmem:[%s2388 + $0x60] sm:$0xff]
        %v2402 = vld [vmem:[%s2388 + $0x68] sm:$0xff]
        %v2403 = vld [vmem:[%s2388 + $0x70] sm:$0xff]
        %v2404 = vld [vmem:[%s2388 + $0x78] sm:$0xff]
        %2405 = vmatprep.subr.mxu0 0.0
        %2406 = vmatpush1.msra.mxu0 %v2404
        %2407 = vmatprep.subr.mxu0 0.0
        %2408 = vmatpush1.msra.mxu0 %v2403
        %2409 = vmatprep.subr.mxu0 0.0
        %2410 = vmatpush1.msra.mxu0 %v2402
        %2411 = vmatprep.subr.mxu0 0.0
        %2412 = vmatpush1.msra.mxu0 %v2401
        %2413 = vmatprep.subr.mxu0 0.0
        %2414 = vmatpush1.msra.mxu0 %v2400
        %2415 = vmatprep.subr.mxu0 0.0
        %2416 = vmatpush1.msra.mxu0 %v2399
        %2417 = vmatprep.subr.mxu0 0.0
        %2418 = vmatpush1.msra.mxu0 %v2398
        %2419 = vmatprep.subr.mxu0 0.0
        %2420 = vmatpush1.msra.mxu0 %v2397
        %2421 = vmatprep.subr.mxu0 0.0
        %2422 = vmatpush1.msra.mxu0 %v2396
        %2423 = vmatprep.subr.mxu0 0.0
        %2424 = vmatpush1.msra.mxu0 %v2395
        %2425 = vmatprep.subr.mxu0 0.0
        %2426 = vmatpush1.msra.mxu0 %v2394
        %2427 = vmatprep.subr.mxu0 0.0
        %2428 = vmatpush1.msra.mxu0 %v2393
        %2429 = vmatprep.subr.mxu0 0.0
        %2430 = vmatpush1.msra.mxu0 %v2392
        %2431 = vmatprep.subr.mxu0 0.0
        %2432 = vmatpush1.msra.mxu0 %v2391
        %2433 = vmatprep.subr.mxu0 0.0
        %2434 = vmatpush1.msra.mxu0 %v2390
        %2435 = vmatprep.subr.mxu0 0.0
        %2436 = vmatpush1.msra.mxu0 %v2389
        %2437 = vmatprep.subr.mxu0 0.0
        %2438 = vmatpush2.msra.mxu0 0.0
        %2439 = vmatprep.subr.mxu0 0.0
        %2440 = vmatpush2.msra.mxu0 0.0
        %2441 = vmatprep.subr.mxu0 0.0
        %2442 = vmatpush2.msra.mxu0 0.0
        %2443 = vmatprep.subr.mxu0 0.0
        %2444 = vmatpush2.msra.mxu0 0.0
        %2445 = vmatprep.subr.mxu0 0.0
        %2446 = vmatpush2.msra.mxu0 0.0
        %2447 = vmatprep.subr.mxu0 0.0
        %2448 = vmatpush2.msra.mxu0 0.0
        %2449 = vmatprep.subr.mxu0 0.0
        %2450 = vmatpush2.msra.mxu0 0.0
        %2451 = vmatprep.subr.mxu0 0.0
        %2452 = vmatpush2.msra.mxu0 0.0
        %2453 = vmatprep.subr.mxu0 0.0
        %2454 = vmatpush2.msra.mxu0 0.0
        %2455 = vmatprep.subr.mxu0 0.0
        %2456 = vmatpush2.msra.mxu0 0.0
        %2457 = vmatprep.subr.mxu0 0.0
        %2458 = vmatpush2.msra.mxu0 0.0
        %2459 = vmatprep.subr.mxu0 0.0
        %2460 = vmatpush2.msra.mxu0 0.0
        %2461 = vmatprep.subr.mxu0 0.0
        %2462 = vmatpush2.msra.mxu0 0.0
        %2463 = vmatprep.subr.mxu0 0.0
        %2464 = vmatpush2.msra.mxu0 0.0
        %2465 = vmatprep.subr.mxu0 0.0
        %2466 = vmatpush2.msra.mxu0 0.0
        %2467 = vmatprep.subr.mxu0 0.0
        %2468 = vmatpush2.msra.mxu0 0.0
        %2469 = vmatprep.mubr.f32.mxu0 0.0
        %2470 = vmatmul.mubr.f32.gmra.mxu0 %v2356
        %v2471 = vpop.f32.mrf.mxu0
        %v2472 = vadd.f32 0.0, %v2471
        %v2473 = vpop.f32.mrf.mxu0
        %2474 = vmatprep.mubr.f32.mxu0 0.0
        %2475 = vmatmul.mubr.f32.gmra.mxu0 %v2357
        %v2476 = vpop.f32.mrf.mxu0
        %v2477 = vadd.f32 0.0, %v2476
        %v2478 = vpop.f32.mrf.mxu0
        %2479 = vmatprep.mubr.f32.mxu0 0.0
        %2480 = vmatmul.mubr.f32.gmra.mxu0 %v2358
        %v2481 = vpop.f32.mrf.mxu0
        %v2482 = vadd.f32 0.0, %v2481
        %v2483 = vpop.f32.mrf.mxu0
        %2484 = vmatprep.mubr.f32.mxu0 0.0
        %2485 = vmatmul.mubr.f32.gmra.mxu0 %v2359
        %v2486 = vpop.f32.mrf.mxu0
        %v2487 = vadd.f32 0.0, %v2486
        %v2488 = vpop.f32.mrf.mxu0
        %2489 = vmatprep.mubr.f32.mxu0 0.0
        %2490 = vmatmul.mubr.f32.gmra.mxu0 %v2360
        %v2491 = vpop.f32.mrf.mxu0
        %v2492 = vadd.f32 0.0, %v2491
        %v2493 = vpop.f32.mrf.mxu0
        %2494 = vmatprep.mubr.f32.mxu0 0.0
        %2495 = vmatmul.mubr.f32.gmra.mxu0 %v2361
        %v2496 = vpop.f32.mrf.mxu0
        %v2497 = vadd.f32 0.0, %v2496
        %v2498 = vpop.f32.mrf.mxu0
        %2499 = vmatprep.mubr.f32.mxu0 0.0
        %2500 = vmatmul.mubr.f32.gmra.mxu0 %v2362
        %v2501 = vpop.f32.mrf.mxu0
        %v2502 = vadd.f32 0.0, %v2501
        %v2503 = vpop.f32.mrf.mxu0
        %2504 = vmatprep.mubr.f32.mxu0 0.0
        %2505 = vmatmul.mubr.f32.gmra.mxu0 %v2363
        %v2506 = vpop.f32.mrf.mxu0
        %v2507 = vadd.f32 0.0, %v2506
        %v2508 = vpop.f32.mrf.mxu0
        %2509 = vmatprep.mubr.f32.mxu0 0.0
        %2510 = vmatmul.mubr.f32.gmra.mxu0 %v2364
        %v2511 = vpop.f32.mrf.mxu0
        %v2512 = vadd.f32 0.0, %v2511
        %v2513 = vpop.f32.mrf.mxu0
        %2514 = vmatprep.mubr.f32.mxu0 0.0
        %2515 = vmatmul.mubr.f32.gmra.mxu0 %v2365
        %v2516 = vpop.f32.mrf.mxu0
        %v2517 = vadd.f32 0.0, %v2516
        %v2518 = vpop.f32.mrf.mxu0
        %2519 = vmatprep.mubr.f32.mxu0 0.0
        %2520 = vmatmul.mubr.f32.gmra.mxu0 %v2366
        %v2521 = vpop.f32.mrf.mxu0
        %v2522 = vadd.f32 0.0, %v2521
        %v2523 = vpop.f32.mrf.mxu0
        %2524 = vmatprep.mubr.f32.mxu0 0.0
        %2525 = vmatmul.mubr.f32.gmra.mxu0 %v2367
        %v2526 = vpop.f32.mrf.mxu0
        %v2527 = vadd.f32 0.0, %v2526
        %v2528 = vpop.f32.mrf.mxu0
        %2529 = vmatprep.mubr.f32.mxu0 0.0
        %2530 = vmatmul.mubr.f32.gmra.mxu0 %v2368
        %v2531 = vpop.f32.mrf.mxu0
        %v2532 = vadd.f32 0.0, %v2531
        %v2533 = vpop.f32.mrf.mxu0
        %2534 = vmatprep.mubr.f32.mxu0 0.0
        %2535 = vmatmul.mubr.f32.gmra.mxu0 %v2369
        %v2536 = vpop.f32.mrf.mxu0
        %v2537 = vadd.f32 0.0, %v2536
        %v2538 = vpop.f32.mrf.mxu0
        %2539 = vmatprep.mubr.f32.mxu0 0.0
        %2540 = vmatmul.mubr.f32.gmra.mxu0 %v2370
        %v2541 = vpop.f32.mrf.mxu0
        %v2542 = vadd.f32 0.0, %v2541
        %v2543 = vpop.f32.mrf.mxu0
        %2544 = vmatprep.mubr.f32.mxu0 0.0
        %2545 = vmatmul.mubr.f32.gmra.mxu0 %v2371
        %v2546 = vpop.f32.mrf.mxu0
        %v2547 = vadd.f32 0.0, %v2546
        %v2548 = vpop.f32.mrf.mxu0
        %2549 = vmatprep.mubr.f32.mxu0 0.0
        %2550 = vmatmul.mubr.f32.gmra.mxu0 %v2372
        %v2551 = vpop.f32.mrf.mxu0
        %v2552 = vadd.f32 0.0, %v2551
        %v2553 = vpop.f32.mrf.mxu0
        %2554 = vmatprep.mubr.f32.mxu0 0.0
        %2555 = vmatmul.mubr.f32.gmra.mxu0 %v2373
        %v2556 = vpop.f32.mrf.mxu0
        %v2557 = vadd.f32 0.0, %v2556
        %v2558 = vpop.f32.mrf.mxu0
        %2559 = vmatprep.mubr.f32.mxu0 0.0
        %2560 = vmatmul.mubr.f32.gmra.mxu0 %v2374
        %v2561 = vpop.f32.mrf.mxu0
        %v2562 = vadd.f32 0.0, %v2561
        %v2563 = vpop.f32.mrf.mxu0
        %2564 = vmatprep.mubr.f32.mxu0 0.0
        %2565 = vmatmul.mubr.f32.gmra.mxu0 %v2375
        %v2566 = vpop.f32.mrf.mxu0
        %v2567 = vadd.f32 0.0, %v2566
        %v2568 = vpop.f32.mrf.mxu0
        %2569 = vmatprep.mubr.f32.mxu0 0.0
        %2570 = vmatmul.mubr.f32.gmra.mxu0 %v2376
        %v2571 = vpop.f32.mrf.mxu0
        %v2572 = vadd.f32 0.0, %v2571
        %v2573 = vpop.f32.mrf.mxu0
        %2574 = vmatprep.mubr.f32.mxu0 0.0
        %2575 = vmatmul.mubr.f32.gmra.mxu0 %v2377
        %v2576 = vpop.f32.mrf.mxu0
        %v2577 = vadd.f32 0.0, %v2576
        %v2578 = vpop.f32.mrf.mxu0
        %2579 = vmatprep.mubr.f32.mxu0 0.0
        %2580 = vmatmul.mubr.f32.gmra.mxu0 %v2378
        %v2581 = vpop.f32.mrf.mxu0
        %v2582 = vadd.f32 0.0, %v2581
        %v2583 = vpop.f32.mrf.mxu0
        %2584 = vmatprep.mubr.f32.mxu0 0.0
        %2585 = vmatmul.mubr.f32.gmra.mxu0 %v2379
        %v2586 = vpop.f32.mrf.mxu0
        %v2587 = vadd.f32 0.0, %v2586
        %v2588 = vpop.f32.mrf.mxu0
        %2589 = vmatprep.mubr.f32.mxu0 0.0
        %2590 = vmatmul.mubr.f32.gmra.mxu0 %v2380
        %v2591 = vpop.f32.mrf.mxu0
        %v2592 = vadd.f32 0.0, %v2591
        %v2593 = vpop.f32.mrf.mxu0
        %2594 = vmatprep.mubr.f32.mxu0 0.0
        %2595 = vmatmul.mubr.f32.gmra.mxu0 %v2381
        %v2596 = vpop.f32.mrf.mxu0
        %v2597 = vadd.f32 0.0, %v2596
        %v2598 = vpop.f32.mrf.mxu0
        %2599 = vmatprep.mubr.f32.mxu0 0.0
        %2600 = vmatmul.mubr.f32.gmra.mxu0 %v2382
        %v2601 = vpop.f32.mrf.mxu0
        %v2602 = vadd.f32 0.0, %v2601
        %v2603 = vpop.f32.mrf.mxu0
        %2604 = vmatprep.mubr.f32.mxu0 0.0
        %2605 = vmatmul.mubr.f32.gmra.mxu0 %v2383
        %v2606 = vpop.f32.mrf.mxu0
        %v2607 = vadd.f32 0.0, %v2606
        %v2608 = vpop.f32.mrf.mxu0
        %2609 = vmatprep.mubr.f32.mxu0 0.0
        %2610 = vmatmul.mubr.f32.gmra.mxu0 %v2384
        %v2611 = vpop.f32.mrf.mxu0
        %v2612 = vadd.f32 0.0, %v2611
        %v2613 = vpop.f32.mrf.mxu0
        %2614 = vmatprep.mubr.f32.mxu0 0.0
        %2615 = vmatmul.mubr.f32.gmra.mxu0 %v2385
        %v2616 = vpop.f32.mrf.mxu0
        %v2617 = vadd.f32 0.0, %v2616
        %v2618 = vpop.f32.mrf.mxu0
        %2619 = vmatprep.mubr.f32.mxu0 0.0
        %2620 = vmatmul.mubr.f32.gmra.mxu0 %v2386
        %v2621 = vpop.f32.mrf.mxu0
        %v2622 = vadd.f32 0.0, %v2621
        %v2623 = vpop.f32.mrf.mxu0
        %2624 = vmatprep.mubr.f32.mxu0 0.0
        %2625 = vmatmul.mubr.f32.gmra.mxu0 %v2387
        %v2626 = vpop.f32.mrf.mxu0
        %v2627 = vadd.f32 0.0, %v2626
        %v2628 = vpop.f32.mrf.mxu0
        %2629 = vdwg.mxu0
        %v2630 = vadd.f32 %v2323, %v2472
        %v2631 = vadd.f32 %v2324, %v2477
        %v2632 = vadd.f32 %v2325, %v2482
        %v2633 = vadd.f32 %v2326, %v2487
        %v2634 = vadd.f32 %v2327, %v2492
        %v2635 = vadd.f32 %v2328, %v2497
        %v2636 = vadd.f32 %v2329, %v2502
        %v2637 = vadd.f32 %v2330, %v2507
        %v2638 = vadd.f32 %v2331, %v2512
        %v2639 = vadd.f32 %v2332, %v2517
        %v2640 = vadd.f32 %v2333, %v2522
        %v2641 = vadd.f32 %v2334, %v2527
        %v2642 = vadd.f32 %v2335, %v2532
        %v2643 = vadd.f32 %v2336, %v2537
        %v2644 = vadd.f32 %v2337, %v2542
        %v2645 = vadd.f32 %v2338, %v2547
        %v2646 = vadd.f32 %v2339, %v2552
        %v2647 = vadd.f32 %v2340, %v2557
        %v2648 = vadd.f32 %v2341, %v2562
        %v2649 = vadd.f32 %v2342, %v2567
        %v2650 = vadd.f32 %v2343, %v2572
        %v2651 = vadd.f32 %v2344, %v2577
        %v2652 = vadd.f32 %v2345, %v2582
        %v2653 = vadd.f32 %v2346, %v2587
        %v2654 = vadd.f32 %v2347, %v2592
        %v2655 = vadd.f32 %v2348, %v2597
        %v2656 = vadd.f32 %v2349, %v2602
        %v2657 = vadd.f32 %v2350, %v2607
        %v2658 = vadd.f32 %v2351, %v2612
        %v2659 = vadd.f32 %v2352, %v2617
        %v2660 = vadd.f32 %v2353, %v2622
        %v2661 = vadd.f32 %v2354, %v2627
        %v2662 = vld [vmem:[%s2355 + $0x1] sm:$0xff]
        %v2663 = vld [vmem:[%s2355 + $0x9] sm:$0xff]
        %v2664 = vld [vmem:[%s2355 + $0x19] sm:$0xff]
        %v2665 = vld [vmem:[%s2355 + $0x21] sm:$0xff]
        %v2666 = vld [vmem:[%s2355 + $0x31] sm:$0xff]
        %v2667 = vld [vmem:[%s2355 + $0x39] sm:$0xff]
        %v2668 = vld [vmem:[%s2355 + $0x49] sm:$0xff]
        %v2669 = vld [vmem:[%s2355 + $0x51] sm:$0xff]
        %v2670 = vld [vmem:[%s2355 + $0x61] sm:$0xff]
        %v2671 = vld [vmem:[%s2355 + $0x69] sm:$0xff]
        %v2672 = vld [vmem:[%s2355 + $0x79] sm:$0xff]
        %v2673 = vld [vmem:[%s2355 + $0x81] sm:$0xff]
        %v2674 = vld [vmem:[%s2355 + $0x91] sm:$0xff]
        %v2675 = vld [vmem:[%s2355 + $0x99] sm:$0xff]
        %v2676 = vld [vmem:[%s2355 + $0xa9] sm:$0xff]
        %v2677 = vld [vmem:[%s2355 + $0xb1] sm:$0xff]
        %v2678 = vld [vmem:[%s2355 + $0xc1] sm:$0xff]
        %v2679 = vld [vmem:[%s2355 + $0xc9] sm:$0xff]
        %v2680 = vld [vmem:[%s2355 + $0xd9] sm:$0xff]
        %v2681 = vld [vmem:[%s2355 + $0xe1] sm:$0xff]
        %v2682 = vld [vmem:[%s2355 + $0xf1] sm:$0xff]
        %v2683 = vld [vmem:[%s2355 + $0xf9] sm:$0xff]
        %v2684 = vld [vmem:[%s2355 + $0x109] sm:$0xff]
        %v2685 = vld [vmem:[%s2355 + $0x111] sm:$0xff]
        %v2686 = vld [vmem:[%s2355 + $0x121] sm:$0xff]
        %v2687 = vld [vmem:[%s2355 + $0x129] sm:$0xff]
        %v2688 = vld [vmem:[%s2355 + $0x139] sm:$0xff]
        %v2689 = vld [vmem:[%s2355 + $0x141] sm:$0xff]
        %v2690 = vld [vmem:[%s2355 + $0x151] sm:$0xff]
        %v2691 = vld [vmem:[%s2355 + $0x159] sm:$0xff]
        %v2692 = vld [vmem:[%s2355 + $0x169] sm:$0xff]
        %v2693 = vld [vmem:[%s2355 + $0x171] sm:$0xff]
        %s2694 = scalar_lea.vmem [#allocation3], 1024
        %v2695 = vld [vmem:[%s2694] sm:$0xff]
        %v2696 = vld [vmem:[%s2694 + $0x8] sm:$0xff]
        %v2697 = vld [vmem:[%s2694 + $0x10] sm:$0xff]
        %v2698 = vld [vmem:[%s2694 + $0x18] sm:$0xff]
        %v2699 = vld [vmem:[%s2694 + $0x20] sm:$0xff]
        %v2700 = vld [vmem:[%s2694 + $0x28] sm:$0xff]
        %v2701 = vld [vmem:[%s2694 + $0x30] sm:$0xff]
        %v2702 = vld [vmem:[%s2694 + $0x38] sm:$0xff]
        %v2703 = vld [vmem:[%s2694 + $0x40] sm:$0xff]
        %v2704 = vld [vmem:[%s2694 + $0x48] sm:$0xff]
        %v2705 = vld [vmem:[%s2694 + $0x50] sm:$0xff]
        %v2706 = vld [vmem:[%s2694 + $0x58] sm:$0xff]
        %v2707 = vld [vmem:[%s2694 + $0x60] sm:$0xff]
        %v2708 = vld [vmem:[%s2694 + $0x68] sm:$0xff]
        %v2709 = vld [vmem:[%s2694 + $0x70] sm:$0xff]
        %v2710 = vld [vmem:[%s2694 + $0x78] sm:$0xff]
        %2711 = vmatprep.subr.mxu0 0.0
        %2712 = vmatpush1.msra.mxu0 %v2710
        %2713 = vmatprep.subr.mxu0 0.0
        %2714 = vmatpush1.msra.mxu0 %v2709
        %2715 = vmatprep.subr.mxu0 0.0
        %2716 = vmatpush1.msra.mxu0 %v2708
        %2717 = vmatprep.subr.mxu0 0.0
        %2718 = vmatpush1.msra.mxu0 %v2707
        %2719 = vmatprep.subr.mxu0 0.0
        %2720 = vmatpush1.msra.mxu0 %v2706
        %2721 = vmatprep.subr.mxu0 0.0
        %2722 = vmatpush1.msra.mxu0 %v2705
        %2723 = vmatprep.subr.mxu0 0.0
        %2724 = vmatpush1.msra.mxu0 %v2704
        %2725 = vmatprep.subr.mxu0 0.0
        %2726 = vmatpush1.msra.mxu0 %v2703
        %2727 = vmatprep.subr.mxu0 0.0
        %2728 = vmatpush1.msra.mxu0 %v2702
        %2729 = vmatprep.subr.mxu0 0.0
        %2730 = vmatpush1.msra.mxu0 %v2701
        %2731 = vmatprep.subr.mxu0 0.0
        %2732 = vmatpush1.msra.mxu0 %v2700
        %2733 = vmatprep.subr.mxu0 0.0
        %2734 = vmatpush1.msra.mxu0 %v2699
        %2735 = vmatprep.subr.mxu0 0.0
        %2736 = vmatpush1.msra.mxu0 %v2698
        %2737 = vmatprep.subr.mxu0 0.0
        %2738 = vmatpush1.msra.mxu0 %v2697
        %2739 = vmatprep.subr.mxu0 0.0
        %2740 = vmatpush1.msra.mxu0 %v2696
        %2741 = vmatprep.subr.mxu0 0.0
        %2742 = vmatpush1.msra.mxu0 %v2695
        %2743 = vmatprep.subr.mxu0 0.0
        %2744 = vmatpush2.msra.mxu0 0.0
        %2745 = vmatprep.subr.mxu0 0.0
        %2746 = vmatpush2.msra.mxu0 0.0
        %2747 = vmatprep.subr.mxu0 0.0
        %2748 = vmatpush2.msra.mxu0 0.0
        %2749 = vmatprep.subr.mxu0 0.0
        %2750 = vmatpush2.msra.mxu0 0.0
        %2751 = vmatprep.subr.mxu0 0.0
        %2752 = vmatpush2.msra.mxu0 0.0
        %2753 = vmatprep.subr.mxu0 0.0
        %2754 = vmatpush2.msra.mxu0 0.0
        %2755 = vmatprep.subr.mxu0 0.0
        %2756 = vmatpush2.msra.mxu0 0.0
        %2757 = vmatprep.subr.mxu0 0.0
        %2758 = vmatpush2.msra.mxu0 0.0
        %2759 = vmatprep.subr.mxu0 0.0
        %2760 = vmatpush2.msra.mxu0 0.0
        %2761 = vmatprep.subr.mxu0 0.0
        %2762 = vmatpush2.msra.mxu0 0.0
        %2763 = vmatprep.subr.mxu0 0.0
        %2764 = vmatpush2.msra.mxu0 0.0
        %2765 = vmatprep.subr.mxu0 0.0
        %2766 = vmatpush2.msra.mxu0 0.0
        %2767 = vmatprep.subr.mxu0 0.0
        %2768 = vmatpush2.msra.mxu0 0.0
        %2769 = vmatprep.subr.mxu0 0.0
        %2770 = vmatpush2.msra.mxu0 0.0
        %2771 = vmatprep.subr.mxu0 0.0
        %2772 = vmatpush2.msra.mxu0 0.0
        %2773 = vmatprep.subr.mxu0 0.0
        %2774 = vmatpush2.msra.mxu0 0.0
        %2775 = vmatprep.mubr.f32.mxu0 0.0
        %2776 = vmatmul.mubr.f32.gmra.mxu0 %v2662
        %v2777 = vpop.f32.mrf.mxu0
        %v2778 = vadd.f32 0.0, %v2777
        %v2779 = vpop.f32.mrf.mxu0
        %2780 = vmatprep.mubr.f32.mxu0 0.0
        %2781 = vmatmul.mubr.f32.gmra.mxu0 %v2663
        %v2782 = vpop.f32.mrf.mxu0
        %v2783 = vadd.f32 0.0, %v2782
        %v2784 = vpop.f32.mrf.mxu0
        %2785 = vmatprep.mubr.f32.mxu0 0.0
        %2786 = vmatmul.mubr.f32.gmra.mxu0 %v2664
        %v2787 = vpop.f32.mrf.mxu0
        %v2788 = vadd.f32 0.0, %v2787
        %v2789 = vpop.f32.mrf.mxu0
        %2790 = vmatprep.mubr.f32.mxu0 0.0
        %2791 = vmatmul.mubr.f32.gmra.mxu0 %v2665
        %v2792 = vpop.f32.mrf.mxu0
        %v2793 = vadd.f32 0.0, %v2792
        %v2794 = vpop.f32.mrf.mxu0
        %2795 = vmatprep.mubr.f32.mxu0 0.0
        %2796 = vmatmul.mubr.f32.gmra.mxu0 %v2666
        %v2797 = vpop.f32.mrf.mxu0
        %v2798 = vadd.f32 0.0, %v2797
        %v2799 = vpop.f32.mrf.mxu0
        %2800 = vmatprep.mubr.f32.mxu0 0.0
        %2801 = vmatmul.mubr.f32.gmra.mxu0 %v2667
        %v2802 = vpop.f32.mrf.mxu0
        %v2803 = vadd.f32 0.0, %v2802
        %v2804 = vpop.f32.mrf.mxu0
        %2805 = vmatprep.mubr.f32.mxu0 0.0
        %2806 = vmatmul.mubr.f32.gmra.mxu0 %v2668
        %v2807 = vpop.f32.mrf.mxu0
        %v2808 = vadd.f32 0.0, %v2807
        %v2809 = vpop.f32.mrf.mxu0
        %2810 = vmatprep.mubr.f32.mxu0 0.0
        %2811 = vmatmul.mubr.f32.gmra.mxu0 %v2669
        %v2812 = vpop.f32.mrf.mxu0
        %v2813 = vadd.f32 0.0, %v2812
        %v2814 = vpop.f32.mrf.mxu0
        %2815 = vmatprep.mubr.f32.mxu0 0.0
        %2816 = vmatmul.mubr.f32.gmra.mxu0 %v2670
        %v2817 = vpop.f32.mrf.mxu0
        %v2818 = vadd.f32 0.0, %v2817
        %v2819 = vpop.f32.mrf.mxu0
        %2820 = vmatprep.mubr.f32.mxu0 0.0
        %2821 = vmatmul.mubr.f32.gmra.mxu0 %v2671
        %v2822 = vpop.f32.mrf.mxu0
        %v2823 = vadd.f32 0.0, %v2822
        %v2824 = vpop.f32.mrf.mxu0
        %2825 = vmatprep.mubr.f32.mxu0 0.0
        %2826 = vmatmul.mubr.f32.gmra.mxu0 %v2672
        %v2827 = vpop.f32.mrf.mxu0
        %v2828 = vadd.f32 0.0, %v2827
        %v2829 = vpop.f32.mrf.mxu0
        %2830 = vmatprep.mubr.f32.mxu0 0.0
        %2831 = vmatmul.mubr.f32.gmra.mxu0 %v2673
        %v2832 = vpop.f32.mrf.mxu0
        %v2833 = vadd.f32 0.0, %v2832
        %v2834 = vpop.f32.mrf.mxu0
        %2835 = vmatprep.mubr.f32.mxu0 0.0
        %2836 = vmatmul.mubr.f32.gmra.mxu0 %v2674
        %v2837 = vpop.f32.mrf.mxu0
        %v2838 = vadd.f32 0.0, %v2837
        %v2839 = vpop.f32.mrf.mxu0
        %2840 = vmatprep.mubr.f32.mxu0 0.0
        %2841 = vmatmul.mubr.f32.gmra.mxu0 %v2675
        %v2842 = vpop.f32.mrf.mxu0
        %v2843 = vadd.f32 0.0, %v2842
        %v2844 = vpop.f32.mrf.mxu0
        %2845 = vmatprep.mubr.f32.mxu0 0.0
        %2846 = vmatmul.mubr.f32.gmra.mxu0 %v2676
        %v2847 = vpop.f32.mrf.mxu0
        %v2848 = vadd.f32 0.0, %v2847
        %v2849 = vpop.f32.mrf.mxu0
        %2850 = vmatprep.mubr.f32.mxu0 0.0
        %2851 = vmatmul.mubr.f32.gmra.mxu0 %v2677
        %v2852 = vpop.f32.mrf.mxu0
        %v2853 = vadd.f32 0.0, %v2852
        %v2854 = vpop.f32.mrf.mxu0
        %2855 = vmatprep.mubr.f32.mxu0 0.0
        %2856 = vmatmul.mubr.f32.gmra.mxu0 %v2678
        %v2857 = vpop.f32.mrf.mxu0
        %v2858 = vadd.f32 0.0, %v2857
        %v2859 = vpop.f32.mrf.mxu0
        %2860 = vmatprep.mubr.f32.mxu0 0.0
        %2861 = vmatmul.mubr.f32.gmra.mxu0 %v2679
        %v2862 = vpop.f32.mrf.mxu0
        %v2863 = vadd.f32 0.0, %v2862
        %v2864 = vpop.f32.mrf.mxu0
        %2865 = vmatprep.mubr.f32.mxu0 0.0
        %2866 = vmatmul.mubr.f32.gmra.mxu0 %v2680
        %v2867 = vpop.f32.mrf.mxu0
        %v2868 = vadd.f32 0.0, %v2867
        %v2869 = vpop.f32.mrf.mxu0
        %2870 = vmatprep.mubr.f32.mxu0 0.0
        %2871 = vmatmul.mubr.f32.gmra.mxu0 %v2681
        %v2872 = vpop.f32.mrf.mxu0
        %v2873 = vadd.f32 0.0, %v2872
        %v2874 = vpop.f32.mrf.mxu0
        %2875 = vmatprep.mubr.f32.mxu0 0.0
        %2876 = vmatmul.mubr.f32.gmra.mxu0 %v2682
        %v2877 = vpop.f32.mrf.mxu0
        %v2878 = vadd.f32 0.0, %v2877
        %v2879 = vpop.f32.mrf.mxu0
        %2880 = vmatprep.mubr.f32.mxu0 0.0
        %2881 = vmatmul.mubr.f32.gmra.mxu0 %v2683
        %v2882 = vpop.f32.mrf.mxu0
        %v2883 = vadd.f32 0.0, %v2882
        %v2884 = vpop.f32.mrf.mxu0
        %2885 = vmatprep.mubr.f32.mxu0 0.0
        %2886 = vmatmul.mubr.f32.gmra.mxu0 %v2684
        %v2887 = vpop.f32.mrf.mxu0
        %v2888 = vadd.f32 0.0, %v2887
        %v2889 = vpop.f32.mrf.mxu0
        %2890 = vmatprep.mubr.f32.mxu0 0.0
        %2891 = vmatmul.mubr.f32.gmra.mxu0 %v2685
        %v2892 = vpop.f32.mrf.mxu0
        %v2893 = vadd.f32 0.0, %v2892
        %v2894 = vpop.f32.mrf.mxu0
        %2895 = vmatprep.mubr.f32.mxu0 0.0
        %2896 = vmatmul.mubr.f32.gmra.mxu0 %v2686
        %v2897 = vpop.f32.mrf.mxu0
        %v2898 = vadd.f32 0.0, %v2897
        %v2899 = vpop.f32.mrf.mxu0
        %2900 = vmatprep.mubr.f32.mxu0 0.0
        %2901 = vmatmul.mubr.f32.gmra.mxu0 %v2687
        %v2902 = vpop.f32.mrf.mxu0
        %v2903 = vadd.f32 0.0, %v2902
        %v2904 = vpop.f32.mrf.mxu0
        %2905 = vmatprep.mubr.f32.mxu0 0.0
        %2906 = vmatmul.mubr.f32.gmra.mxu0 %v2688
        %v2907 = vpop.f32.mrf.mxu0
        %v2908 = vadd.f32 0.0, %v2907
        %v2909 = vpop.f32.mrf.mxu0
        %2910 = vmatprep.mubr.f32.mxu0 0.0
        %2911 = vmatmul.mubr.f32.gmra.mxu0 %v2689
        %v2912 = vpop.f32.mrf.mxu0
        %v2913 = vadd.f32 0.0, %v2912
        %v2914 = vpop.f32.mrf.mxu0
        %2915 = vmatprep.mubr.f32.mxu0 0.0
        %2916 = vmatmul.mubr.f32.gmra.mxu0 %v2690
        %v2917 = vpop.f32.mrf.mxu0
        %v2918 = vadd.f32 0.0, %v2917
        %v2919 = vpop.f32.mrf.mxu0
        %2920 = vmatprep.mubr.f32.mxu0 0.0
        %2921 = vmatmul.mubr.f32.gmra.mxu0 %v2691
        %v2922 = vpop.f32.mrf.mxu0
        %v2923 = vadd.f32 0.0, %v2922
        %v2924 = vpop.f32.mrf.mxu0
        %2925 = vmatprep.mubr.f32.mxu0 0.0
        %2926 = vmatmul.mubr.f32.gmra.mxu0 %v2692
        %v2927 = vpop.f32.mrf.mxu0
        %v2928 = vadd.f32 0.0, %v2927
        %v2929 = vpop.f32.mrf.mxu0
        %2930 = vmatprep.mubr.f32.mxu0 0.0
        %2931 = vmatmul.mubr.f32.gmra.mxu0 %v2693
        %v2932 = vpop.f32.mrf.mxu0
        %v2933 = vadd.f32 0.0, %v2932
        %v2934 = vpop.f32.mrf.mxu0
        %2935 = vdwg.mxu0
        %v2936 = vadd.f32 %v2630, %v2778
        %v2937 = vadd.f32 %v2631, %v2783
        %v2938 = vadd.f32 %v2632, %v2788
        %v2939 = vadd.f32 %v2633, %v2793
        %v2940 = vadd.f32 %v2634, %v2798
        %v2941 = vadd.f32 %v2635, %v2803
        %v2942 = vadd.f32 %v2636, %v2808
        %v2943 = vadd.f32 %v2637, %v2813
        %v2944 = vadd.f32 %v2638, %v2818
        %v2945 = vadd.f32 %v2639, %v2823
        %v2946 = vadd.f32 %v2640, %v2828
        %v2947 = vadd.f32 %v2641, %v2833
        %v2948 = vadd.f32 %v2642, %v2838
        %v2949 = vadd.f32 %v2643, %v2843
        %v2950 = vadd.f32 %v2644, %v2848
        %v2951 = vadd.f32 %v2645, %v2853
        %v2952 = vadd.f32 %v2646, %v2858
        %v2953 = vadd.f32 %v2647, %v2863
        %v2954 = vadd.f32 %v2648, %v2868
        %v2955 = vadd.f32 %v2649, %v2873
        %v2956 = vadd.f32 %v2650, %v2878
        %v2957 = vadd.f32 %v2651, %v2883
        %v2958 = vadd.f32 %v2652, %v2888
        %v2959 = vadd.f32 %v2653, %v2893
        %v2960 = vadd.f32 %v2654, %v2898
        %v2961 = vadd.f32 %v2655, %v2903
        %v2962 = vadd.f32 %v2656, %v2908
        %v2963 = vadd.f32 %v2657, %v2913
        %v2964 = vadd.f32 %v2658, %v2918
        %v2965 = vadd.f32 %v2659, %v2923
        %v2966 = vadd.f32 %v2660, %v2928
        %v2967 = vadd.f32 %v2661, %v2933
        %v2968 = vld [vmem:[%s2355 + $0x2] sm:$0xff]
        %v2969 = vld [vmem:[%s2355 + $0xa] sm:$0xff]
        %v2970 = vld [vmem:[%s2355 + $0x1a] sm:$0xff]
        %v2971 = vld [vmem:[%s2355 + $0x22] sm:$0xff]
        %v2972 = vld [vmem:[%s2355 + $0x32] sm:$0xff]
        %v2973 = vld [vmem:[%s2355 + $0x3a] sm:$0xff]
        %v2974 = vld [vmem:[%s2355 + $0x4a] sm:$0xff]
        %v2975 = vld [vmem:[%s2355 + $0x52] sm:$0xff]
        %v2976 = vld [vmem:[%s2355 + $0x62] sm:$0xff]
        %v2977 = vld [vmem:[%s2355 + $0x6a] sm:$0xff]
        %v2978 = vld [vmem:[%s2355 + $0x7a] sm:$0xff]
        %v2979 = vld [vmem:[%s2355 + $0x82] sm:$0xff]
        %v2980 = vld [vmem:[%s2355 + $0x92] sm:$0xff]
        %v2981 = vld [vmem:[%s2355 + $0x9a] sm:$0xff]
        %v2982 = vld [vmem:[%s2355 + $0xaa] sm:$0xff]
        %v2983 = vld [vmem:[%s2355 + $0xb2] sm:$0xff]
        %v2984 = vld [vmem:[%s2355 + $0xc2] sm:$0xff]
        %v2985 = vld [vmem:[%s2355 + $0xca] sm:$0xff]
        %v2986 = vld [vmem:[%s2355 + $0xda] sm:$0xff]
        %v2987 = vld [vmem:[%s2355 + $0xe2] sm:$0xff]
        %v2988 = vld [vmem:[%s2355 + $0xf2] sm:$0xff]
        %v2989 = vld [vmem:[%s2355 + $0xfa] sm:$0xff]
        %v2990 = vld [vmem:[%s2355 + $0x10a] sm:$0xff]
        %v2991 = vld [vmem:[%s2355 + $0x112] sm:$0xff]
        %v2992 = vld [vmem:[%s2355 + $0x122] sm:$0xff]
        %v2993 = vld [vmem:[%s2355 + $0x12a] sm:$0xff]
        %v2994 = vld [vmem:[%s2355 + $0x13a] sm:$0xff]
        %v2995 = vld [vmem:[%s2355 + $0x142] sm:$0xff]
        %v2996 = vld [vmem:[%s2355 + $0x152] sm:$0xff]
        %v2997 = vld [vmem:[%s2355 + $0x15a] sm:$0xff]
        %v2998 = vld [vmem:[%s2355 + $0x16a] sm:$0xff]
        %v2999 = vld [vmem:[%s2355 + $0x172] sm:$0xff]
        %s3000 = scalar_lea.vmem [#allocation3], 1152
        %v3001 = vld [vmem:[%s3000] sm:$0xff]
        %v3002 = vld [vmem:[%s3000 + $0x8] sm:$0xff]
        %v3003 = vld [vmem:[%s3000 + $0x10] sm:$0xff]
        %v3004 = vld [vmem:[%s3000 + $0x18] sm:$0xff]
        %v3005 = vld [vmem:[%s3000 + $0x20] sm:$0xff]
        %v3006 = vld [vmem:[%s3000 + $0x28] sm:$0xff]
        %v3007 = vld [vmem:[%s3000 + $0x30] sm:$0xff]
        %v3008 = vld [vmem:[%s3000 + $0x38] sm:$0xff]
        %v3009 = vld [vmem:[%s3000 + $0x40] sm:$0xff]
        %v3010 = vld [vmem:[%s3000 + $0x48] sm:$0xff]
        %v3011 = vld [vmem:[%s3000 + $0x50] sm:$0xff]
        %v3012 = vld [vmem:[%s3000 + $0x58] sm:$0xff]
        %v3013 = vld [vmem:[%s3000 + $0x60] sm:$0xff]
        %v3014 = vld [vmem:[%s3000 + $0x68] sm:$0xff]
        %v3015 = vld [vmem:[%s3000 + $0x70] sm:$0xff]
        %v3016 = vld [vmem:[%s3000 + $0x78] sm:$0xff]
        %3017 = vmatprep.subr.mxu0 0.0
        %3018 = vmatpush1.msra.mxu0 %v3016
        %3019 = vmatprep.subr.mxu0 0.0
        %3020 = vmatpush1.msra.mxu0 %v3015
        %3021 = vmatprep.subr.mxu0 0.0
        %3022 = vmatpush1.msra.mxu0 %v3014
        %3023 = vmatprep.subr.mxu0 0.0
        %3024 = vmatpush1.msra.mxu0 %v3013
        %3025 = vmatprep.subr.mxu0 0.0
        %3026 = vmatpush1.msra.mxu0 %v3012
        %3027 = vmatprep.subr.mxu0 0.0
        %3028 = vmatpush1.msra.mxu0 %v3011
        %3029 = vmatprep.subr.mxu0 0.0
        %3030 = vmatpush1.msra.mxu0 %v3010
        %3031 = vmatprep.subr.mxu0 0.0
        %3032 = vmatpush1.msra.mxu0 %v3009
        %3033 = vmatprep.subr.mxu0 0.0
        %3034 = vmatpush1.msra.mxu0 %v3008
        %3035 = vmatprep.subr.mxu0 0.0
        %3036 = vmatpush1.msra.mxu0 %v3007
        %3037 = vmatprep.subr.mxu0 0.0
        %3038 = vmatpush1.msra.mxu0 %v3006
        %3039 = vmatprep.subr.mxu0 0.0
        %3040 = vmatpush1.msra.mxu0 %v3005
        %3041 = vmatprep.subr.mxu0 0.0
        %3042 = vmatpush1.msra.mxu0 %v3004
        %3043 = vmatprep.subr.mxu0 0.0
        %3044 = vmatpush1.msra.mxu0 %v3003
        %3045 = vmatprep.subr.mxu0 0.0
        %3046 = vmatpush1.msra.mxu0 %v3002
        %3047 = vmatprep.subr.mxu0 0.0
        %3048 = vmatpush1.msra.mxu0 %v3001
        %3049 = vmatprep.subr.mxu0 0.0
        %3050 = vmatpush2.msra.mxu0 0.0
        %3051 = vmatprep.subr.mxu0 0.0
        %3052 = vmatpush2.msra.mxu0 0.0
        %3053 = vmatprep.subr.mxu0 0.0
        %3054 = vmatpush2.msra.mxu0 0.0
        %3055 = vmatprep.subr.mxu0 0.0
        %3056 = vmatpush2.msra.mxu0 0.0
        %3057 = vmatprep.subr.mxu0 0.0
        %3058 = vmatpush2.msra.mxu0 0.0
        %3059 = vmatprep.subr.mxu0 0.0
        %3060 = vmatpush2.msra.mxu0 0.0
        %3061 = vmatprep.subr.mxu0 0.0
        %3062 = vmatpush2.msra.mxu0 0.0
        %3063 = vmatprep.subr.mxu0 0.0
        %3064 = vmatpush2.msra.mxu0 0.0
        %3065 = vmatprep.subr.mxu0 0.0
        %3066 = vmatpush2.msra.mxu0 0.0
        %3067 = vmatprep.subr.mxu0 0.0
        %3068 = vmatpush2.msra.mxu0 0.0
        %3069 = vmatprep.subr.mxu0 0.0
        %3070 = vmatpush2.msra.mxu0 0.0
        %3071 = vmatprep.subr.mxu0 0.0
        %3072 = vmatpush2.msra.mxu0 0.0
        %3073 = vmatprep.subr.mxu0 0.0
        %3074 = vmatpush2.msra.mxu0 0.0
        %3075 = vmatprep.subr.mxu0 0.0
        %3076 = vmatpush2.msra.mxu0 0.0
        %3077 = vmatprep.subr.mxu0 0.0
        %3078 = vmatpush2.msra.mxu0 0.0
        %3079 = vmatprep.subr.mxu0 0.0
        %3080 = vmatpush2.msra.mxu0 0.0
        %3081 = vmatprep.mubr.f32.mxu0 0.0
        %3082 = vmatmul.mubr.f32.gmra.mxu0 %v2968
        %v3083 = vpop.f32.mrf.mxu0
        %v3084 = vadd.f32 0.0, %v3083
        %v3085 = vpop.f32.mrf.mxu0
        %3086 = vmatprep.mubr.f32.mxu0 0.0
        %3087 = vmatmul.mubr.f32.gmra.mxu0 %v2969
        %v3088 = vpop.f32.mrf.mxu0
        %v3089 = vadd.f32 0.0, %v3088
        %v3090 = vpop.f32.mrf.mxu0
        %3091 = vmatprep.mubr.f32.mxu0 0.0
        %3092 = vmatmul.mubr.f32.gmra.mxu0 %v2970
        %v3093 = vpop.f32.mrf.mxu0
        %v3094 = vadd.f32 0.0, %v3093
        %v3095 = vpop.f32.mrf.mxu0
        %3096 = vmatprep.mubr.f32.mxu0 0.0
        %3097 = vmatmul.mubr.f32.gmra.mxu0 %v2971
        %v3098 = vpop.f32.mrf.mxu0
        %v3099 = vadd.f32 0.0, %v3098
        %v3100 = vpop.f32.mrf.mxu0
        %3101 = vmatprep.mubr.f32.mxu0 0.0
        %3102 = vmatmul.mubr.f32.gmra.mxu0 %v2972
        %v3103 = vpop.f32.mrf.mxu0
        %v3104 = vadd.f32 0.0, %v3103
        %v3105 = vpop.f32.mrf.mxu0
        %3106 = vmatprep.mubr.f32.mxu0 0.0
        %3107 = vmatmul.mubr.f32.gmra.mxu0 %v2973
        %v3108 = vpop.f32.mrf.mxu0
        %v3109 = vadd.f32 0.0, %v3108
        %v3110 = vpop.f32.mrf.mxu0
        %3111 = vmatprep.mubr.f32.mxu0 0.0
        %3112 = vmatmul.mubr.f32.gmra.mxu0 %v2974
        %v3113 = vpop.f32.mrf.mxu0
        %v3114 = vadd.f32 0.0, %v3113
        %v3115 = vpop.f32.mrf.mxu0
        %3116 = vmatprep.mubr.f32.mxu0 0.0
        %3117 = vmatmul.mubr.f32.gmra.mxu0 %v2975
        %v3118 = vpop.f32.mrf.mxu0
        %v3119 = vadd.f32 0.0, %v3118
        %v3120 = vpop.f32.mrf.mxu0
        %3121 = vmatprep.mubr.f32.mxu0 0.0
        %3122 = vmatmul.mubr.f32.gmra.mxu0 %v2976
        %v3123 = vpop.f32.mrf.mxu0
        %v3124 = vadd.f32 0.0, %v3123
        %v3125 = vpop.f32.mrf.mxu0
        %3126 = vmatprep.mubr.f32.mxu0 0.0
        %3127 = vmatmul.mubr.f32.gmra.mxu0 %v2977
        %v3128 = vpop.f32.mrf.mxu0
        %v3129 = vadd.f32 0.0, %v3128
        %v3130 = vpop.f32.mrf.mxu0
        %3131 = vmatprep.mubr.f32.mxu0 0.0
        %3132 = vmatmul.mubr.f32.gmra.mxu0 %v2978
        %v3133 = vpop.f32.mrf.mxu0
        %v3134 = vadd.f32 0.0, %v3133
        %v3135 = vpop.f32.mrf.mxu0
        %3136 = vmatprep.mubr.f32.mxu0 0.0
        %3137 = vmatmul.mubr.f32.gmra.mxu0 %v2979
        %v3138 = vpop.f32.mrf.mxu0
        %v3139 = vadd.f32 0.0, %v3138
        %v3140 = vpop.f32.mrf.mxu0
        %3141 = vmatprep.mubr.f32.mxu0 0.0
        %3142 = vmatmul.mubr.f32.gmra.mxu0 %v2980
        %v3143 = vpop.f32.mrf.mxu0
        %v3144 = vadd.f32 0.0, %v3143
        %v3145 = vpop.f32.mrf.mxu0
        %3146 = vmatprep.mubr.f32.mxu0 0.0
        %3147 = vmatmul.mubr.f32.gmra.mxu0 %v2981
        %v3148 = vpop.f32.mrf.mxu0
        %v3149 = vadd.f32 0.0, %v3148
        %v3150 = vpop.f32.mrf.mxu0
        %3151 = vmatprep.mubr.f32.mxu0 0.0
        %3152 = vmatmul.mubr.f32.gmra.mxu0 %v2982
        %v3153 = vpop.f32.mrf.mxu0
        %v3154 = vadd.f32 0.0, %v3153
        %v3155 = vpop.f32.mrf.mxu0
        %3156 = vmatprep.mubr.f32.mxu0 0.0
        %3157 = vmatmul.mubr.f32.gmra.mxu0 %v2983
        %v3158 = vpop.f32.mrf.mxu0
        %v3159 = vadd.f32 0.0, %v3158
        %v3160 = vpop.f32.mrf.mxu0
        %3161 = vmatprep.mubr.f32.mxu0 0.0
        %3162 = vmatmul.mubr.f32.gmra.mxu0 %v2984
        %v3163 = vpop.f32.mrf.mxu0
        %v3164 = vadd.f32 0.0, %v3163
        %v3165 = vpop.f32.mrf.mxu0
        %3166 = vmatprep.mubr.f32.mxu0 0.0
        %3167 = vmatmul.mubr.f32.gmra.mxu0 %v2985
        %v3168 = vpop.f32.mrf.mxu0
        %v3169 = vadd.f32 0.0, %v3168
        %v3170 = vpop.f32.mrf.mxu0
        %3171 = vmatprep.mubr.f32.mxu0 0.0
        %3172 = vmatmul.mubr.f32.gmra.mxu0 %v2986
        %v3173 = vpop.f32.mrf.mxu0
        %v3174 = vadd.f32 0.0, %v3173
        %v3175 = vpop.f32.mrf.mxu0
        %3176 = vmatprep.mubr.f32.mxu0 0.0
        %3177 = vmatmul.mubr.f32.gmra.mxu0 %v2987
        %v3178 = vpop.f32.mrf.mxu0
        %v3179 = vadd.f32 0.0, %v3178
        %v3180 = vpop.f32.mrf.mxu0
        %3181 = vmatprep.mubr.f32.mxu0 0.0
        %3182 = vmatmul.mubr.f32.gmra.mxu0 %v2988
        %v3183 = vpop.f32.mrf.mxu0
        %v3184 = vadd.f32 0.0, %v3183
        %v3185 = vpop.f32.mrf.mxu0
        %3186 = vmatprep.mubr.f32.mxu0 0.0
        %3187 = vmatmul.mubr.f32.gmra.mxu0 %v2989
        %v3188 = vpop.f32.mrf.mxu0
        %v3189 = vadd.f32 0.0, %v3188
        %v3190 = vpop.f32.mrf.mxu0
        %3191 = vmatprep.mubr.f32.mxu0 0.0
        %3192 = vmatmul.mubr.f32.gmra.mxu0 %v2990
        %v3193 = vpop.f32.mrf.mxu0
        %v3194 = vadd.f32 0.0, %v3193
        %v3195 = vpop.f32.mrf.mxu0
        %3196 = vmatprep.mubr.f32.mxu0 0.0
        %3197 = vmatmul.mubr.f32.gmra.mxu0 %v2991
        %v3198 = vpop.f32.mrf.mxu0
        %v3199 = vadd.f32 0.0, %v3198
        %v3200 = vpop.f32.mrf.mxu0
        %3201 = vmatprep.mubr.f32.mxu0 0.0
        %3202 = vmatmul.mubr.f32.gmra.mxu0 %v2992
        %v3203 = vpop.f32.mrf.mxu0
        %v3204 = vadd.f32 0.0, %v3203
        %v3205 = vpop.f32.mrf.mxu0
        %3206 = vmatprep.mubr.f32.mxu0 0.0
        %3207 = vmatmul.mubr.f32.gmra.mxu0 %v2993
        %v3208 = vpop.f32.mrf.mxu0
        %v3209 = vadd.f32 0.0, %v3208
        %v3210 = vpop.f32.mrf.mxu0
        %3211 = vmatprep.mubr.f32.mxu0 0.0
        %3212 = vmatmul.mubr.f32.gmra.mxu0 %v2994
        %v3213 = vpop.f32.mrf.mxu0
        %v3214 = vadd.f32 0.0, %v3213
        %v3215 = vpop.f32.mrf.mxu0
        %3216 = vmatprep.mubr.f32.mxu0 0.0
        %3217 = vmatmul.mubr.f32.gmra.mxu0 %v2995
        %v3218 = vpop.f32.mrf.mxu0
        %v3219 = vadd.f32 0.0, %v3218
        %v3220 = vpop.f32.mrf.mxu0
        %3221 = vmatprep.mubr.f32.mxu0 0.0
        %3222 = vmatmul.mubr.f32.gmra.mxu0 %v2996
        %v3223 = vpop.f32.mrf.mxu0
        %v3224 = vadd.f32 0.0, %v3223
        %v3225 = vpop.f32.mrf.mxu0
        %3226 = vmatprep.mubr.f32.mxu0 0.0
        %3227 = vmatmul.mubr.f32.gmra.mxu0 %v2997
        %v3228 = vpop.f32.mrf.mxu0
        %v3229 = vadd.f32 0.0, %v3228
        %v3230 = vpop.f32.mrf.mxu0
        %3231 = vmatprep.mubr.f32.mxu0 0.0
        %3232 = vmatmul.mubr.f32.gmra.mxu0 %v2998
        %v3233 = vpop.f32.mrf.mxu0
        %v3234 = vadd.f32 0.0, %v3233
        %v3235 = vpop.f32.mrf.mxu0
        %3236 = vmatprep.mubr.f32.mxu0 0.0
        %3237 = vmatmul.mubr.f32.gmra.mxu0 %v2999
        %v3238 = vpop.f32.mrf.mxu0
        %v3239 = vadd.f32 0.0, %v3238
        %v3240 = vpop.f32.mrf.mxu0
        %3241 = vdwg.mxu0
        %v3242 = vadd.f32 %v2936, %v3084
        %v3243 = vadd.f32 %v2937, %v3089
        %v3244 = vadd.f32 %v2938, %v3094
        %v3245 = vadd.f32 %v2939, %v3099
        %v3246 = vadd.f32 %v2940, %v3104
        %v3247 = vadd.f32 %v2941, %v3109
        %v3248 = vadd.f32 %v2942, %v3114
        %v3249 = vadd.f32 %v2943, %v3119
        %v3250 = vadd.f32 %v2944, %v3124
        %v3251 = vadd.f32 %v2945, %v3129
        %v3252 = vadd.f32 %v2946, %v3134
        %v3253 = vadd.f32 %v2947, %v3139
        %v3254 = vadd.f32 %v2948, %v3144
        %v3255 = vadd.f32 %v2949, %v3149
        %v3256 = vadd.f32 %v2950, %v3154
        %v3257 = vadd.f32 %v2951, %v3159
        %v3258 = vadd.f32 %v2952, %v3164
        %v3259 = vadd.f32 %v2953, %v3169
        %v3260 = vadd.f32 %v2954, %v3174
        %v3261 = vadd.f32 %v2955, %v3179
        %v3262 = vadd.f32 %v2956, %v3184
        %v3263 = vadd.f32 %v2957, %v3189
        %v3264 = vadd.f32 %v2958, %v3194
        %v3265 = vadd.f32 %v2959, %v3199
        %v3266 = vadd.f32 %v2960, %v3204
        %v3267 = vadd.f32 %v2961, %v3209
        %v3268 = vadd.f32 %v2962, %v3214
        %v3269 = vadd.f32 %v2963, %v3219
        %v3270 = vadd.f32 %v2964, %v3224
        %v3271 = vadd.f32 %v2965, %v3229
        %v3272 = vadd.f32 %v2966, %v3234
        %v3273 = vadd.f32 %v2967, %v3239
        %v3274 = vld [vmem:[%s2 + $0x1] sm:$0x1]
        %v3275 = vlaneseq
        %v3276 = vshrl.u32 %v3275, 7
        %v3277 = vsub.s32 0, %v3276
        %v3278 = vrot.slane %v3274, %v3277
        %v3279 = vadd.f32 %v3242, %v3278
        %v3280 = vadd.f32 %v3243, %v3278
        %v3281 = vadd.f32 %v3244, %v3278
        %v3282 = vadd.f32 %v3245, %v3278
        %v3283 = vadd.f32 %v3246, %v3278
        %v3284 = vadd.f32 %v3247, %v3278
        %v3285 = vadd.f32 %v3248, %v3278
        %v3286 = vadd.f32 %v3249, %v3278
        %v3287 = vadd.f32 %v3250, %v3278
        %v3288 = vadd.f32 %v3251, %v3278
        %v3289 = vadd.f32 %v3252, %v3278
        %v3290 = vadd.f32 %v3253, %v3278
        %v3291 = vadd.f32 %v3254, %v3278
        %v3292 = vadd.f32 %v3255, %v3278
        %v3293 = vadd.f32 %v3256, %v3278
        %v3294 = vadd.f32 %v3257, %v3278
        %v3295 = vadd.f32 %v3258, %v3278
        %v3296 = vadd.f32 %v3259, %v3278
        %v3297 = vadd.f32 %v3260, %v3278
        %v3298 = vadd.f32 %v3261, %v3278
        %v3299 = vadd.f32 %v3262, %v3278
        %v3300 = vadd.f32 %v3263, %v3278
        %v3301 = vadd.f32 %v3264, %v3278
        %v3302 = vadd.f32 %v3265, %v3278
        %v3303 = vadd.f32 %v3266, %v3278
        %v3304 = vadd.f32 %v3267, %v3278
        %v3305 = vadd.f32 %v3268, %v3278
        %v3306 = vadd.f32 %v3269, %v3278
        %v3307 = vadd.f32 %v3270, %v3278
        %v3308 = vadd.f32 %v3271, %v3278
        %v3309 = vadd.f32 %v3272, %v3278
        %v3310 = vadd.f32 %v3273, %v3278
        %v3311 = vmax.f32 %v3279, 0.0
        %v3312 = vmax.f32 %v3280, 0.0
        %v3313 = vmax.f32 %v3281, 0.0
        %v3314 = vmax.f32 %v3282, 0.0
        %v3315 = vmax.f32 %v3283, 0.0
        %v3316 = vmax.f32 %v3284, 0.0
        %v3317 = vmax.f32 %v3285, 0.0
        %v3318 = vmax.f32 %v3286, 0.0
        %v3319 = vmax.f32 %v3287, 0.0
        %v3320 = vmax.f32 %v3288, 0.0
        %v3321 = vmax.f32 %v3289, 0.0
        %v3322 = vmax.f32 %v3290, 0.0
        %v3323 = vmax.f32 %v3291, 0.0
        %v3324 = vmax.f32 %v3292, 0.0
        %v3325 = vmax.f32 %v3293, 0.0
        %v3326 = vmax.f32 %v3294, 0.0
        %v3327 = vmax.f32 %v3295, 0.0
        %v3328 = vmax.f32 %v3296, 0.0
        %v3329 = vmax.f32 %v3297, 0.0
        %v3330 = vmax.f32 %v3298, 0.0
        %v3331 = vmax.f32 %v3299, 0.0
        %v3332 = vmax.f32 %v3300, 0.0
        %v3333 = vmax.f32 %v3301, 0.0
        %v3334 = vmax.f32 %v3302, 0.0
        %v3335 = vmax.f32 %v3303, 0.0
        %v3336 = vmax.f32 %v3304, 0.0
        %v3337 = vmax.f32 %v3305, 0.0
        %v3338 = vmax.f32 %v3306, 0.0
        %v3339 = vmax.f32 %v3307, 0.0
        %v3340 = vmax.f32 %v3308, 0.0
        %v3341 = vmax.f32 %v3309, 0.0
        %v3342 = vmax.f32 %v3310, 0.0
        %s3343 = scalar_lea.vmem [#allocation3], 1280
        %v3344 = vld [vmem:[%s3343] sm:$0xff]
        %v3345 = vld [vmem:[%s3343 + $0x8] sm:$0xff]
        %v3346 = vld [vmem:[%s3343 + $0x10] sm:$0xff]
        %v3347 = vld [vmem:[%s3343 + $0x18] sm:$0xff]
        %v3348 = vld [vmem:[%s3343 + $0x20] sm:$0xff]
        %v3349 = vld [vmem:[%s3343 + $0x28] sm:$0xff]
        %v3350 = vld [vmem:[%s3343 + $0x30] sm:$0xff]
        %v3351 = vld [vmem:[%s3343 + $0x38] sm:$0xff]
        %v3352 = vld [vmem:[%s3343 + $0x40] sm:$0xff]
        %v3353 = vld [vmem:[%s3343 + $0x48] sm:$0xff]
        %v3354 = vld [vmem:[%s3343 + $0x50] sm:$0xff]
        %v3355 = vld [vmem:[%s3343 + $0x58] sm:$0xff]
        %v3356 = vld [vmem:[%s3343 + $0x60] sm:$0xff]
        %v3357 = vld [vmem:[%s3343 + $0x68] sm:$0xff]
        %v3358 = vld [vmem:[%s3343 + $0x70] sm:$0xff]
        %v3359 = vld [vmem:[%s3343 + $0x78] sm:$0xff]
        %v3360 = vld [vmem:[%s2 + $0x2] sm:$0x1]
        %v3361 = vlaneseq
        %v3362 = vshrl.u32 %v3361, 7
        %v3363 = vsub.s32 0, %v3362
        %v3364 = vrot.slane %v3360, %v3363
        %3365 = vmatprep.subr.mxu0 0.0
        %3366 = vmatpush1.msra.mxu0 %v3359
        %3367 = vmatprep.subr.mxu0 0.0
        %3368 = vmatpush1.msra.mxu0 %v3358
        %3369 = vmatprep.subr.mxu0 0.0
        %3370 = vmatpush1.msra.mxu0 %v3357
        %3371 = vmatprep.subr.mxu0 0.0
        %3372 = vmatpush1.msra.mxu0 %v3356
        %3373 = vmatprep.subr.mxu0 0.0
        %3374 = vmatpush1.msra.mxu0 %v3355
        %3375 = vmatprep.subr.mxu0 0.0
        %3376 = vmatpush1.msra.mxu0 %v3354
        %3377 = vmatprep.subr.mxu0 0.0
        %3378 = vmatpush1.msra.mxu0 %v3353
        %3379 = vmatprep.subr.mxu0 0.0
        %3380 = vmatpush1.msra.mxu0 %v3352
        %3381 = vmatprep.subr.mxu0 0.0
        %3382 = vmatpush1.msra.mxu0 %v3351
        %3383 = vmatprep.subr.mxu0 0.0
        %3384 = vmatpush1.msra.mxu0 %v3350
        %3385 = vmatprep.subr.mxu0 0.0
        %3386 = vmatpush1.msra.mxu0 %v3349
        %3387 = vmatprep.subr.mxu0 0.0
        %3388 = vmatpush1.msra.mxu0 %v3348
        %3389 = vmatprep.subr.mxu0 0.0
        %3390 = vmatpush1.msra.mxu0 %v3347
        %3391 = vmatprep.subr.mxu0 0.0
        %3392 = vmatpush1.msra.mxu0 %v3346
        %3393 = vmatprep.subr.mxu0 0.0
        %3394 = vmatpush1.msra.mxu0 %v3345
        %3395 = vmatprep.subr.mxu0 0.0
        %3396 = vmatpush1.msra.mxu0 %v3344
        %3397 = vmatprep.subr.mxu0 0.0
        %3398 = vmatpush2.msra.mxu0 0.0
        %3399 = vmatprep.subr.mxu0 0.0
        %3400 = vmatpush2.msra.mxu0 0.0
        %3401 = vmatprep.subr.mxu0 0.0
        %3402 = vmatpush2.msra.mxu0 0.0
        %3403 = vmatprep.subr.mxu0 0.0
        %3404 = vmatpush2.msra.mxu0 0.0
        %3405 = vmatprep.subr.mxu0 0.0
        %3406 = vmatpush2.msra.mxu0 0.0
        %3407 = vmatprep.subr.mxu0 0.0
        %3408 = vmatpush2.msra.mxu0 0.0
        %3409 = vmatprep.subr.mxu0 0.0
        %3410 = vmatpush2.msra.mxu0 0.0
        %3411 = vmatprep.subr.mxu0 0.0
        %3412 = vmatpush2.msra.mxu0 0.0
        %3413 = vmatprep.subr.mxu0 0.0
        %3414 = vmatpush2.msra.mxu0 0.0
        %3415 = vmatprep.subr.mxu0 0.0
        %3416 = vmatpush2.msra.mxu0 0.0
        %3417 = vmatprep.subr.mxu0 0.0
        %3418 = vmatpush2.msra.mxu0 0.0
        %3419 = vmatprep.subr.mxu0 0.0
        %3420 = vmatpush2.msra.mxu0 0.0
        %3421 = vmatprep.subr.mxu0 0.0
        %3422 = vmatpush2.msra.mxu0 0.0
        %3423 = vmatprep.subr.mxu0 0.0
        %3424 = vmatpush2.msra.mxu0 0.0
        %3425 = vmatprep.subr.mxu0 0.0
        %3426 = vmatpush2.msra.mxu0 0.0
        %3427 = vmatprep.subr.mxu0 0.0
        %3428 = vmatpush2.msra.mxu0 0.0
        %3429 = vmatprep.mubr.f32.mxu0 0.0
        %3430 = vmatmul.mubr.f32.gmra.mxu0 %v3311
        %v3431 = vpop.f32.mrf.mxu0
        %v3432 = vadd.f32 %v3364, %v3431
        %v3433 = vpop.f32.mrf.mxu0
        %3434 = vmatprep.mubr.f32.mxu0 0.0
        %3435 = vmatmul.mubr.f32.gmra.mxu0 %v3312
        %v3436 = vpop.f32.mrf.mxu0
        %v3437 = vadd.f32 %v3364, %v3436
        %v3438 = vpop.f32.mrf.mxu0
        %3439 = vmatprep.mubr.f32.mxu0 0.0
        %3440 = vmatmul.mubr.f32.gmra.mxu0 %v3313
        %v3441 = vpop.f32.mrf.mxu0
        %v3442 = vadd.f32 %v3364, %v3441
        %v3443 = vpop.f32.mrf.mxu0
        %3444 = vmatprep.mubr.f32.mxu0 0.0
        %3445 = vmatmul.mubr.f32.gmra.mxu0 %v3314
        %v3446 = vpop.f32.mrf.mxu0
        %v3447 = vadd.f32 %v3364, %v3446
        %v3448 = vpop.f32.mrf.mxu0
        %3449 = vmatprep.mubr.f32.mxu0 0.0
        %3450 = vmatmul.mubr.f32.gmra.mxu0 %v3315
        %v3451 = vpop.f32.mrf.mxu0
        %v3452 = vadd.f32 %v3364, %v3451
        %v3453 = vpop.f32.mrf.mxu0
        %3454 = vmatprep.mubr.f32.mxu0 0.0
        %3455 = vmatmul.mubr.f32.gmra.mxu0 %v3316
        %v3456 = vpop.f32.mrf.mxu0
        %v3457 = vadd.f32 %v3364, %v3456
        %v3458 = vpop.f32.mrf.mxu0
        %3459 = vmatprep.mubr.f32.mxu0 0.0
        %3460 = vmatmul.mubr.f32.gmra.mxu0 %v3317
        %v3461 = vpop.f32.mrf.mxu0
        %v3462 = vadd.f32 %v3364, %v3461
        %v3463 = vpop.f32.mrf.mxu0
        %3464 = vmatprep.mubr.f32.mxu0 0.0
        %3465 = vmatmul.mubr.f32.gmra.mxu0 %v3318
        %v3466 = vpop.f32.mrf.mxu0
        %v3467 = vadd.f32 %v3364, %v3466
        %v3468 = vpop.f32.mrf.mxu0
        %3469 = vmatprep.mubr.f32.mxu0 0.0
        %3470 = vmatmul.mubr.f32.gmra.mxu0 %v3319
        %v3471 = vpop.f32.mrf.mxu0
        %v3472 = vadd.f32 %v3364, %v3471
        %v3473 = vpop.f32.mrf.mxu0
        %3474 = vmatprep.mubr.f32.mxu0 0.0
        %3475 = vmatmul.mubr.f32.gmra.mxu0 %v3320
        %v3476 = vpop.f32.mrf.mxu0
        %v3477 = vadd.f32 %v3364, %v3476
        %v3478 = vpop.f32.mrf.mxu0
        %3479 = vmatprep.mubr.f32.mxu0 0.0
        %3480 = vmatmul.mubr.f32.gmra.mxu0 %v3321
        %v3481 = vpop.f32.mrf.mxu0
        %v3482 = vadd.f32 %v3364, %v3481
        %v3483 = vpop.f32.mrf.mxu0
        %3484 = vmatprep.mubr.f32.mxu0 0.0
        %3485 = vmatmul.mubr.f32.gmra.mxu0 %v3322
        %v3486 = vpop.f32.mrf.mxu0
        %v3487 = vadd.f32 %v3364, %v3486
        %v3488 = vpop.f32.mrf.mxu0
        %3489 = vmatprep.mubr.f32.mxu0 0.0
        %3490 = vmatmul.mubr.f32.gmra.mxu0 %v3323
        %v3491 = vpop.f32.mrf.mxu0
        %v3492 = vadd.f32 %v3364, %v3491
        %v3493 = vpop.f32.mrf.mxu0
        %3494 = vmatprep.mubr.f32.mxu0 0.0
        %3495 = vmatmul.mubr.f32.gmra.mxu0 %v3324
        %v3496 = vpop.f32.mrf.mxu0
        %v3497 = vadd.f32 %v3364, %v3496
        %v3498 = vpop.f32.mrf.mxu0
        %3499 = vmatprep.mubr.f32.mxu0 0.0
        %3500 = vmatmul.mubr.f32.gmra.mxu0 %v3325
        %v3501 = vpop.f32.mrf.mxu0
        %v3502 = vadd.f32 %v3364, %v3501
        %v3503 = vpop.f32.mrf.mxu0
        %3504 = vmatprep.mubr.f32.mxu0 0.0
        %3505 = vmatmul.mubr.f32.gmra.mxu0 %v3326
        %v3506 = vpop.f32.mrf.mxu0
        %v3507 = vadd.f32 %v3364, %v3506
        %v3508 = vpop.f32.mrf.mxu0
        %3509 = vmatprep.mubr.f32.mxu0 0.0
        %3510 = vmatmul.mubr.f32.gmra.mxu0 %v3327
        %v3511 = vpop.f32.mrf.mxu0
        %v3512 = vadd.f32 %v3364, %v3511
        %v3513 = vpop.f32.mrf.mxu0
        %3514 = vmatprep.mubr.f32.mxu0 0.0
        %3515 = vmatmul.mubr.f32.gmra.mxu0 %v3328
        %v3516 = vpop.f32.mrf.mxu0
        %v3517 = vadd.f32 %v3364, %v3516
        %v3518 = vpop.f32.mrf.mxu0
        %3519 = vmatprep.mubr.f32.mxu0 0.0
        %3520 = vmatmul.mubr.f32.gmra.mxu0 %v3329
        %v3521 = vpop.f32.mrf.mxu0
        %v3522 = vadd.f32 %v3364, %v3521
        %v3523 = vpop.f32.mrf.mxu0
        %3524 = vmatprep.mubr.f32.mxu0 0.0
        %3525 = vmatmul.mubr.f32.gmra.mxu0 %v3330
        %v3526 = vpop.f32.mrf.mxu0
        %v3527 = vadd.f32 %v3364, %v3526
        %v3528 = vpop.f32.mrf.mxu0
        %3529 = vmatprep.mubr.f32.mxu0 0.0
        %3530 = vmatmul.mubr.f32.gmra.mxu0 %v3331
        %v3531 = vpop.f32.mrf.mxu0
        %v3532 = vadd.f32 %v3364, %v3531
        %v3533 = vpop.f32.mrf.mxu0
        %3534 = vmatprep.mubr.f32.mxu0 0.0
        %3535 = vmatmul.mubr.f32.gmra.mxu0 %v3332
        %v3536 = vpop.f32.mrf.mxu0
        %v3537 = vadd.f32 %v3364, %v3536
        %v3538 = vpop.f32.mrf.mxu0
        %3539 = vmatprep.mubr.f32.mxu0 0.0
        %3540 = vmatmul.mubr.f32.gmra.mxu0 %v3333
        %v3541 = vpop.f32.mrf.mxu0
        %v3542 = vadd.f32 %v3364, %v3541
        %v3543 = vpop.f32.mrf.mxu0
        %3544 = vmatprep.mubr.f32.mxu0 0.0
        %3545 = vmatmul.mubr.f32.gmra.mxu0 %v3334
        %v3546 = vpop.f32.mrf.mxu0
        %v3547 = vadd.f32 %v3364, %v3546
        %v3548 = vpop.f32.mrf.mxu0
        %3549 = vmatprep.mubr.f32.mxu0 0.0
        %3550 = vmatmul.mubr.f32.gmra.mxu0 %v3335
        %v3551 = vpop.f32.mrf.mxu0
        %v3552 = vadd.f32 %v3364, %v3551
        %v3553 = vpop.f32.mrf.mxu0
        %3554 = vmatprep.mubr.f32.mxu0 0.0
        %3555 = vmatmul.mubr.f32.gmra.mxu0 %v3336
        %v3556 = vpop.f32.mrf.mxu0
        %v3557 = vadd.f32 %v3364, %v3556
        %v3558 = vpop.f32.mrf.mxu0
        %3559 = vmatprep.mubr.f32.mxu0 0.0
        %3560 = vmatmul.mubr.f32.gmra.mxu0 %v3337
        %v3561 = vpop.f32.mrf.mxu0
        %v3562 = vadd.f32 %v3364, %v3561
        %v3563 = vpop.f32.mrf.mxu0
        %3564 = vmatprep.mubr.f32.mxu0 0.0
        %3565 = vmatmul.mubr.f32.gmra.mxu0 %v3338
        %v3566 = vpop.f32.mrf.mxu0
        %v3567 = vadd.f32 %v3364, %v3566
        %v3568 = vpop.f32.mrf.mxu0
        %3569 = vmatprep.mubr.f32.mxu0 0.0
        %3570 = vmatmul.mubr.f32.gmra.mxu0 %v3339
        %v3571 = vpop.f32.mrf.mxu0
        %v3572 = vadd.f32 %v3364, %v3571
        %v3573 = vpop.f32.mrf.mxu0
        %3574 = vmatprep.mubr.f32.mxu0 0.0
        %3575 = vmatmul.mubr.f32.gmra.mxu0 %v3340
        %v3576 = vpop.f32.mrf.mxu0
        %v3577 = vadd.f32 %v3364, %v3576
        %v3578 = vpop.f32.mrf.mxu0
        %3579 = vmatprep.mubr.f32.mxu0 0.0
        %3580 = vmatmul.mubr.f32.gmra.mxu0 %v3341
        %v3581 = vpop.f32.mrf.mxu0
        %v3582 = vadd.f32 %v3364, %v3581
        %v3583 = vpop.f32.mrf.mxu0
        %3584 = vmatprep.mubr.f32.mxu0 0.0
        %3585 = vmatmul.mubr.f32.gmra.mxu0 %v3342
        %v3586 = vpop.f32.mrf.mxu0
        %v3587 = vadd.f32 %v3364, %v3586
        %v3588 = vpop.f32.mrf.mxu0
        %3589 = vdwg.mxu0
        %v3590 = vadd.f32 %v3432, %v186
        %v3591 = vadd.f32 %v3437, %v187
        %v3592 = vadd.f32 %v3442, %v188
        %v3593 = vadd.f32 %v3447, %v189
        %v3594 = vadd.f32 %v3452, %v190
        %v3595 = vadd.f32 %v3457, %v191
        %v3596 = vadd.f32 %v3462, %v192
        %v3597 = vadd.f32 %v3467, %v193
        %v3598 = vadd.f32 %v3472, %v194
        %v3599 = vadd.f32 %v3477, %v195
        %v3600 = vadd.f32 %v3482, %v196
        %v3601 = vadd.f32 %v3487, %v197
        %v3602 = vadd.f32 %v3492, %v198
        %v3603 = vadd.f32 %v3497, %v199
        %v3604 = vadd.f32 %v3502, %v200
        %v3605 = vadd.f32 %v3507, %v201
        %v3606 = vadd.f32 %v3512, %v202
        %v3607 = vadd.f32 %v3517, %v203
        %v3608 = vadd.f32 %v3522, %v204
        %v3609 = vadd.f32 %v3527, %v205
        %v3610 = vadd.f32 %v3532, %v206
        %v3611 = vadd.f32 %v3537, %v207
        %v3612 = vadd.f32 %v3542, %v208
        %v3613 = vadd.f32 %v3547, %v209
        %v3614 = vadd.f32 %v3552, %v210
        %v3615 = vadd.f32 %v3557, %v211
        %v3616 = vadd.f32 %v3562, %v212
        %v3617 = vadd.f32 %v3567, %v213
        %v3618 = vadd.f32 %v3572, %v214
        %v3619 = vadd.f32 %v3577, %v215
        %v3620 = vadd.f32 %v3582, %v216
        %v3621 = vadd.f32 %v3587, %v217
        %v3622 = vmax.f32 %v3590, 0.0
        %v3623 = vmax.f32 %v3591, 0.0
        %v3624 = vmax.f32 %v3592, 0.0
        %v3625 = vmax.f32 %v3593, 0.0
        %v3626 = vmax.f32 %v3594, 0.0
        %v3627 = vmax.f32 %v3595, 0.0
        %v3628 = vmax.f32 %v3596, 0.0
        %v3629 = vmax.f32 %v3597, 0.0
        %v3630 = vmax.f32 %v3598, 0.0
        %v3631 = vmax.f32 %v3599, 0.0
        %v3632 = vmax.f32 %v3600, 0.0
        %v3633 = vmax.f32 %v3601, 0.0
        %v3634 = vmax.f32 %v3602, 0.0
        %v3635 = vmax.f32 %v3603, 0.0
        %v3636 = vmax.f32 %v3604, 0.0
        %v3637 = vmax.f32 %v3605, 0.0
        %v3638 = vmax.f32 %v3606, 0.0
        %v3639 = vmax.f32 %v3607, 0.0
        %v3640 = vmax.f32 %v3608, 0.0
        %v3641 = vmax.f32 %v3609, 0.0
        %v3642 = vmax.f32 %v3610, 0.0
        %v3643 = vmax.f32 %v3611, 0.0
        %v3644 = vmax.f32 %v3612, 0.0
        %v3645 = vmax.f32 %v3613, 0.0
        %v3646 = vmax.f32 %v3614, 0.0
        %v3647 = vmax.f32 %v3615, 0.0
        %v3648 = vmax.f32 %v3616, 0.0
        %v3649 = vmax.f32 %v3617, 0.0
        %v3650 = vmax.f32 %v3618, 0.0
        %v3651 = vmax.f32 %v3619, 0.0
        %v3652 = vmax.f32 %v3620, 0.0
        %v3653 = vmax.f32 %v3621, 0.0
        %3654 = vst [vmem:[%s185] sm:$0xff] %v3622
        %3655 = vst [vmem:[%s185 + $0x8] sm:$0xff] %v3623
        %3656 = vst [vmem:[%s185 + $0x10] sm:$0xff] %v3624
        %3657 = vst [vmem:[%s185 + $0x18] sm:$0xff] %v3625
        %3658 = vst [vmem:[%s185 + $0x20] sm:$0xff] %v3626
        %3659 = vst [vmem:[%s185 + $0x28] sm:$0xff] %v3627
        %3660 = vst [vmem:[%s185 + $0x30] sm:$0xff] %v3628
        %3661 = vst [vmem:[%s185 + $0x38] sm:$0xff] %v3629
        %3662 = vst [vmem:[%s185 + $0x40] sm:$0xff] %v3630
        %3663 = vst [vmem:[%s185 + $0x48] sm:$0xff] %v3631
        %3664 = vst [vmem:[%s185 + $0x50] sm:$0xff] %v3632
        %3665 = vst [vmem:[%s185 + $0x58] sm:$0xff] %v3633
        %3666 = vst [vmem:[%s185 + $0x60] sm:$0xff] %v3634
        %3667 = vst [vmem:[%s185 + $0x68] sm:$0xff] %v3635
        %3668 = vst [vmem:[%s185 + $0x70] sm:$0xff] %v3636
        %3669 = vst [vmem:[%s185 + $0x78] sm:$0xff] %v3637
        %3670 = vst [vmem:[%s185 + $0x80] sm:$0xff] %v3638
        %3671 = vst [vmem:[%s185 + $0x88] sm:$0xff] %v3639
        %3672 = vst [vmem:[%s185 + $0x90] sm:$0xff] %v3640
        %3673 = vst [vmem:[%s185 + $0x98] sm:$0xff] %v3641
        %3674 = vst [vmem:[%s185 + $0xa0] sm:$0xff] %v3642
        %3675 = vst [vmem:[%s185 + $0xa8] sm:$0xff] %v3643
        %3676 = vst [vmem:[%s185 + $0xb0] sm:$0xff] %v3644
        %3677 = vst [vmem:[%s185 + $0xb8] sm:$0xff] %v3645
        %3678 = vst [vmem:[%s185 + $0xc0] sm:$0xff] %v3646
        %3679 = vst [vmem:[%s185 + $0xc8] sm:$0xff] %v3647
        %3680 = vst [vmem:[%s185 + $0xd0] sm:$0xff] %v3648
        %3681 = vst [vmem:[%s185 + $0xd8] sm:$0xff] %v3649
        %3682 = vst [vmem:[%s185 + $0xe0] sm:$0xff] %v3650
        %3683 = vst [vmem:[%s185 + $0xe8] sm:$0xff] %v3651
        %3684 = vst [vmem:[%s185 + $0xf0] sm:$0xff] %v3652
        %3685 = vst [vmem:[%s185 + $0xf8] sm:$0xff] %v3653
        %p3686 = scmp.lt.s32.totalorder %s15, 1
        %s3687 = scalar_select %p3686, %s15, 1
        %s3688 = smul.addr %s3687, 32
        %s3689 = smul.addr %s3688, 8
        %s3690 = scalar_lea.vmem %s3, %s3689
        // Predicated region
        $region37: #{bottleneck_forward.1} parent=31 // pred_check
          %p3691 = pneg %p101
        $region38: #{bottleneck_forward.1} parent=31 // pred_check_branch
          %3693 = sbr.rel (%p3691) target = $region40
        $region39: #{bottleneck_forward.1} parent=31 // pred_region
          _
        $region40: #{bottleneck_forward.1} parent=31 // pred_fallthru
          _
      $region32: #{bottleneck_forward.1} parent=5 // pred_fallthru
        _
      %p3694 = scmp.le.s32.totalorder 2, %s10
      // Predicated region
      $region41: #{bottleneck_forward.1} parent=5 // pred_check
        %p3695 = pneg %p3694
      $region42: #{bottleneck_forward.1} parent=5 // pred_check_branch
        %3697 = sbr.rel (%p3695) target = $region44
      $region43: #{bottleneck_forward.1} parent=5 // pred_region
        %s3698 = ssub.s32 %s10, 2
        // Predicated region
        $region45: #{bottleneck_forward.1} parent=43 // pred_check
          %p3699 = pneg %p107
        $region46: #{bottleneck_forward.1} parent=43 // pred_check_branch
          %3701 = sbr.rel (%p3699) target = $region48
        $region47: #{bottleneck_forward.1} parent=43 // pred_region
          %p3702 = scmp.lt.s32.totalorder %s16, 1
          %s3703 = scalar_select %p3702, %s16, 1
          %s3704 = smul.addr %s3703, 32
          %s3705 = smul.addr %s3704, 8
          %s3706 = scalar_lea.vmem %s3, %s3705
        $region48: #{bottleneck_forward.1} parent=43 // pred_fallthru
          _
      $region44: #{bottleneck_forward.1} parent=5 // pred_fallthru
        _
    $region6: #{bottleneck_forward.1} parent=1 // loop_footer
      %s14 = sadd.s32 1, %s10
    $region7: #{bottleneck_forward.1} parent=1 // loop_footer_branch
      %9 = sbr.rel target = $region3
    $region8: #{bottleneck_forward.1} parent=1 // loop_exit
      _
    %3707 = vsyncpa [#allocation4], 1
    %s3708 = scalar_lea.sflag [#allocation4], 1
    %3709 = vsyncpa %s3708, 1

</llo_original>
